<compile_context>
chip_gen: v6e
topology: v6e:2x2x1
jax: 0.10.0
libtpu: 0.0.40
codegen_flags: <defaults>
</compile_context>

<pallas_src>
from functools import partial

import jax
import jax.numpy as jnp
from jax import lax
from jax.experimental import pallas as pl
from jax.experimental.pallas import tpu as pltpu

VOCAB = 1078
V_PAD = 1152          # 9 * 128 : lane-dense fc / scatter accumulator
EMB = 300
EMB_PAD = 384         # 3 * 128 : clean K-dim slice inside the fused gate matmul
HID = 128
ATT = 128             # additive-attention projection dim

# resident weight bytes (bf16 matmul weights + f32 bias vectors), used by the tile picker
_WEIGHT_BYTES = ((EMB_PAD + 2 * HID) * 4 * HID + 2 * HID * ATT + HID * V_PAD) * 2 \
                + (4 * HID + 5 * ATT + V_PAD + EMB_PAD + HID + 1) * 4


def _round_up(x, m):
    return (x + m - 1) // m * m


def _slab_width(L):
    # packed small outputs: h1 | c1 | ctx | attn | coverage | zero-pad  (lane dense)
    return _round_up(3 * HID + 2 * L, 128)


def _vmem_capacity_bytes():
    try:
        return int(pltpu.get_tpu_info().vmem_capacity_bytes)
    except Exception:
        kind = ""
        try:
            kind = jax.devices()[0].device_kind.lower()
        except Exception:
            pass
        if "v7" in kind or "7x" in kind:
            return 64 << 20
        return 128 << 20


def _has_bf16_vpu():
    # bf16 VALU only on v6e / v7x; v5e and older emulate (would be slower).
    try:
        kind = jax.devices()[0].device_kind.lower()
    except Exception:
        return False
    return any(tag in kind for tag in ("v6", "v7", "7x"))


def _need_bytes(bt, L):
    """VMEM working-set estimate for one batch tile (inputs/outputs double-buffered
    by the BlockSpec pipeline, plus in-kernel temporaries and resident weights)."""
    b = 0
    b += 2 * bt * L * HID * 2          # encoder tile (bf16)
    b += 2 * bt * EMB_PAD * 2          # embedding tile (bf16)
    b += 2 * bt * 3 * HID * 4          # z, h0, c0 (f32)
    b += 2 * bt * 2 * L * 4            # coverage + content
    b += 2 * bt * VOCAB * 4            # vocab output block
    b += 2 * bt * _slab_width(L) * 4   # packed small-output slab
    b += 2 * _WEIGHT_BYTES             # resident weights (worst-case double-buffered)
    b += bt * (3 * L * ATT + 3 * V_PAD + 8 * HID) * 4   # enc_proj/feats/cov_proj, logits/acc/mixed, gates
    return b


def _pick_batch_tile(B, L, budget):
    """Largest batch tile fitting `budget`, with >=2 grid steps when B >= 16
    (megacore) and B padded to a tile multiple when no exact divisor works."""
    cap = max(8, B // 2) if B >= 16 else B
    divisors = [d for d in range(1, B + 1)
                if B % d == 0 and (d % 8 == 0 or d == B) and d <= cap]
    for bt in sorted(divisors, reverse=True):
        if _need_bytes(bt, L) <= budget:
            return bt, B
    bt = 8
    for cand in (8, 16, 32, 64, 128, 256, 512):
        if cand <= cap and _need_bytes(cand, L) <= budget:
            bt = cand
    return bt, _round_up(B, bt)


def _decoder_kernel(
    use_bf16_scatter,
    # per-batch-tile data
    emb_ref, z_ref, h0_ref, c0_ref, enc_ref, cov_ref, content_ref,
    # resident weights
    w_gates_ref, b_lstm_ref,
    w_enc_ref, w_dec_ref, w_cov_ref, b_att_ref, v_att_ref,
    w_fc_ref, b_fc_ref, w_pe_ref, w_pz_ref, b_p_ref,
    # outputs
    out_ref, small_ref,
):
    f32, bf16 = jnp.float32, jnp.bfloat16

    emb = emb_ref[...]           # (Bt, EMB_PAD) bf16
    z = z_ref[...]               # (Bt, H)       f32
    h0 = h0_ref[...]             # (Bt, H)       f32
    c0 = c0_ref[...]             # (Bt, H)       f32
    enc = enc_ref[...]           # (Bt, L, H)    bf16
    cov = cov_ref[...]           # (Bt, L)       f32
    content = content_ref[...]   # (Bt, L)       int32

    bt, L, _ = enc.shape

    # ---- single LSTM step: fused K=640 MXU matmul over cat([emb, z, h0]) ----
    x = jnp.concatenate([emb, z.astype(bf16), h0.astype(bf16)], axis=-1)   # (Bt, 640)
    gates = jnp.dot(x, w_gates_ref[...], preferred_element_type=f32) + b_lstm_ref[...]
    i_g = jax.nn.sigmoid(gates[:, 0 * HID:1 * HID])
    f_g = jax.nn.sigmoid(gates[:, 1 * HID:2 * HID])
    g_g = jnp.tanh(gates[:, 2 * HID:3 * HID])
    o_g = jax.nn.sigmoid(gates[:, 3 * HID:4 * HID])
    c1 = f_g * c0 + i_g * g_g
    h1 = o_g * jnp.tanh(c1)                      # (Bt, H)

    # ---- additive (Bahdanau) attention with coverage ----
    enc_proj = jnp.dot(enc.reshape(bt * L, HID), w_enc_ref[...],
                       preferred_element_type=f32).reshape(bt, L, ATT)
    dec_proj = jnp.dot(h1.astype(bf16), w_dec_ref[...], preferred_element_type=f32)
    cov_proj = cov[:, :, None] * w_cov_ref[...][None]            # (Bt, L, A)
    feats = jnp.tanh(enc_proj + dec_proj[:, None, :] + cov_proj + b_att_ref[...][None])
    scores = jnp.sum(feats * v_att_ref[...][None], axis=-1)      # (Bt, L)
    # TODO(synk): no source-length padding mask — the module interface provides none.
    scores = scores - jnp.max(scores, axis=-1, keepdims=True)
    e = jnp.exp(scores)
    attn = e / jnp.sum(e, axis=-1, keepdims=True)                # exact: cov is recurrent
    ctx = jnp.sum(attn[:, :, None] * enc.astype(f32), axis=1)    # (Bt, H)
    new_cov = cov + attn

    # ---- vocab projection fc(output) — unnormalized, exactly as the torch module ----
    logits = (jnp.dot(ctx.astype(bf16), w_fc_ref[...], preferred_element_type=f32)
              + b_fc_ref[...])                                   # (Bt, V_PAD)

    # ---- copy gate p = sigmoid(Linear(cat([emb, emb, z]))) as a VPU reduction ----
    p_logit = (jnp.sum(emb.astype(f32) * w_pe_ref[...], axis=-1, keepdims=True)
               + jnp.sum(z * w_pz_ref[...], axis=-1, keepdims=True)
               + b_p_ref[...])
    p = jax.nn.sigmoid(p_logit)                                  # (Bt, 1)

    # ---- scatter p*attn onto vocab ids (last-write-wins like torch .scatter_).
    #      p is folded into the (Bt,L) values before the scatter so the combine
    #      needs no full-vocab-width p*mul; the select chain runs on a bf16
    #      accumulator on v6e/v7x (f32 on v5e). ----
    p_attn = (p * attn)                                          # (Bt, L)
    acc_dt = jnp.bfloat16 if use_bf16_scatter else f32
    p_attn_c = p_attn.astype(acc_dt)
    vocab_iota = lax.broadcasted_iota(jnp.int32, (1, V_PAD), 1)  # broadcast, not (Bt,V)
    attn_value = jnp.zeros((bt, V_PAD), acc_dt)
    if L <= 32:
        for l in range(L):
            hit = vocab_iota == content[:, l][:, None]
            attn_value = jnp.where(hit, p_attn_c[:, l][:, None], attn_value)
    else:
        def _step(l, acc):
            cid = lax.dynamic_slice_in_dim(content, l, 1, axis=1)
            val = lax.dynamic_slice_in_dim(p_attn_c, l, 1, axis=1)
            return jnp.where(vocab_iota == cid, val, acc)
        attn_value = lax.fori_loop(0, L, _step, attn_value, unroll=4)

    mixed = (1.0 - p) * logits + attn_value.astype(f32)          # (Bt, V_PAD)
    out_ref[...] = mixed[:, :VOCAB]                              # masked store on tail only

    # ---- packed lane-dense small-output slab: [h1 | c1 | ctx | attn | cov | 0] ----
    small_ref[:, 0 * HID:1 * HID] = h1
    small_ref[:, 1 * HID:2 * HID] = c1
    small_ref[:, 2 * HID:3 * HID] = ctx
    small_ref[:, 3 * HID:3 * HID + L] = attn
    small_ref[:, 3 * HID + L:3 * HID + 2 * L] = new_cov
    pad = small_ref.shape[-1] - (3 * HID + 2 * L)
    if pad > 0:
        small_ref[:, 3 * HID + 2 * L:] = jnp.zeros((bt, pad), f32)


def make_params(key):
    """Deterministic parameter init matching the torch module's shapes."""
    ks = jax.random.split(key, 16)

    def u(k, shape, scale):
        return jax.random.uniform(k, shape, jnp.float32, -scale, scale)

    in_sz = EMB + HID            # LSTM input size 428
    p_in_sz = EMB + in_sz        # gate input size 728 (see fidelity note)
    s_h = 1.0 / float(jnp.sqrt(HID))
    return dict(
        emb_table=jax.random.normal(ks[0], (VOCAB, EMB), jnp.float32) * 0.02,
        # LSTM (transposed: x @ W)
        w_ih_t=u(ks[1], (in_sz, 4 * HID), s_h),
        w_hh_t=u(ks[2], (HID, 4 * HID), s_h),
        b_lstm=u(ks[3], (1, 4 * HID), s_h),          # b_ih + b_hh folded
        # attention
        w_enc=u(ks[4], (HID, ATT), s_h),
        w_dec=u(ks[5], (HID, ATT), s_h),
        w_cov=u(ks[6], (1, ATT), 0.1),
        b_att=u(ks[7], (1, ATT), s_h),
        v_att=u(ks[8], (1, ATT), 1.0 / float(jnp.sqrt(ATT))),
        # fc: Linear(128, 1078)
        w_fc_t=u(ks[9], (HID, VOCAB), s_h),
        b_fc=u(ks[10], (1, VOCAB), s_h),
        # p: Linear(728, 1)
        w_p_t=u(ks[11], (p_in_sz, 1), 1.0 / float(jnp.sqrt(p_in_sz))),
        b_p=u(ks[12], (1, 1), 1.0 / float(jnp.sqrt(p_in_sz))),
    )


def prepare_weights(params):
    """One-time host-side padding / folding / bf16 cast into the kernel layout."""
    f32, bf16 = jnp.float32, jnp.bfloat16

    def pad_to(x, shape):
        return jnp.pad(x, [(0, t - s) for s, t in zip(x.shape, shape)])

    w_ih = params["w_ih_t"]                                      # (428, 4H)
    w_p = params["w_p_t"]                                        # (728, 1)
    w_pe = w_p[:EMB, 0] + w_p[EMB:2 * EMB, 0]                    # fold two emb columns
    # fused gate weight: rows = [emb (padded to 384) | z (128) | h_prev (128)]
    w_gates = jnp.concatenate(
        [pad_to(w_ih[:EMB, :], (EMB_PAD, 4 * HID)), w_ih[EMB:, :], params["w_hh_t"]],
        axis=0)                                                  # (640, 4H)
    return dict(
        emb_table=pad_to(params["emb_table"], (VOCAB, EMB_PAD)).astype(bf16),
        w_gates=w_gates.astype(bf16),
        b_lstm=params["b_lstm"].astype(f32),
        w_enc=params["w_enc"].astype(bf16),
        w_dec=params["w_dec"].astype(bf16),
        w_cov=params["w_cov"].astype(f32),
        b_att=params["b_att"].astype(f32),
        v_att=params["v_att"].astype(f32),
        w_fc=pad_to(params["w_fc_t"], (HID, V_PAD)).astype(bf16),
        b_fc=pad_to(params["b_fc"], (1, V_PAD)).astype(f32),
        w_pe=pad_to(w_pe[None, :], (1, EMB_PAD)).astype(f32),
        w_pz=w_p[2 * EMB:, 0][None, :].astype(f32),
        b_p=params["b_p"].astype(f32),
    )


@jax.jit
def attention_decoder(kw, input_ids, hidden, encoder_output, z, content, coverage):
    h0, c0 = hidden                      # each (1, B, HID)
    B = input_ids.shape[0]
    L = encoder_output.shape[1]
    SLAB = _slab_width(L)

    # TODO(synk): move this gather in-kernel (PrefetchScalarGridSpec + pl.Element
    # row-gather on emb_table) and fuse multiple decode steps / keep weights
    # resident across calls for the autoregressive loop.
    emb = kw["emb_table"][input_ids[:, 0]]          # (B, EMB_PAD) bf16
    z2 = z[:, 0, :]                                 # (B, H) f32
    enc_bf = encoder_output.astype(jnp.bfloat16)    # halves HBM->VMEM DMA bytes

    vmem_cap = _vmem_capacity_bytes()
    budget = int(vmem_cap * 0.70)                   # ~45 MiB on v7x, ~90 MiB on v5e/v6e
    vmem_limit = int(vmem_cap * 0.82)
    bt, B_pad = _pick_batch_tile(B, L, budget)
    use_bf16_scatter = _has_bf16_vpu()

    def bpad(x):
        if B_pad == B:
            return x
        return jnp.pad(x, [(0, B_pad - B)] + [(0, 0)] * (x.ndim - 1))

    data = (bpad(emb), bpad(z2), bpad(h0[0]), bpad(c0[0]),
            bpad(enc_bf), bpad(coverage), bpad(content))
    data_specs = [
        pl.BlockSpec((bt, EMB_PAD), lambda i: (i, 0)),
        pl.BlockSpec((bt, HID), lambda i: (i, 0)),
        pl.BlockSpec((bt, HID), lambda i: (i, 0)),
        pl.BlockSpec((bt, HID), lambda i: (i, 0)),
        pl.BlockSpec((bt, L, HID), lambda i: (i, 0, 0)),
        pl.BlockSpec((bt, L), lambda i: (i, 0)),
        pl.BlockSpec((bt, L), lambda i: (i, 0)),
    ]
    weights = (
        kw["w_gates"], kw["b_lstm"],
        kw["w_enc"], kw["w_dec"], kw["w_cov"], kw["b_att"], kw["v_att"],
        kw["w_fc"], kw["b_fc"], kw["w_pe"], kw["w_pz"], kw["b_p"],
    )
    # Constant block index -> weights stay resident in VMEM across the batch grid.
    weight_specs = [pl.BlockSpec(w.shape, lambda i: (0, 0)) for w in weights]

    out_shapes = (
        jax.ShapeDtypeStruct((B_pad, VOCAB), jnp.float32),   # mixed distribution
        jax.ShapeDtypeStruct((B_pad, SLAB), jnp.float32),    # packed h1|c1|ctx|attn|cov
    )
    out_specs = (
        pl.BlockSpec((bt, VOCAB), lambda i: (i, 0)),
        pl.BlockSpec((bt, SLAB), lambda i: (i, 0)),
    )

    out, slab = pl.pallas_call(
        partial(_decoder_kernel, use_bf16_scatter),
        out_shape=out_shapes,
        grid=(B_pad // bt,),
        in_specs=data_specs + weight_specs,
        out_specs=out_specs,
        compiler_params=pltpu.CompilerParams(
            dimension_semantics=("parallel",),           # megacore sharding on v7x
            vmem_limit_bytes=vmem_limit),
    )(*data, *weights)

    if B_pad != B:
        out = out[:B]
        slab = slab[:B]
    h1 = slab[:, 0 * HID:1 * HID]
    c1 = slab[:, 1 * HID:2 * HID]
    ctx = slab[:, 2 * HID:3 * HID]
    attn = slab[:, 3 * HID:3 * HID + L]
    new_cov = slab[:, 3 * HID + L:3 * HID + 2 * L]

    hidden_new = (h1[None, :, :], c1[None, :, :])        # (1, B, H) each
    output = ctx[:, None, :]                             # (B, 1, H)
    return out, hidden_new, output, attn, new_cov


if __name__ == "__main__":
    key = jax.random.PRNGKey(0)
    kp, ki, kh, kc, ke, kz, kct = jax.random.split(key, 7)

    B, L = 2, 8
    params = make_params(kp)
    kernel_weights = prepare_weights(params)

    input_ids = jax.random.randint(ki, (B, 1), 0, VOCAB, dtype=jnp.int32)
    h0 = jax.random.normal(kh, (1, B, HID), jnp.float32)
    c0 = jax.random.normal(kc, (1, B, HID), jnp.float32)
    encoder_output = jax.random.normal(ke, (B, L, HID), jnp.float32)
    z = jax.random.normal(kz, (B, 1, HID), jnp.float32)
    content = jax.random.randint(kct, (B, L), 0, VOCAB, dtype=jnp.int32)
    coverage = jnp.zeros((B, L), jnp.float32)

    out, hidden, output, attn, cov = attention_decoder(
        kernel_weights, input_ids, (h0, c0), encoder_output, z, content, coverage)
    jax.block_until_ready((out, hidden, output, attn, cov))

    assert out.shape == (B, VOCAB)
    assert hidden[0].shape == (1, B, HID) and hidden[1].shape == (1, B, HID)
    assert output.shape == (B, 1, HID)
    assert attn.shape == (B, L) and cov.shape == (B, L)
    assert bool(jnp.all(jnp.isfinite(out)))
    # attention rows sum to 1 (exact divide; bf16 inputs -> small tolerance)
    assert bool(jnp.allclose(jnp.sum(attn, axis=-1), 1.0, atol=5e-3))
    print("KERNEL_OK")
</pallas_src>

<mosaic_0001>
module attributes {stable_mosaic.version = 11 : i64} {
  func.func @_decoder_kernel(%arg0: i32, %arg1: memref<2x384xbf16, #tpu.memory_space<vmem>>, %arg2: memref<2x128xf32, #tpu.memory_space<vmem>>, %arg3: memref<2x128xf32, #tpu.memory_space<vmem>>, %arg4: memref<2x128xf32, #tpu.memory_space<vmem>>, %arg5: memref<2x8x128xbf16, #tpu.memory_space<vmem>>, %arg6: memref<2x8xf32, #tpu.memory_space<vmem>>, %arg7: memref<2x8xi32, #tpu.memory_space<vmem>>, %arg8: memref<640x512xbf16, #tpu.memory_space<vmem>>, %arg9: memref<1x512xf32, #tpu.memory_space<vmem>>, %arg10: memref<128x128xbf16, #tpu.memory_space<vmem>>, %arg11: memref<128x128xbf16, #tpu.memory_space<vmem>>, %arg12: memref<1x128xf32, #tpu.memory_space<vmem>>, %arg13: memref<1x128xf32, #tpu.memory_space<vmem>>, %arg14: memref<1x128xf32, #tpu.memory_space<vmem>>, %arg15: memref<128x1152xbf16, #tpu.memory_space<vmem>>, %arg16: memref<1x1152xf32, #tpu.memory_space<vmem>>, %arg17: memref<1x384xf32, #tpu.memory_space<vmem>>, %arg18: memref<1x128xf32, #tpu.memory_space<vmem>>, %arg19: memref<1x1xf32, #tpu.memory_space<vmem>>, %arg20: memref<2x1078xf32, #tpu.memory_space<vmem>>, %arg21: memref<2x512xf32, #tpu.memory_space<vmem>>) attributes {dimension_semantics = [#tpu.dimension_semantics<parallel>], iteration_bounds = array<i64: 1>, scalar_prefetch = 0 : i64, scratch_operands = 0 : i64, tpu.core_type = #tpu.core_type<tc>, window_params = [{transform_indices = @transform_0, window_bounds = array<i64: 2, 384>}, {transform_indices = @transform_1, window_bounds = array<i64: 2, 128>}, {transform_indices = @transform_2, window_bounds = array<i64: 2, 128>}, {transform_indices = @transform_3, window_bounds = array<i64: 2, 128>}, {transform_indices = @transform_4, window_bounds = array<i64: 2, 8, 128>}, {transform_indices = @transform_5, window_bounds = array<i64: 2, 8>}, {transform_indices = @transform_6, window_bounds = array<i64: 2, 8>}, {pipeline_mode = #tpu.pipeline_mode<synchronous>, transform_indices = @transform_7, window_bounds = array<i64: 640, 512>}, {pipeline_mode = #tpu.pipeline_mode<synchronous>, transform_indices = @transform_8, window_bounds = array<i64: 1, 512>}, {pipeline_mode = #tpu.pipeline_mode<synchronous>, transform_indices = @transform_9, window_bounds = array<i64: 128, 128>}, {pipeline_mode = #tpu.pipeline_mode<synchronous>, transform_indices = @transform_10, window_bounds = array<i64: 128, 128>}, {pipeline_mode = #tpu.pipeline_mode<synchronous>, transform_indices = @transform_11, window_bounds = array<i64: 1, 128>}, {pipeline_mode = #tpu.pipeline_mode<synchronous>, transform_indices = @transform_12, window_bounds = array<i64: 1, 128>}, {pipeline_mode = #tpu.pipeline_mode<synchronous>, transform_indices = @transform_13, window_bounds = array<i64: 1, 128>}, {pipeline_mode = #tpu.pipeline_mode<synchronous>, transform_indices = @transform_14, window_bounds = array<i64: 128, 1152>}, {pipeline_mode = #tpu.pipeline_mode<synchronous>, transform_indices = @transform_15, window_bounds = array<i64: 1, 1152>}, {pipeline_mode = #tpu.pipeline_mode<synchronous>, transform_indices = @transform_16, window_bounds = array<i64: 1, 384>}, {pipeline_mode = #tpu.pipeline_mode<synchronous>, transform_indices = @transform_17, window_bounds = array<i64: 1, 128>}, {pipeline_mode = #tpu.pipeline_mode<synchronous>, transform_indices = @transform_18, window_bounds = array<i64: 1, 1>}, {transform_indices = @transform_19, window_bounds = array<i64: 2, 1078>}, {transform_indices = @transform_20, window_bounds = array<i64: 2, 512>}]} {
    %c0 = arith.constant 0 : index
    %c0_0 = arith.constant 0 : index
    %0 = vector.load %arg1[%c0, %c0_0] : memref<2x384xbf16, #tpu.memory_space<vmem>>, vector<2x384xbf16>
    %c0_1 = arith.constant 0 : index
    %c0_2 = arith.constant 0 : index
    %1 = vector.load %arg2[%c0_1, %c0_2] : memref<2x128xf32, #tpu.memory_space<vmem>>, vector<2x128xf32>
    %c0_3 = arith.constant 0 : index
    %c0_4 = arith.constant 0 : index
    %2 = vector.load %arg3[%c0_3, %c0_4] : memref<2x128xf32, #tpu.memory_space<vmem>>, vector<2x128xf32>
    %c0_5 = arith.constant 0 : index
    %c0_6 = arith.constant 0 : index
    %3 = vector.load %arg4[%c0_5, %c0_6] : memref<2x128xf32, #tpu.memory_space<vmem>>, vector<2x128xf32>
    %c0_7 = arith.constant 0 : index
    %c0_8 = arith.constant 0 : index
    %c0_9 = arith.constant 0 : index
    %4 = vector.load %arg5[%c0_7, %c0_8, %c0_9] : memref<2x8x128xbf16, #tpu.memory_space<vmem>>, vector<2x8x128xbf16>
    %c0_10 = arith.constant 0 : index
    %c0_11 = arith.constant 0 : index
    %5 = vector.load %arg6[%c0_10, %c0_11] : memref<2x8xf32, #tpu.memory_space<vmem>>, vector<2x8xf32>
    %c0_12 = arith.constant 0 : index
    %c0_13 = arith.constant 0 : index
    %6 = vector.load %arg7[%c0_12, %c0_13] : memref<2x8xi32, #tpu.memory_space<vmem>>, vector<2x8xi32>
    %7 = arith.truncf %1 : vector<2x128xf32> to vector<2x128xbf16>
    %8 = arith.truncf %2 : vector<2x128xf32> to vector<2x128xbf16>
    %9 = tpu.concatenate %0, %7, %8 in 1 : vector<2x384xbf16>, vector<2x128xbf16>, vector<2x128xbf16> -> vector<2x640xbf16>
    %c0_14 = arith.constant 0 : index
    %c0_15 = arith.constant 0 : index
    %10 = vector.load %arg8[%c0_14, %c0_15] : memref<640x512xbf16, #tpu.memory_space<vmem>>, vector<640x512xbf16>
    %cst = arith.constant dense<0.000000e+00> : vector<2x512xf32>
    %11 = tpu.matmul %9, %10, %cst {dimension_numbers = #tpu.dot_dimension_numbers<[1], [0], [0], [1], [0, 0, 1, 1], [], []>} : vector<2x640xbf16>, vector<640x512xbf16>, vector<2x512xf32> -> vector<2x512xf32>
    %c0_16 = arith.constant 0 : index
    %c0_17 = arith.constant 0 : index
    %12 = vector.load %arg9[%c0_16, %c0_17] : memref<1x512xf32, #tpu.memory_space<vmem>>, vector<1x512xf32>
    %13 = vector.broadcast %12 : vector<1x512xf32> to vector<2x512xf32>
    %14 = arith.addf %11, %13 : vector<2x512xf32>
    %15 = vector.extract_strided_slice %14 {offsets = [0, 0], sizes = [2, 128], strides = [1, 1]} : vector<2x512xf32> to vector<2x128xf32>
    %16 = arith.negf %15 : vector<2x128xf32>
    %17 = math.exp %16 : vector<2x128xf32>
    %cst_18 = arith.constant 1.000000e+00 : f32
    %18 = vector.broadcast %cst_18 : f32 to vector<2x128xf32>
    %19 = arith.addf %18, %17 : vector<2x128xf32>
    %20 = arith.divf %18, %19 : vector<2x128xf32>
    %21 = vector.extract_strided_slice %14 {offsets = [0, 128], sizes = [2, 128], strides = [1, 1]} : vector<2x512xf32> to vector<2x128xf32>
    %22 = arith.negf %21 : vector<2x128xf32>
    %23 = math.exp %22 : vector<2x128xf32>
    %cst_19 = arith.constant 1.000000e+00 : f32
    %24 = vector.broadcast %cst_19 : f32 to vector<2x128xf32>
    %25 = arith.addf %24, %23 : vector<2x128xf32>
    %26 = arith.divf %24, %25 : vector<2x128xf32>
    %27 = vector.extract_strided_slice %14 {offsets = [0, 256], sizes = [2, 128], strides = [1, 1]} : vector<2x512xf32> to vector<2x128xf32>
    %28 = math.tanh %27 : vector<2x128xf32>
    %29 = vector.extract_strided_slice %14 {offsets = [0, 384], sizes = [2, 128], strides = [1, 1]} : vector<2x512xf32> to vector<2x128xf32>
    %30 = arith.negf %29 : vector<2x128xf32>
    %31 = math.exp %30 : vector<2x128xf32>
    %cst_20 = arith.constant 1.000000e+00 : f32
    %32 = vector.broadcast %cst_20 : f32 to vector<2x128xf32>
    %33 = arith.addf %32, %31 : vector<2x128xf32>
    %34 = arith.divf %32, %33 : vector<2x128xf32>
    %35 = arith.mulf %26, %3 : vector<2x128xf32>
    %36 = arith.mulf %20, %28 : vector<2x128xf32>
    %37 = arith.addf %35, %36 : vector<2x128xf32>
    %38 = math.tanh %37 : vector<2x128xf32>
    %39 = arith.mulf %34, %38 : vector<2x128xf32>
    %40 = vector.shape_cast %4 : vector<2x8x128xbf16> to vector<16x128xbf16>
    %c0_21 = arith.constant 0 : index
    %c0_22 = arith.constant 0 : index
    %41 = vector.load %arg10[%c0_21, %c0_22] : memref<128x128xbf16, #tpu.memory_space<vmem>>, vector<128x128xbf16>
    %cst_23 = arith.constant dense<0.000000e+00> : vector<16x128xf32>
    %42 = tpu.matmul %40, %41, %cst_23 {dimension_numbers = #tpu.dot_dimension_numbers<[1], [0], [0], [1], [0, 0, 1, 1], [], []>} : vector<16x128xbf16>, vector<128x128xbf16>, vector<16x128xf32> -> vector<16x128xf32>
    %43 = vector.shape_cast %42 : vector<16x128xf32> to vector<2x8x128xf32>
    %44 = arith.truncf %39 : vector<2x128xf32> to vector<2x128xbf16>
    %c0_24 = arith.constant 0 : index
    %c0_25 = arith.constant 0 : index
    %45 = vector.load %arg11[%c0_24, %c0_25] : memref<128x128xbf16, #tpu.memory_space<vmem>>, vector<128x128xbf16>
    %cst_26 = arith.constant dense<0.000000e+00> : vector<2x128xf32>
    %46 = tpu.matmul %44, %45, %cst_26 {dimension_numbers = #tpu.dot_dimension_numbers<[1], [0], [0], [1], [0, 0, 1, 1], [], []>} : vector<2x128xbf16>, vector<128x128xbf16>, vector<2x128xf32> -> vector<2x128xf32>
    %47 = vector.shape_cast %5 : vector<2x8xf32> to vector<2x8x1xf32>
    %c0_27 = arith.constant 0 : index
    %c0_28 = arith.constant 0 : index
    %48 = vector.load %arg12[%c0_27, %c0_28] : memref<1x128xf32, #tpu.memory_space<vmem>>, vector<1x128xf32>
    %49 = vector.shape_cast %48 : vector<1x128xf32> to vector<1x1x128xf32>
    %50 = vector.broadcast %47 : vector<2x8x1xf32> to vector<2x8x128xf32>
    %51 = vector.broadcast %49 : vector<1x1x128xf32> to vector<2x8x128xf32>
    %52 = arith.mulf %50, %51 : vector<2x8x128xf32>
    %53 = vector.shape_cast %46 : vector<2x128xf32> to vector<2x1x128xf32>
    %54 = vector.broadcast %53 : vector<2x1x128xf32> to vector<2x8x128xf32>
    %55 = arith.addf %43, %54 : vector<2x8x128xf32>
    %56 = arith.addf %55, %52 : vector<2x8x128xf32>
    %c0_29 = arith.constant 0 : index
    %c0_30 = arith.constant 0 : index
    %57 = vector.load %arg13[%c0_29, %c0_30] : memref<1x128xf32, #tpu.memory_space<vmem>>, vector<1x128xf32>
    %58 = vector.shape_cast %57 : vector<1x128xf32> to vector<1x1x128xf32>
    %59 = vector.broadcast %58 : vector<1x1x128xf32> to vector<2x8x128xf32>
    %60 = arith.addf %56, %59 : vector<2x8x128xf32>
    %61 = math.tanh %60 : vector<2x8x128xf32>
    %c0_31 = arith.constant 0 : index
    %c0_32 = arith.constant 0 : index
    %62 = vector.load %arg14[%c0_31, %c0_32] : memref<1x128xf32, #tpu.memory_space<vmem>>, vector<1x128xf32>
    %63 = vector.shape_cast %62 : vector<1x128xf32> to vector<1x1x128xf32>
    %64 = vector.broadcast %63 : vector<1x1x128xf32> to vector<2x8x128xf32>
    %65 = arith.mulf %61, %64 : vector<2x8x128xf32>
    %cst_33 = arith.constant dense<0.000000e+00> : vector<2x8xf32>
    %66 = vector.multi_reduction <add>, %65, %cst_33 [2] : vector<2x8x128xf32> to vector<2x8xf32>
    %cst_34 = arith.constant dense<0xFF800000> : vector<2xf32>
    %67 = vector.multi_reduction <maximumf>, %66, %cst_34 [1] : vector<2x8xf32> to vector<2xf32>
    %68 = vector.shape_cast %67 : vector<2xf32> to vector<2x1xf32>
    %69 = vector.broadcast %68 : vector<2x1xf32> to vector<2x8xf32>
    %70 = arith.subf %66, %69 : vector<2x8xf32>
    %71 = math.exp %70 : vector<2x8xf32>
    %cst_35 = arith.constant dense<0.000000e+00> : vector<2xf32>
    %72 = vector.multi_reduction <add>, %71, %cst_35 [1] : vector<2x8xf32> to vector<2xf32>
    %73 = vector.shape_cast %72 : vector<2xf32> to vector<2x1xf32>
    %74 = vector.broadcast %73 : vector<2x1xf32> to vector<2x8xf32>
    %75 = arith.divf %71, %74 : vector<2x8xf32>
    %76 = vector.shape_cast %75 : vector<2x8xf32> to vector<2x8x1xf32>
    %77 = arith.extf %4 : vector<2x8x128xbf16> to vector<2x8x128xf32>
    %78 = vector.broadcast %76 : vector<2x8x1xf32> to vector<2x8x128xf32>
    %79 = arith.mulf %78, %77 : vector<2x8x128xf32>
    %cst_36 = arith.constant dense<0.000000e+00> : vector<2x128xf32>
    %80 = vector.multi_reduction <add>, %79, %cst_36 [1] : vector<2x8x128xf32> to vector<2x128xf32>
    %81 = arith.addf %5, %75 : vector<2x8xf32>
    %82 = arith.truncf %80 : vector<2x128xf32> to vector<2x128xbf16>
    %c0_37 = arith.constant 0 : index
    %c0_38 = arith.constant 0 : index
    %83 = vector.load %arg15[%c0_37, %c0_38] : memref<128x1152xbf16, #tpu.memory_space<vmem>>, vector<128x1152xbf16>
    %cst_39 = arith.constant dense<0.000000e+00> : vector<2x1152xf32>
    %84 = tpu.matmul %82, %83, %cst_39 {dimension_numbers = #tpu.dot_dimension_numbers<[1], [0], [0], [1], [0, 0, 1, 1], [], []>} : vector<2x128xbf16>, vector<128x1152xbf16>, vector<2x1152xf32> -> vector<2x1152xf32>
    %c0_40 = arith.constant 0 : index
    %c0_41 = arith.constant 0 : index
    %85 = vector.load %arg16[%c0_40, %c0_41] : memref<1x1152xf32, #tpu.memory_space<vmem>>, vector<1x1152xf32>
    %86 = vector.broadcast %85 : vector<1x1152xf32> to vector<2x1152xf32>
    %87 = arith.addf %84, %86 : vector<2x1152xf32>
    %88 = arith.extf %0 : vector<2x384xbf16> to vector<2x384xf32>
    %c0_42 = arith.constant 0 : index
    %c0_43 = arith.constant 0 : index
    %89 = vector.load %arg17[%c0_42, %c0_43] : memref<1x384xf32, #tpu.memory_space<vmem>>, vector<1x384xf32>
    %90 = vector.broadcast %89 : vector<1x384xf32> to vector<2x384xf32>
    %91 = arith.mulf %88, %90 : vector<2x384xf32>
    %cst_44 = arith.constant dense<0.000000e+00> : vector<2xf32>
    %92 = vector.multi_reduction <add>, %91, %cst_44 [1] : vector<2x384xf32> to vector<2xf32>
    %93 = vector.shape_cast %92 : vector<2xf32> to vector<2x1xf32>
    %c0_45 = arith.constant 0 : index
    %c0_46 = arith.constant 0 : index
    %94 = vector.load %arg18[%c0_45, %c0_46] : memref<1x128xf32, #tpu.memory_space<vmem>>, vector<1x128xf32>
    %95 = vector.broadcast %94 : vector<1x128xf32> to vector<2x128xf32>
    %96 = arith.mulf %1, %95 : vector<2x128xf32>
    %cst_47 = arith.constant dense<0.000000e+00> : vector<2xf32>
    %97 = vector.multi_reduction <add>, %96, %cst_47 [1] : vector<2x128xf32> to vector<2xf32>
    %98 = vector.shape_cast %97 : vector<2xf32> to vector<2x1xf32>
    %99 = arith.addf %93, %98 : vector<2x1xf32>
    %c0_48 = arith.constant 0 : index
    %c0_49 = arith.constant 0 : index
    %100 = vector.load %arg19[%c0_48, %c0_49] : memref<1x1xf32, #tpu.memory_space<vmem>>, vector<1x1xf32>
    %101 = vector.broadcast %100 : vector<1x1xf32> to vector<2x1xf32>
    %102 = arith.addf %99, %101 : vector<2x1xf32>
    %103 = arith.negf %102 : vector<2x1xf32>
    %104 = math.exp %103 : vector<2x1xf32>
    %cst_50 = arith.constant 1.000000e+00 : f32
    %105 = vector.broadcast %cst_50 : f32 to vector<2x1xf32>
    %106 = arith.addf %105, %104 : vector<2x1xf32>
    %107 = arith.divf %105, %106 : vector<2x1xf32>
    %108 = vector.broadcast %107 : vector<2x1xf32> to vector<2x8xf32>
    %109 = arith.mulf %108, %75 : vector<2x8xf32>
    %110 = tpu.iota {dimensions = array<i32: 1>} : vector<1x1152xi32>
    %cst_51 = arith.constant 0.000000e+00 : f32
    %111 = vector.broadcast %cst_51 : f32 to vector<2x1152xf32>
    %112 = vector.extract_strided_slice %6 {offsets = [0, 0], sizes = [2, 1], strides = [1, 1]} : vector<2x8xi32> to vector<2x1xi32>
    %113 = vector.shape_cast %112 : vector<2x1xi32> to vector<2xi32>
    %114 = vector.shape_cast %113 : vector<2xi32> to vector<2x1xi32>
    %115 = vector.broadcast %110 : vector<1x1152xi32> to vector<2x1152xi32>
    %116 = vector.broadcast %114 : vector<2x1xi32> to vector<2x1152xi32>
    %117 = arith.cmpi eq, %115, %116 : vector<2x1152xi32>
    %118 = vector.extract_strided_slice %109 {offsets = [0, 0], sizes = [2, 1], strides = [1, 1]} : vector<2x8xf32> to vector<2x1xf32>
    %119 = vector.shape_cast %118 : vector<2x1xf32> to vector<2xf32>
    %120 = vector.shape_cast %119 : vector<2xf32> to vector<2x1xf32>
    %121 = vector.shape_cast %120 : vector<2x1xf32> to vector<2x1xf32>
    %122 = vector.broadcast %121 : vector<2x1xf32> to vector<2x1152xf32>
    %123 = arith.select %117, %122, %111 : vector<2x1152xi1>, vector<2x1152xf32>
    %124 = vector.extract_strided_slice %6 {offsets = [0, 1], sizes = [2, 1], strides = [1, 1]} : vector<2x8xi32> to vector<2x1xi32>
    %125 = vector.shape_cast %124 : vector<2x1xi32> to vector<2xi32>
    %126 = vector.shape_cast %125 : vector<2xi32> to vector<2x1xi32>
    %127 = vector.broadcast %110 : vector<1x1152xi32> to vector<2x1152xi32>
    %128 = vector.broadcast %126 : vector<2x1xi32> to vector<2x1152xi32>
    %129 = arith.cmpi eq, %127, %128 : vector<2x1152xi32>
    %130 = vector.extract_strided_slice %109 {offsets = [0, 1], sizes = [2, 1], strides = [1, 1]} : vector<2x8xf32> to vector<2x1xf32>
    %131 = vector.shape_cast %130 : vector<2x1xf32> to vector<2xf32>
    %132 = vector.shape_cast %131 : vector<2xf32> to vector<2x1xf32>
    %133 = vector.shape_cast %132 : vector<2x1xf32> to vector<2x1xf32>
    %134 = vector.broadcast %133 : vector<2x1xf32> to vector<2x1152xf32>
    %135 = arith.select %129, %134, %123 : vector<2x1152xi1>, vector<2x1152xf32>
    %136 = vector.extract_strided_slice %6 {offsets = [0, 2], sizes = [2, 1], strides = [1, 1]} : vector<2x8xi32> to vector<2x1xi32>
    %137 = vector.shape_cast %136 : vector<2x1xi32> to vector<2xi32>
    %138 = vector.shape_cast %137 : vector<2xi32> to vector<2x1xi32>
    %139 = vector.broadcast %110 : vector<1x1152xi32> to vector<2x1152xi32>
    %140 = vector.broadcast %138 : vector<2x1xi32> to vector<2x1152xi32>
    %141 = arith.cmpi eq, %139, %140 : vector<2x1152xi32>
    %142 = vector.extract_strided_slice %109 {offsets = [0, 2], sizes = [2, 1], strides = [1, 1]} : vector<2x8xf32> to vector<2x1xf32>
    %143 = vector.shape_cast %142 : vector<2x1xf32> to vector<2xf32>
    %144 = vector.shape_cast %143 : vector<2xf32> to vector<2x1xf32>
    %145 = vector.shape_cast %144 : vector<2x1xf32> to vector<2x1xf32>
    %146 = vector.broadcast %145 : vector<2x1xf32> to vector<2x1152xf32>
    %147 = arith.select %141, %146, %135 : vector<2x1152xi1>, vector<2x1152xf32>
    %148 = vector.extract_strided_slice %6 {offsets = [0, 3], sizes = [2, 1], strides = [1, 1]} : vector<2x8xi32> to vector<2x1xi32>
    %149 = vector.shape_cast %148 : vector<2x1xi32> to vector<2xi32>
    %150 = vector.shape_cast %149 : vector<2xi32> to vector<2x1xi32>
    %151 = vector.broadcast %110 : vector<1x1152xi32> to vector<2x1152xi32>
    %152 = vector.broadcast %150 : vector<2x1xi32> to vector<2x1152xi32>
    %153 = arith.cmpi eq, %151, %152 : vector<2x1152xi32>
    %154 = vector.extract_strided_slice %109 {offsets = [0, 3], sizes = [2, 1], strides = [1, 1]} : vector<2x8xf32> to vector<2x1xf32>
    %155 = vector.shape_cast %154 : vector<2x1xf32> to vector<2xf32>
    %156 = vector.shape_cast %155 : vector<2xf32> to vector<2x1xf32>
    %157 = vector.shape_cast %156 : vector<2x1xf32> to vector<2x1xf32>
    %158 = vector.broadcast %157 : vector<2x1xf32> to vector<2x1152xf32>
    %159 = arith.select %153, %158, %147 : vector<2x1152xi1>, vector<2x1152xf32>
    %160 = vector.extract_strided_slice %6 {offsets = [0, 4], sizes = [2, 1], strides = [1, 1]} : vector<2x8xi32> to vector<2x1xi32>
    %161 = vector.shape_cast %160 : vector<2x1xi32> to vector<2xi32>
    %162 = vector.shape_cast %161 : vector<2xi32> to vector<2x1xi32>
    %163 = vector.broadcast %110 : vector<1x1152xi32> to vector<2x1152xi32>
    %164 = vector.broadcast %162 : vector<2x1xi32> to vector<2x1152xi32>
    %165 = arith.cmpi eq, %163, %164 : vector<2x1152xi32>
    %166 = vector.extract_strided_slice %109 {offsets = [0, 4], sizes = [2, 1], strides = [1, 1]} : vector<2x8xf32> to vector<2x1xf32>
    %167 = vector.shape_cast %166 : vector<2x1xf32> to vector<2xf32>
    %168 = vector.shape_cast %167 : vector<2xf32> to vector<2x1xf32>
    %169 = vector.shape_cast %168 : vector<2x1xf32> to vector<2x1xf32>
    %170 = vector.broadcast %169 : vector<2x1xf32> to vector<2x1152xf32>
    %171 = arith.select %165, %170, %159 : vector<2x1152xi1>, vector<2x1152xf32>
    %172 = vector.extract_strided_slice %6 {offsets = [0, 5], sizes = [2, 1], strides = [1, 1]} : vector<2x8xi32> to vector<2x1xi32>
    %173 = vector.shape_cast %172 : vector<2x1xi32> to vector<2xi32>
    %174 = vector.shape_cast %173 : vector<2xi32> to vector<2x1xi32>
    %175 = vector.broadcast %110 : vector<1x1152xi32> to vector<2x1152xi32>
    %176 = vector.broadcast %174 : vector<2x1xi32> to vector<2x1152xi32>
    %177 = arith.cmpi eq, %175, %176 : vector<2x1152xi32>
    %178 = vector.extract_strided_slice %109 {offsets = [0, 5], sizes = [2, 1], strides = [1, 1]} : vector<2x8xf32> to vector<2x1xf32>
    %179 = vector.shape_cast %178 : vector<2x1xf32> to vector<2xf32>
    %180 = vector.shape_cast %179 : vector<2xf32> to vector<2x1xf32>
    %181 = vector.shape_cast %180 : vector<2x1xf32> to vector<2x1xf32>
    %182 = vector.broadcast %181 : vector<2x1xf32> to vector<2x1152xf32>
    %183 = arith.select %177, %182, %171 : vector<2x1152xi1>, vector<2x1152xf32>
    %184 = vector.extract_strided_slice %6 {offsets = [0, 6], sizes = [2, 1], strides = [1, 1]} : vector<2x8xi32> to vector<2x1xi32>
    %185 = vector.shape_cast %184 : vector<2x1xi32> to vector<2xi32>
    %186 = vector.shape_cast %185 : vector<2xi32> to vector<2x1xi32>
    %187 = vector.broadcast %110 : vector<1x1152xi32> to vector<2x1152xi32>
    %188 = vector.broadcast %186 : vector<2x1xi32> to vector<2x1152xi32>
    %189 = arith.cmpi eq, %187, %188 : vector<2x1152xi32>
    %190 = vector.extract_strided_slice %109 {offsets = [0, 6], sizes = [2, 1], strides = [1, 1]} : vector<2x8xf32> to vector<2x1xf32>
    %191 = vector.shape_cast %190 : vector<2x1xf32> to vector<2xf32>
    %192 = vector.shape_cast %191 : vector<2xf32> to vector<2x1xf32>
    %193 = vector.shape_cast %192 : vector<2x1xf32> to vector<2x1xf32>
    %194 = vector.broadcast %193 : vector<2x1xf32> to vector<2x1152xf32>
    %195 = arith.select %189, %194, %183 : vector<2x1152xi1>, vector<2x1152xf32>
    %196 = vector.extract_strided_slice %6 {offsets = [0, 7], sizes = [2, 1], strides = [1, 1]} : vector<2x8xi32> to vector<2x1xi32>
    %197 = vector.shape_cast %196 : vector<2x1xi32> to vector<2xi32>
    %198 = vector.shape_cast %197 : vector<2xi32> to vector<2x1xi32>
    %199 = vector.broadcast %110 : vector<1x1152xi32> to vector<2x1152xi32>
    %200 = vector.broadcast %198 : vector<2x1xi32> to vector<2x1152xi32>
    %201 = arith.cmpi eq, %199, %200 : vector<2x1152xi32>
    %202 = vector.extract_strided_slice %109 {offsets = [0, 7], sizes = [2, 1], strides = [1, 1]} : vector<2x8xf32> to vector<2x1xf32>
    %203 = vector.shape_cast %202 : vector<2x1xf32> to vector<2xf32>
    %204 = vector.shape_cast %203 : vector<2xf32> to vector<2x1xf32>
    %205 = vector.shape_cast %204 : vector<2x1xf32> to vector<2x1xf32>
    %206 = vector.broadcast %205 : vector<2x1xf32> to vector<2x1152xf32>
    %207 = arith.select %201, %206, %195 : vector<2x1152xi1>, vector<2x1152xf32>
    %cst_52 = arith.constant 1.000000e+00 : f32
    %208 = vector.broadcast %cst_52 : f32 to vector<2x1xf32>
    %209 = arith.subf %208, %107 : vector<2x1xf32>
    %210 = vector.broadcast %209 : vector<2x1xf32> to vector<2x1152xf32>
    %211 = arith.mulf %210, %87 : vector<2x1152xf32>
    %212 = arith.addf %211, %207 : vector<2x1152xf32>
    %213 = vector.extract_strided_slice %212 {offsets = [0, 0], sizes = [2, 1078], strides = [1, 1]} : vector<2x1152xf32> to vector<2x1078xf32>
    %c0_53 = arith.constant 0 : index
    %c0_54 = arith.constant 0 : index
    %214 = vector.load %arg20[%c0_53, %c0_54] : memref<2x1078xf32, #tpu.memory_space<vmem>>, vector<2x1078xf32>
    tpu.vector_store %arg20[%c0_53, %c0_54], %213 {strides = array<i32>} : memref<2x1078xf32, #tpu.memory_space<vmem>>, vector<2x1078xf32>,
    %c0_55 = arith.constant 0 : index
    %c0_56 = arith.constant 0 : index
    %215 = vector.load %arg21[%c0_55, %c0_56] : memref<2x512xf32, #tpu.memory_space<vmem>>, vector<2x128xf32>
    tpu.vector_store %arg21[%c0_55, %c0_56], %39 {strides = array<i32>} : memref<2x512xf32, #tpu.memory_space<vmem>>, vector<2x128xf32>,
    %c0_57 = arith.constant 0 : index
    %c128 = arith.constant 128 : index
    %216 = vector.load %arg21[%c0_57, %c128] : memref<2x512xf32, #tpu.memory_space<vmem>>, vector<2x128xf32>
    tpu.vector_store %arg21[%c0_57, %c128], %37 {strides = array<i32>} : memref<2x512xf32, #tpu.memory_space<vmem>>, vector<2x128xf32>,
    %c0_58 = arith.constant 0 : index
    %c256 = arith.constant 256 : index
    %217 = vector.load %arg21[%c0_58, %c256] : memref<2x512xf32, #tpu.memory_space<vmem>>, vector<2x128xf32>
    tpu.vector_store %arg21[%c0_58, %c256], %80 {strides = array<i32>} : memref<2x512xf32, #tpu.memory_space<vmem>>, vector<2x128xf32>,
    %c0_59 = arith.constant 0 : index
    %c384 = arith.constant 384 : index
    %218 = vector.load %arg21[%c0_59, %c384] : memref<2x512xf32, #tpu.memory_space<vmem>>, vector<2x8xf32>
    tpu.vector_store %arg21[%c0_59, %c384], %75 {strides = array<i32>} : memref<2x512xf32, #tpu.memory_space<vmem>>, vector<2x8xf32>,
    %c0_60 = arith.constant 0 : index
    %c392 = arith.constant 392 : index
    %219 = vector.load %arg21[%c0_60, %c392] : memref<2x512xf32, #tpu.memory_space<vmem>>, vector<2x8xf32>
    tpu.vector_store %arg21[%c0_60, %c392], %81 {strides = array<i32>} : memref<2x512xf32, #tpu.memory_space<vmem>>, vector<2x8xf32>,
    %cst_61 = arith.constant 0.000000e+00 : f32
    %220 = vector.broadcast %cst_61 : f32 to vector<2x112xf32>
    %c0_62 = arith.constant 0 : index
    %c400 = arith.constant 400 : index
    %221 = vector.load %arg21[%c0_62, %c400] : memref<2x512xf32, #tpu.memory_space<vmem>>, vector<2x112xf32>
    tpu.vector_store %arg21[%c0_62, %c400], %220 {strides = array<i32>} : memref<2x512xf32, #tpu.memory_space<vmem>>, vector<2x112xf32>,
    return
  }
  func.func @transform_0(%arg0: i32) -> (i32, i32) {
    %c0_i32 = arith.constant 0 : i32
    %c0_i32_0 = arith.constant 0 : i32
    return %arg0, %c0_i32 : i32, i32
  }
  func.func @transform_1(%arg0: i32) -> (i32, i32) {
    %c0_i32 = arith.constant 0 : i32
    %c0_i32_0 = arith.constant 0 : i32
    return %arg0, %c0_i32 : i32, i32
  }
  func.func @transform_2(%arg0: i32) -> (i32, i32) {
    %c0_i32 = arith.constant 0 : i32
    %c0_i32_0 = arith.constant 0 : i32
    return %arg0, %c0_i32 : i32, i32
  }
  func.func @transform_3(%arg0: i32) -> (i32, i32) {
    %c0_i32 = arith.constant 0 : i32
    %c0_i32_0 = arith.constant 0 : i32
    return %arg0, %c0_i32 : i32, i32
  }
  func.func @transform_4(%arg0: i32) -> (i32, i32, i32) {
    %c0_i32 = arith.constant 0 : i32
    %c0_i32_0 = arith.constant 0 : i32
    %c0_i32_1 = arith.constant 0 : i32
    return %arg0, %c0_i32, %c0_i32_0 : i32, i32, i32
  }
  func.func @transform_5(%arg0: i32) -> (i32, i32) {
    %c0_i32 = arith.constant 0 : i32
    %c0_i32_0 = arith.constant 0 : i32
    return %arg0, %c0_i32 : i32, i32
  }
  func.func @transform_6(%arg0: i32) -> (i32, i32) {
    %c0_i32 = arith.constant 0 : i32
    %c0_i32_0 = arith.constant 0 : i32
    return %arg0, %c0_i32 : i32, i32
  }
  func.func @transform_7(%arg0: i32) -> (i32, i32) {
    %c0_i32 = arith.constant 0 : i32
    %c0_i32_0 = arith.constant 0 : i32
    %c0_i32_1 = arith.constant 0 : i32
    return %c0_i32, %c0_i32_0 : i32, i32
  }
  func.func @transform_8(%arg0: i32) -> (i32, i32) {
    %c0_i32 = arith.constant 0 : i32
    %c0_i32_0 = arith.constant 0 : i32
    %c0_i32_1 = arith.constant 0 : i32
    return %c0_i32, %c0_i32_0 : i32, i32
  }
  func.func @transform_9(%arg0: i32) -> (i32, i32) {
    %c0_i32 = arith.constant 0 : i32
    %c0_i32_0 = arith.constant 0 : i32
    %c0_i32_1 = arith.constant 0 : i32
    return %c0_i32, %c0_i32_0 : i32, i32
  }
  func.func @transform_10(%arg0: i32) -> (i32, i32) {
    %c0_i32 = arith.constant 0 : i32
    %c0_i32_0 = arith.constant 0 : i32
    %c0_i32_1 = arith.constant 0 : i32
    return %c0_i32, %c0_i32_0 : i32, i32
  }
  func.func @transform_11(%arg0: i32) -> (i32, i32) {
    %c0_i32 = arith.constant 0 : i32
    %c0_i32_0 = arith.constant 0 : i32
    %c0_i32_1 = arith.constant 0 : i32
    return %c0_i32, %c0_i32_0 : i32, i32
  }
  func.func @transform_12(%arg0: i32) -> (i32, i32) {
    %c0_i32 = arith.constant 0 : i32
    %c0_i32_0 = arith.constant 0 : i32
    %c0_i32_1 = arith.constant 0 : i32
    return %c0_i32, %c0_i32_0 : i32, i32
  }
  func.func @transform_13(%arg0: i32) -> (i32, i32) {
    %c0_i32 = arith.constant 0 : i32
    %c0_i32_0 = arith.constant 0 : i32
    %c0_i32_1 = arith.constant 0 : i32
    return %c0_i32, %c0_i32_0 : i32, i32
  }
  func.func @transform_14(%arg0: i32) -> (i32, i32) {
    %c0_i32 = arith.constant 0 : i32
    %c0_i32_0 = arith.constant 0 : i32
    %c0_i32_1 = arith.constant 0 : i32
    return %c0_i32, %c0_i32_0 : i32, i32
  }
  func.func @transform_15(%arg0: i32) -> (i32, i32) {
    %c0_i32 = arith.constant 0 : i32
    %c0_i32_0 = arith.constant 0 : i32
    %c0_i32_1 = arith.constant 0 : i32
    return %c0_i32, %c0_i32_0 : i32, i32
  }
  func.func @transform_16(%arg0: i32) -> (i32, i32) {
    %c0_i32 = arith.constant 0 : i32
    %c0_i32_0 = arith.constant 0 : i32
    %c0_i32_1 = arith.constant 0 : i32
    return %c0_i32, %c0_i32_0 : i32, i32
  }
  func.func @transform_17(%arg0: i32) -> (i32, i32) {
    %c0_i32 = arith.constant 0 : i32
    %c0_i32_0 = arith.constant 0 : i32
    %c0_i32_1 = arith.constant 0 : i32
    return %c0_i32, %c0_i32_0 : i32, i32
  }
  func.func @transform_18(%arg0: i32) -> (i32, i32) {
    %c0_i32 = arith.constant 0 : i32
    %c0_i32_0 = arith.constant 0 : i32
    %c0_i32_1 = arith.constant 0 : i32
    return %c0_i32, %c0_i32_0 : i32, i32
  }
  func.func @transform_19(%arg0: i32) -> (i32, i32) {
    %c0_i32 = arith.constant 0 : i32
    %c0_i32_0 = arith.constant 0 : i32
    return %arg0, %c0_i32 : i32, i32
  }
  func.func @transform_20(%arg0: i32) -> (i32, i32) {
    %c0_i32 = arith.constant 0 : i32
    %c0_i32_0 = arith.constant 0 : i32
    return %arg0, %c0_i32 : i32, i32
  }
}

</mosaic_0001>

<llo_original>
// kernel: attention_decoder.1
$region0: #{attention_decoder.1}
  #allocation0 [shape = 'u32[]', space=smem, size = 0x4, offset = 0x4, fixed_abs, tag = 'smem constant byte address 0x4 - core index']
  #allocation1 [shape = 'u32[144,128]{1,0:T(1,128)}', space=vmem, size = 0x12000, scoped, tag = 'internal scratch']
  #allocation2 [shape = 'f32[1,1]{1,0:T(1,128)S(1)}', space=vmem, size = 0x200, scoped, tag = 'scoped memory for attention_decoder.1']
  %s0 = inlined_call_operand.vmem [shape: bf16[2,384], index: 0, kind: input, shape index: {}]
  %s1 = inlined_call_operand.vmem [shape: f32[2,128], index: 1, kind: input, shape index: {}]
  %s2 = inlined_call_operand.vmem [shape: f32[2,128], index: 2, kind: input, shape index: {}]
  %s3 = inlined_call_operand.vmem [shape: f32[2,128], index: 3, kind: input, shape index: {}]
  %s4 = inlined_call_operand.vmem [shape: bf16[2,8,128], index: 4, kind: input, shape index: {}]
  %s5 = inlined_call_operand.vmem [shape: f32[2,8], index: 5, kind: input, shape index: {}]
  %s6 = inlined_call_operand.vmem [shape: s32[2,8], index: 6, kind: input, shape index: {}]
  %s7 = inlined_call_operand.hbm [shape: bf16[640,512], index: 7, kind: input, shape index: {}]
  %s8 = inlined_call_operand.vmem [shape: f32[1,512], index: 8, kind: input, shape index: {}]
  %s9 = inlined_call_operand.vmem [shape: bf16[128,128], index: 9, kind: input, shape index: {}]
  %s10 = inlined_call_operand.hbm [shape: bf16[128,128], index: 10, kind: input, shape index: {}]
  %s11 = inlined_call_operand.hbm [shape: f32[1,128], index: 11, kind: input, shape index: {}]
  %s12 = inlined_call_operand.hbm [shape: f32[1,128], index: 12, kind: input, shape index: {}]
  %s13 = inlined_call_operand.hbm [shape: f32[1,128], index: 13, kind: input, shape index: {}]
  %s14 = inlined_call_operand.hbm [shape: bf16[128,1152], index: 14, kind: input, shape index: {}]
  %s15 = inlined_call_operand.hbm [shape: f32[1,1152], index: 15, kind: input, shape index: {}]
  %s16 = inlined_call_operand.vmem [shape: f32[1,384], index: 16, kind: input, shape index: {}]
  %s17 = inlined_call_operand.hbm [shape: f32[1,128], index: 17, kind: input, shape index: {}]
  %s18 = inlined_call_operand.<no memory space> [shape: f32[1,1], index: 18, kind: input, shape index: {}]
  %s19 = inlined_call_operand.hbm [shape: f32[2,1078], index: 19, kind: output, shape index: {0}]
  %s20 = inlined_call_operand.vmem [shape: f32[2,512], index: 20, kind: output, shape index: {1}]
  %21 = xla_tuple %s19, %s20
  %s22 = sld [smem:[#allocation0]]
  $region126: #{attention_decoder.1} parent=0
    _
  %s24 = ssub.s32 1, %s22
  %s25 = scalar_select 0, %s24, %s22
  %v26 = vstv %s18
  %27 = vst [vmem:[#allocation2] sm:$0x1] %v26
  $region1: #{attention_decoder.1} parent=0
    #allocation3 [shape = 'u8[655360]{0}', space=vmem, size = 0xa0000, scoped, tag = 'input window, operand 7, single buffered']
    #allocation4 [shape = 's32[1]{0}', space=sflag, size = 0x4, scoped, tag = 'scoped memory for attention_decoder.1']
    #allocation5 [shape = 's32[1]{0}', space=sflag, size = 0x4, scoped, tag = 'scoped memory for attention_decoder.1']
    #allocation6 [shape = 'u8[32768]{0}', space=vmem, size = 0x8000, scoped, tag = 'input window, operand 10, single buffered']
    #allocation7 [shape = 's32[1]{0}', space=sflag, size = 0x4, scoped, tag = 'scoped memory for attention_decoder.1']
    #allocation8 [shape = 'u8[512]{0}', space=vmem, size = 0x400, scoped, tag = 'input window, operand 11, single buffered']
    #allocation9 [shape = 'u8[512]{0}', space=vmem, size = 0x400, scoped, tag = 'input window, operand 12, single buffered']
    #allocation10 [shape = 's32[1]{0}', space=sflag, size = 0x4, scoped, tag = 'scoped memory for attention_decoder.1']
    #allocation11 [shape = 'u8[512]{0}', space=vmem, size = 0x400, scoped, tag = 'input window, operand 13, single buffered']
    #allocation12 [shape = 'u8[294912]{0}', space=vmem, size = 0x48000, scoped, tag = 'input window, operand 14, single buffered']
    #allocation13 [shape = 's32[1]{0}', space=sflag, size = 0x4, scoped, tag = 'scoped memory for attention_decoder.1']
    #allocation14 [shape = 'u8[4608]{0}', space=vmem, size = 0x1400, scoped, tag = 'input window, operand 15, single buffered']
    #allocation15 [shape = 'u8[512]{0}', space=vmem, size = 0x400, scoped, tag = 'input window, operand 17, single buffered']
    #allocation16 [shape = 's32[1]{0}', space=sflag, size = 0x4, scoped, tag = 'scoped memory for attention_decoder.1']
    #allocation17 [shape = 'u8[9216]{0}', space=vmem, size = 0x2400, scoped, tag = 'output window, operand 0, single buffered']
    %28 = vsyncpa [#allocation4], 0
    %29 = vsyncpa [#allocation7], 0
    %30 = vsyncpa [#allocation10], 0
    %31 = vsyncpa [#allocation13], 0
    %32 = vsyncpa [#allocation16], 0
    %33 = vsyncpa [#allocation5], 0
    // Predicated region
    $region2: #{attention_decoder.1} parent=1 // pred_check
      _
    $region3: #{attention_decoder.1} parent=1 // pred_check_branch
      %35 = sbr.rel (0) target = $region5
    $region4: #{attention_decoder.1} parent=1 // pred_region
      _
    $region5: #{attention_decoder.1} parent=1 // pred_fallthru
      _
    // Predicated region
    $region6: #{attention_decoder.1} parent=1 // pred_check
      _
    $region7: #{attention_decoder.1} parent=1 // pred_check_branch
      %37 = sbr.rel (0) target = $region9
    $region8: #{attention_decoder.1} parent=1 // pred_region
      _
    $region9: #{attention_decoder.1} parent=1 // pred_fallthru
      _
    // Predicated region
    $region10: #{attention_decoder.1} parent=1 // pred_check
      _
    $region11: #{attention_decoder.1} parent=1 // pred_check_branch
      %39 = sbr.rel (0) target = $region13
    $region12: #{attention_decoder.1} parent=1 // pred_region
      _
    $region13: #{attention_decoder.1} parent=1 // pred_fallthru
      _
    // Predicated region
    $region14: #{attention_decoder.1} parent=1 // pred_check
      _
    $region15: #{attention_decoder.1} parent=1 // pred_check_branch
      %41 = sbr.rel (0) target = $region17
    $region16: #{attention_decoder.1} parent=1 // pred_region
      _
    $region17: #{attention_decoder.1} parent=1 // pred_fallthru
      _
    // Predicated region
    $region18: #{attention_decoder.1} parent=1 // pred_check
      _
    $region19: #{attention_decoder.1} parent=1 // pred_check_branch
      %43 = sbr.rel (0) target = $region21
    $region20: #{attention_decoder.1} parent=1 // pred_region
      _
    $region21: #{attention_decoder.1} parent=1 // pred_fallthru
      _
    // Predicated region
    $region22: #{attention_decoder.1} parent=1 // pred_check
      _
    $region23: #{attention_decoder.1} parent=1 // pred_check_branch
      %45 = sbr.rel (0) target = $region25
    $region24: #{attention_decoder.1} parent=1 // pred_region
      _
    $region25: #{attention_decoder.1} parent=1 // pred_fallthru
      _
    // Predicated region
    $region26: #{attention_decoder.1} parent=1 // pred_check
      _
    $region27: #{attention_decoder.1} parent=1 // pred_check_branch
      %47 = sbr.rel (0) target = $region29
    $region28: #{attention_decoder.1} parent=1 // pred_region
      _
    $region29: #{attention_decoder.1} parent=1 // pred_fallthru
      _
    // Predicated region
    $region30: #{attention_decoder.1} parent=1 // pred_check
      _
    $region31: #{attention_decoder.1} parent=1 // pred_check_branch
      %49 = sbr.rel (0) target = $region33
    $region32: #{attention_decoder.1} parent=1 // pred_region
      %s51 = ssub.s32 20480, 20480
      %52 = vsyncadd [#allocation4], %s51
      %s53 = sshll.u32 [#allocation3], 4
      %s54 = int_to_ptr.vmem [resolvable:$true] %s53
      %59 = dma.hbm_to_vmem [thread:$0]  %s7, 20480, %s54, [#allocation4], 256, 256, 16
    $region33: #{attention_decoder.1} parent=1 // pred_fallthru
      _
    // Predicated region
    $region34: #{attention_decoder.1} parent=1 // pred_check
      _
    $region35: #{attention_decoder.1} parent=1 // pred_check_branch
      %61 = sbr.rel (0) target = $region37
    $region36: #{attention_decoder.1} parent=1 // pred_region
      _
    $region37: #{attention_decoder.1} parent=1 // pred_fallthru
      _
    // Predicated region
    $region38: #{attention_decoder.1} parent=1 // pred_check
      _
    $region39: #{attention_decoder.1} parent=1 // pred_check_branch
      %63 = sbr.rel (0) target = $region41
    $region40: #{attention_decoder.1} parent=1 // pred_region
      _
    $region41: #{attention_decoder.1} parent=1 // pred_fallthru
      _
    // Predicated region
    $region42: #{attention_decoder.1} parent=1 // pred_check
      _
    $region43: #{attention_decoder.1} parent=1 // pred_check_branch
      %65 = sbr.rel (0) target = $region45
    $region44: #{attention_decoder.1} parent=1 // pred_region
      %s67 = ssub.s32 1024, 1024
      %68 = vsyncadd [#allocation7], %s67
      %s69 = sshll.u32 [#allocation6], 4
      %s70 = int_to_ptr.vmem [resolvable:$true] %s69
      %75 = dma.hbm_to_vmem [thread:$0]  %s10, 1024, %s70, [#allocation7], 64, 64, 4
    $region45: #{attention_decoder.1} parent=1 // pred_fallthru
      _
    // Predicated region
    $region46: #{attention_decoder.1} parent=1 // pred_check
      _
    $region47: #{attention_decoder.1} parent=1 // pred_check_branch
      %77 = sbr.rel (0) target = $region49
    $region48: #{attention_decoder.1} parent=1 // pred_region
      %s79 = ssub.s32 16, 16
      %80 = vsyncadd [#allocation7], %s79
      %s82 = sshll.u32 [#allocation8], 4
      %s83 = int_to_ptr.vmem [resolvable:$true] %s82
      %85 = dma.hbm_to_vmem [thread:$0]  %s11, 16, %s83, [#allocation7]
    $region49: #{attention_decoder.1} parent=1 // pred_fallthru
      _
    // Predicated region
    $region50: #{attention_decoder.1} parent=1 // pred_check
      _
    $region51: #{attention_decoder.1} parent=1 // pred_check_branch
      %87 = sbr.rel (0) target = $region53
    $region52: #{attention_decoder.1} parent=1 // pred_region
      %s89 = ssub.s32 16, 16
      %90 = vsyncadd [#allocation10], %s89
      %s92 = sshll.u32 [#allocation9], 4
      %s93 = int_to_ptr.vmem [resolvable:$true] %s92
      %95 = dma.hbm_to_vmem [thread:$0]  %s12, 16, %s93, [#allocation10]
    $region53: #{attention_decoder.1} parent=1 // pred_fallthru
      _
    // Predicated region
    $region54: #{attention_decoder.1} parent=1 // pred_check
      _
    $region55: #{attention_decoder.1} parent=1 // pred_check_branch
      %97 = sbr.rel (0) target = $region57
    $region56: #{attention_decoder.1} parent=1 // pred_region
      %s99 = ssub.s32 16, 16
      %100 = vsyncadd [#allocation10], %s99
      %s102 = sshll.u32 [#allocation11], 4
      %s103 = int_to_ptr.vmem [resolvable:$true] %s102
      %105 = dma.hbm_to_vmem [thread:$0]  %s13, 16, %s103, [#allocation10]
    $region57: #{attention_decoder.1} parent=1 // pred_fallthru
      _
    // Predicated region
    $region58: #{attention_decoder.1} parent=1 // pred_check
      _
    $region59: #{attention_decoder.1} parent=1 // pred_check_branch
      %107 = sbr.rel (0) target = $region61
    $region60: #{attention_decoder.1} parent=1 // pred_region
      %s109 = ssub.s32 9216, 9216
      %110 = vsyncadd [#allocation13], %s109
      %s111 = sshll.u32 [#allocation12], 4
      %s112 = int_to_ptr.vmem [resolvable:$true] %s111
      %117 = dma.hbm_to_vmem [thread:$0]  %s14, 9216, %s112, [#allocation13], 576, 576, 36
    $region61: #{attention_decoder.1} parent=1 // pred_fallthru
      _
    // Predicated region
    $region62: #{attention_decoder.1} parent=1 // pred_check
      _
    $region63: #{attention_decoder.1} parent=1 // pred_check_branch
      %119 = sbr.rel (0) target = $region65
    $region64: #{attention_decoder.1} parent=1 // pred_region
      %s121 = ssub.s32 144, 144
      %122 = vsyncadd [#allocation13], %s121
      %s124 = sshll.u32 [#allocation14], 4
      %s125 = int_to_ptr.vmem [resolvable:$true] %s124
      %127 = dma.hbm_to_vmem [thread:$0]  %s15, 144, %s125, [#allocation13]
    $region65: #{attention_decoder.1} parent=1 // pred_fallthru
      _
    // Predicated region
    $region66: #{attention_decoder.1} parent=1 // pred_check
      _
    $region67: #{attention_decoder.1} parent=1 // pred_check_branch
      %129 = sbr.rel (0) target = $region69
    $region68: #{attention_decoder.1} parent=1 // pred_region
      _
    $region69: #{attention_decoder.1} parent=1 // pred_fallthru
      _
    // Predicated region
    $region70: #{attention_decoder.1} parent=1 // pred_check
      _
    $region71: #{attention_decoder.1} parent=1 // pred_check_branch
      %131 = sbr.rel (0) target = $region73
    $region72: #{attention_decoder.1} parent=1 // pred_region
      %s133 = ssub.s32 16, 16
      %134 = vsyncadd [#allocation16], %s133
      %s136 = sshll.u32 [#allocation15], 4
      %s137 = int_to_ptr.vmem [resolvable:$true] %s136
      %139 = dma.hbm_to_vmem [thread:$0]  %s17, 16, %s137, [#allocation16]
    $region73: #{attention_decoder.1} parent=1 // pred_fallthru
      _
    // Predicated region
    $region74: #{attention_decoder.1} parent=1 // pred_check
      _
    $region75: #{attention_decoder.1} parent=1 // pred_check_branch
      %141 = sbr.rel (0) target = $region77
    $region76: #{attention_decoder.1} parent=1 // pred_region
      _
    $region77: #{attention_decoder.1} parent=1 // pred_fallthru
      _
    // Predicated region
    $region78: #{attention_decoder.1} parent=1 // pred_check
      _
    $region79: #{attention_decoder.1} parent=1 // pred_check_branch
      %143 = sbr.rel (0) target = $region81
    $region80: #{attention_decoder.1} parent=1 // pred_region
      %144 = dma.done [#allocation4], 20480
    $region81: #{attention_decoder.1} parent=1 // pred_fallthru
      _
    // Predicated region
    $region82: #{attention_decoder.1} parent=1 // pred_check
      _
    $region83: #{attention_decoder.1} parent=1 // pred_check_branch
      %146 = sbr.rel (0) target = $region85
    $region84: #{attention_decoder.1} parent=1 // pred_region
      %147 = dma.done [#allocation7], 1024
    $region85: #{attention_decoder.1} parent=1 // pred_fallthru
      _
    // Predicated region
    $region86: #{attention_decoder.1} parent=1 // pred_check
      _
    $region87: #{attention_decoder.1} parent=1 // pred_check_branch
      %149 = sbr.rel (0) target = $region89
    $region88: #{attention_decoder.1} parent=1 // pred_region
      %150 = dma.done [#allocation7], 16
    $region89: #{attention_decoder.1} parent=1 // pred_fallthru
      _
    // Predicated region
    $region90: #{attention_decoder.1} parent=1 // pred_check
      _
    $region91: #{attention_decoder.1} parent=1 // pred_check_branch
      %152 = sbr.rel (0) target = $region93
    $region92: #{attention_decoder.1} parent=1 // pred_region
      %153 = dma.done [#allocation10], 16
    $region93: #{attention_decoder.1} parent=1 // pred_fallthru
      _
    // Predicated region
    $region94: #{attention_decoder.1} parent=1 // pred_check
      _
    $region95: #{attention_decoder.1} parent=1 // pred_check_branch
      %155 = sbr.rel (0) target = $region97
    $region96: #{attention_decoder.1} parent=1 // pred_region
      %156 = dma.done [#allocation10], 16
    $region97: #{attention_decoder.1} parent=1 // pred_fallthru
      _
    // Predicated region
    $region98: #{attention_decoder.1} parent=1 // pred_check
      _
    $region99: #{attention_decoder.1} parent=1 // pred_check_branch
      %158 = sbr.rel (0) target = $region101
    $region100: #{attention_decoder.1} parent=1 // pred_region
      %159 = dma.done [#allocation13], 9216
    $region101: #{attention_decoder.1} parent=1 // pred_fallthru
      _
    // Predicated region
    $region102: #{attention_decoder.1} parent=1 // pred_check
      _
    $region103: #{attention_decoder.1} parent=1 // pred_check_branch
      %161 = sbr.rel (0) target = $region105
    $region104: #{attention_decoder.1} parent=1 // pred_region
      %162 = dma.done [#allocation13], 144
    $region105: #{attention_decoder.1} parent=1 // pred_fallthru
      _
    // Predicated region
    $region106: #{attention_decoder.1} parent=1 // pred_check
      _
    $region107: #{attention_decoder.1} parent=1 // pred_check_branch
      %164 = sbr.rel (0) target = $region109
    $region108: #{attention_decoder.1} parent=1 // pred_region
      %165 = dma.done [#allocation16], 16
    $region109: #{attention_decoder.1} parent=1 // pred_fallthru
      _
    %v167 = vld [vmem:[%s0] sm:$0x7]
    %v168 = vld [vmem:[%s1] sm:$0x3]
    %v169 = vld [vmem:[%s2] sm:$0x3]
    %v170 = vld [vmem:[%s3] sm:$0x3]
    %v171 = vld [vmem:[%s4] sm:$0xf]
    %v172 = vld [vmem:[%s4 + $0x4] sm:$0xf]
    %v173 = vld [vmem:[%s5] sm:$0x3]
    %v174 = vld [vmem:[%s6] sm:$0x3]
    %v175 = vpack.c.bf16 %v168, %v168
    %v176 = vpack.c.bf16 %v169, %v169
    %v179 = vunpack.c.l.s4 1966171168
    %v180 = vunpack.c.0.s8 %v179
    %v181 = vlaneseq
    %v182 = vshrl.u32 %v181, 7
    %v183 = vsub.s32 %v180, %v182
    %v184 = vrot.slane %v167, %v183
    %v185 = vcombine.high %v184, %v184
    %v187 = vunpack.c.l.s4 1966171168
    %v188 = vunpack.c.0.s8 %v187
    %v189 = vlaneseq
    %v190 = vshrl.u32 %v189, 7
    %v191 = vsub.s32 %v188, %v190
    %v192 = vrot.slane %v184, %v191
    %v194 = vunpack.c.l.s4 1966171168
    %v195 = vunpack.c.0.s8 %v194
    %v196 = vlaneseq
    %v197 = vshrl.u32 %v196, 7
    %v198 = vsub.s32 %v195, %v197
    %v199 = vrot.slane %v185, %v198
    %v200 = vcombine.high %v192, %v192
    %v204 = vld [vmem:[#allocation3] sm:$0xff]
    %v205 = vld [vmem:[#allocation3 + $0x8] sm:$0xff]
    %v206 = vld [vmem:[#allocation3 + $0x10] sm:$0xff]
    %v207 = vld [vmem:[#allocation3 + $0x18] sm:$0xff]
    %v208 = vld [vmem:[#allocation3 + $0x20] sm:$0xff]
    %v209 = vld [vmem:[#allocation3 + $0x28] sm:$0xff]
    %v210 = vld [vmem:[#allocation3 + $0x30] sm:$0xff]
    %v211 = vld [vmem:[#allocation3 + $0x38] sm:$0xff]
    %v212 = vld [vmem:[#allocation3 + $0x40] sm:$0xff]
    %v213 = vld [vmem:[#allocation3 + $0x48] sm:$0xff]
    %v214 = vld [vmem:[#allocation3 + $0x50] sm:$0xff]
    %v215 = vld [vmem:[#allocation3 + $0x58] sm:$0xff]
    %v216 = vld [vmem:[#allocation3 + $0x60] sm:$0xff]
    %v217 = vld [vmem:[#allocation3 + $0x68] sm:$0xff]
    %v218 = vld [vmem:[#allocation3 + $0x70] sm:$0xff]
    %v219 = vld [vmem:[#allocation3 + $0x78] sm:$0xff]
    %v220 = vld [vmem:[#allocation3 + $0x80] sm:$0xff]
    %v221 = vld [vmem:[#allocation3 + $0x88] sm:$0xff]
    %v222 = vld [vmem:[#allocation3 + $0x90] sm:$0xff]
    %v223 = vld [vmem:[#allocation3 + $0x98] sm:$0xff]
    %v224 = vld [vmem:[#allocation3 + $0xa0] sm:$0xff]
    %v225 = vld [vmem:[#allocation3 + $0xa8] sm:$0xff]
    %v226 = vld [vmem:[#allocation3 + $0xb0] sm:$0xff]
    %v227 = vld [vmem:[#allocation3 + $0xb8] sm:$0xff]
    %v228 = vld [vmem:[#allocation3 + $0xc0] sm:$0xff]
    %v229 = vld [vmem:[#allocation3 + $0xc8] sm:$0xff]
    %v230 = vld [vmem:[#allocation3 + $0xd0] sm:$0xff]
    %v231 = vld [vmem:[#allocation3 + $0xd8] sm:$0xff]
    %v232 = vld [vmem:[#allocation3 + $0xe0] sm:$0xff]
    %v233 = vld [vmem:[#allocation3 + $0xe8] sm:$0xff]
    %v234 = vld [vmem:[#allocation3 + $0xf0] sm:$0xff]
    %v235 = vld [vmem:[#allocation3 + $0xf8] sm:$0xff]
    %v236 = vld [vmem:[#allocation3 + $0x100] sm:$0xff]
    %v237 = vld [vmem:[#allocation3 + $0x108] sm:$0xff]
    %v238 = vld [vmem:[#allocation3 + $0x110] sm:$0xff]
    %v239 = vld [vmem:[#allocation3 + $0x118] sm:$0xff]
    %v240 = vld [vmem:[#allocation3 + $0x120] sm:$0xff]
    %v241 = vld [vmem:[#allocation3 + $0x128] sm:$0xff]
    %v242 = vld [vmem:[#allocation3 + $0x130] sm:$0xff]
    %v243 = vld [vmem:[#allocation3 + $0x138] sm:$0xff]
    %v244 = vld [vmem:[#allocation3 + $0x140] sm:$0xff]
    %v245 = vld [vmem:[#allocation3 + $0x148] sm:$0xff]
    %v246 = vld [vmem:[#allocation3 + $0x150] sm:$0xff]
    %v247 = vld [vmem:[#allocation3 + $0x158] sm:$0xff]
    %v248 = vld [vmem:[#allocation3 + $0x160] sm:$0xff]
    %v249 = vld [vmem:[#allocation3 + $0x168] sm:$0xff]
    %v250 = vld [vmem:[#allocation3 + $0x170] sm:$0xff]
    %v251 = vld [vmem:[#allocation3 + $0x178] sm:$0xff]
    %v252 = vld [vmem:[#allocation3 + $0x180] sm:$0xff]
    %v253 = vld [vmem:[#allocation3 + $0x188] sm:$0xff]
    %v254 = vld [vmem:[#allocation3 + $0x190] sm:$0xff]
    %v255 = vld [vmem:[#allocation3 + $0x198] sm:$0xff]
    %v256 = vld [vmem:[#allocation3 + $0x1a0] sm:$0xff]
    %v257 = vld [vmem:[#allocation3 + $0x1a8] sm:$0xff]
    %v258 = vld [vmem:[#allocation3 + $0x1b0] sm:$0xff]
    %v259 = vld [vmem:[#allocation3 + $0x1b8] sm:$0xff]
    %v260 = vld [vmem:[#allocation3 + $0x1c0] sm:$0xff]
    %v261 = vld [vmem:[#allocation3 + $0x1c8] sm:$0xff]
    %v262 = vld [vmem:[#allocation3 + $0x1d0] sm:$0xff]
    %v263 = vld [vmem:[#allocation3 + $0x1d8] sm:$0xff]
    %v264 = vld [vmem:[#allocation3 + $0x1e0] sm:$0xff]
    %v265 = vld [vmem:[#allocation3 + $0x1e8] sm:$0xff]
    %v266 = vld [vmem:[#allocation3 + $0x1f0] sm:$0xff]
    %v267 = vld [vmem:[#allocation3 + $0x1f8] sm:$0xff]
    %v268 = vld [vmem:[#allocation3 + $0x200] sm:$0xff]
    %v269 = vld [vmem:[#allocation3 + $0x208] sm:$0xff]
    %v270 = vld [vmem:[#allocation3 + $0x210] sm:$0xff]
    %v271 = vld [vmem:[#allocation3 + $0x218] sm:$0xff]
    %v272 = vld [vmem:[#allocation3 + $0x220] sm:$0xff]
    %v273 = vld [vmem:[#allocation3 + $0x228] sm:$0xff]
    %v274 = vld [vmem:[#allocation3 + $0x230] sm:$0xff]
    %v275 = vld [vmem:[#allocation3 + $0x238] sm:$0xff]
    %v276 = vld [vmem:[#allocation3 + $0x240] sm:$0xff]
    %v277 = vld [vmem:[#allocation3 + $0x248] sm:$0xff]
    %v278 = vld [vmem:[#allocation3 + $0x250] sm:$0xff]
    %v279 = vld [vmem:[#allocation3 + $0x258] sm:$0xff]
    %v280 = vld [vmem:[#allocation3 + $0x260] sm:$0xff]
    %v281 = vld [vmem:[#allocation3 + $0x268] sm:$0xff]
    %v282 = vld [vmem:[#allocation3 + $0x270] sm:$0xff]
    %v283 = vld [vmem:[#allocation3 + $0x278] sm:$0xff]
    %v284 = vld [vmem:[#allocation3 + $0x280] sm:$0xff]
    %v285 = vld [vmem:[#allocation3 + $0x288] sm:$0xff]
    %v286 = vld [vmem:[#allocation3 + $0x290] sm:$0xff]
    %v287 = vld [vmem:[#allocation3 + $0x298] sm:$0xff]
    %v288 = vld [vmem:[#allocation3 + $0x2a0] sm:$0xff]
    %v289 = vld [vmem:[#allocation3 + $0x2a8] sm:$0xff]
    %v290 = vld [vmem:[#allocation3 + $0x2b0] sm:$0xff]
    %v291 = vld [vmem:[#allocation3 + $0x2b8] sm:$0xff]
    %v292 = vld [vmem:[#allocation3 + $0x2c0] sm:$0xff]
    %v293 = vld [vmem:[#allocation3 + $0x2c8] sm:$0xff]
    %v294 = vld [vmem:[#allocation3 + $0x2d0] sm:$0xff]
    %v295 = vld [vmem:[#allocation3 + $0x2d8] sm:$0xff]
    %v296 = vld [vmem:[#allocation3 + $0x2e0] sm:$0xff]
    %v297 = vld [vmem:[#allocation3 + $0x2e8] sm:$0xff]
    %v298 = vld [vmem:[#allocation3 + $0x2f0] sm:$0xff]
    %v299 = vld [vmem:[#allocation3 + $0x2f8] sm:$0xff]
    %v300 = vld [vmem:[#allocation3 + $0x300] sm:$0xff]
    %v301 = vld [vmem:[#allocation3 + $0x308] sm:$0xff]
    %v302 = vld [vmem:[#allocation3 + $0x310] sm:$0xff]
    %v303 = vld [vmem:[#allocation3 + $0x318] sm:$0xff]
    %v304 = vld [vmem:[#allocation3 + $0x320] sm:$0xff]
    %v305 = vld [vmem:[#allocation3 + $0x328] sm:$0xff]
    %v306 = vld [vmem:[#allocation3 + $0x330] sm:$0xff]
    %v307 = vld [vmem:[#allocation3 + $0x338] sm:$0xff]
    %v308 = vld [vmem:[#allocation3 + $0x340] sm:$0xff]
    %v309 = vld [vmem:[#allocation3 + $0x348] sm:$0xff]
    %v310 = vld [vmem:[#allocation3 + $0x350] sm:$0xff]
    %v311 = vld [vmem:[#allocation3 + $0x358] sm:$0xff]
    %v312 = vld [vmem:[#allocation3 + $0x360] sm:$0xff]
    %v313 = vld [vmem:[#allocation3 + $0x368] sm:$0xff]
    %v314 = vld [vmem:[#allocation3 + $0x370] sm:$0xff]
    %v315 = vld [vmem:[#allocation3 + $0x378] sm:$0xff]
    %v316 = vld [vmem:[#allocation3 + $0x380] sm:$0xff]
    %v317 = vld [vmem:[#allocation3 + $0x388] sm:$0xff]
    %v318 = vld [vmem:[#allocation3 + $0x390] sm:$0xff]
    %v319 = vld [vmem:[#allocation3 + $0x398] sm:$0xff]
    %v320 = vld [vmem:[#allocation3 + $0x3a0] sm:$0xff]
    %v321 = vld [vmem:[#allocation3 + $0x3a8] sm:$0xff]
    %v322 = vld [vmem:[#allocation3 + $0x3b0] sm:$0xff]
    %v323 = vld [vmem:[#allocation3 + $0x3b8] sm:$0xff]
    %v324 = vld [vmem:[#allocation3 + $0x3c0] sm:$0xff]
    %v325 = vld [vmem:[#allocation3 + $0x3c8] sm:$0xff]
    %v326 = vld [vmem:[#allocation3 + $0x3d0] sm:$0xff]
    %v327 = vld [vmem:[#allocation3 + $0x3d8] sm:$0xff]
    %v328 = vld [vmem:[#allocation3 + $0x3e0] sm:$0xff]
    %v329 = vld [vmem:[#allocation3 + $0x3e8] sm:$0xff]
    %v330 = vld [vmem:[#allocation3 + $0x3f0] sm:$0xff]
    %v331 = vld [vmem:[#allocation3 + $0x3f8] sm:$0xff]
    %v332 = vld [vmem:[#allocation3 + $0x400] sm:$0xff]
    %v333 = vld [vmem:[#allocation3 + $0x408] sm:$0xff]
    %v334 = vld [vmem:[#allocation3 + $0x410] sm:$0xff]
    %v335 = vld [vmem:[#allocation3 + $0x418] sm:$0xff]
    %v336 = vld [vmem:[#allocation3 + $0x420] sm:$0xff]
    %v337 = vld [vmem:[#allocation3 + $0x428] sm:$0xff]
    %v338 = vld [vmem:[#allocation3 + $0x430] sm:$0xff]
    %v339 = vld [vmem:[#allocation3 + $0x438] sm:$0xff]
    %v340 = vld [vmem:[#allocation3 + $0x440] sm:$0xff]
    %v341 = vld [vmem:[#allocation3 + $0x448] sm:$0xff]
    %v342 = vld [vmem:[#allocation3 + $0x450] sm:$0xff]
    %v343 = vld [vmem:[#allocation3 + $0x458] sm:$0xff]
    %v344 = vld [vmem:[#allocation3 + $0x460] sm:$0xff]
    %v345 = vld [vmem:[#allocation3 + $0x468] sm:$0xff]
    %v346 = vld [vmem:[#allocation3 + $0x470] sm:$0xff]
    %v347 = vld [vmem:[#allocation3 + $0x478] sm:$0xff]
    %v348 = vld [vmem:[#allocation3 + $0x480] sm:$0xff]
    %v349 = vld [vmem:[#allocation3 + $0x488] sm:$0xff]
    %v350 = vld [vmem:[#allocation3 + $0x490] sm:$0xff]
    %v351 = vld [vmem:[#allocation3 + $0x498] sm:$0xff]
    %v352 = vld [vmem:[#allocation3 + $0x4a0] sm:$0xff]
    %v353 = vld [vmem:[#allocation3 + $0x4a8] sm:$0xff]
    %v354 = vld [vmem:[#allocation3 + $0x4b0] sm:$0xff]
    %v355 = vld [vmem:[#allocation3 + $0x4b8] sm:$0xff]
    %v356 = vld [vmem:[#allocation3 + $0x4c0] sm:$0xff]
    %v357 = vld [vmem:[#allocation3 + $0x4c8] sm:$0xff]
    %v358 = vld [vmem:[#allocation3 + $0x4d0] sm:$0xff]
    %v359 = vld [vmem:[#allocation3 + $0x4d8] sm:$0xff]
    %v360 = vld [vmem:[#allocation3 + $0x4e0] sm:$0xff]
    %v361 = vld [vmem:[#allocation3 + $0x4e8] sm:$0xff]
    %v362 = vld [vmem:[#allocation3 + $0x4f0] sm:$0xff]
    %v363 = vld [vmem:[#allocation3 + $0x4f8] sm:$0xff]
    %v364 = vld [vmem:[%s8] sm:$0xf]
    %v366 = vlaneseq
    %v367 = vshrl.u32 %v366, 7
    %v368 = vsub.s32 0, %v367
    %v369 = vrot.slane %v364, %v368
    %v370 = vlaneseq
    %v371 = vshrl.u32 %v370, 7
    %v372 = vsub.s32 1, %v371
    %v373 = vrot.slane %v364, %v372
    %v374 = vlaneseq
    %v375 = vshrl.u32 %v374, 7
    %v376 = vsub.s32 2, %v375
    %v377 = vrot.slane %v364, %v376
    %v378 = vlaneseq
    %v379 = vshrl.u32 %v378, 7
    %v380 = vsub.s32 3, %v379
    %v381 = vrot.slane %v364, %v380
    %v546 = vunpack.c.l.b16 %v204
    %v547 = vunpack.c.h.b16 %v204
    %v548 = vunpack.c.l.b16 %v205
    %v549 = vunpack.c.h.b16 %v205
    %v550 = vunpack.c.l.b16 %v206
    %v551 = vunpack.c.h.b16 %v206
    %v552 = vunpack.c.l.b16 %v207
    %v553 = vunpack.c.h.b16 %v207
    %v554 = vunpack.c.l.b16 %v208
    %v555 = vunpack.c.h.b16 %v208
    %v556 = vunpack.c.l.b16 %v209
    %v557 = vunpack.c.h.b16 %v209
    %v558 = vunpack.c.l.b16 %v210
    %v559 = vunpack.c.h.b16 %v210
    %v560 = vunpack.c.l.b16 %v211
    %v561 = vunpack.c.h.b16 %v211
    %v562 = vunpack.c.l.b16 %v212
    %v563 = vunpack.c.h.b16 %v212
    %v564 = vunpack.c.l.b16 %v213
    %v565 = vunpack.c.h.b16 %v213
    %v566 = vunpack.c.l.b16 %v214
    %v567 = vunpack.c.h.b16 %v214
    %v568 = vunpack.c.l.b16 %v215
    %v569 = vunpack.c.h.b16 %v215
    %v570 = vunpack.c.l.b16 %v216
    %v571 = vunpack.c.h.b16 %v216
    %v572 = vunpack.c.l.b16 %v217
    %v573 = vunpack.c.h.b16 %v217
    %v574 = vunpack.c.l.b16 %v218
    %v575 = vunpack.c.h.b16 %v218
    %v576 = vunpack.c.l.b16 %v219
    %v577 = vunpack.c.h.b16 %v219
    %v578 = vunpack.c.l.b16 %v220
    %v579 = vunpack.c.h.b16 %v220
    %v580 = vunpack.c.l.b16 %v221
    %v581 = vunpack.c.h.b16 %v221
    %v582 = vunpack.c.l.b16 %v222
    %v583 = vunpack.c.h.b16 %v222
    %v584 = vunpack.c.l.b16 %v223
    %v585 = vunpack.c.h.b16 %v223
    %v586 = vunpack.c.l.b16 %v224
    %v587 = vunpack.c.h.b16 %v224
    %v588 = vunpack.c.l.b16 %v225
    %v589 = vunpack.c.h.b16 %v225
    %v590 = vunpack.c.l.b16 %v226
    %v591 = vunpack.c.h.b16 %v226
    %v592 = vunpack.c.l.b16 %v227
    %v593 = vunpack.c.h.b16 %v227
    %v594 = vunpack.c.l.b16 %v228
    %v595 = vunpack.c.h.b16 %v228
    %v596 = vunpack.c.l.b16 %v229
    %v597 = vunpack.c.h.b16 %v229
    %v598 = vunpack.c.l.b16 %v230
    %v599 = vunpack.c.h.b16 %v230
    %v600 = vunpack.c.l.b16 %v231
    %v601 = vunpack.c.h.b16 %v231
    %v602 = vunpack.c.l.b16 %v232
    %v603 = vunpack.c.h.b16 %v232
    %v604 = vunpack.c.l.b16 %v233
    %v605 = vunpack.c.h.b16 %v233
    %v606 = vunpack.c.l.b16 %v234
    %v607 = vunpack.c.h.b16 %v234
    %v608 = vunpack.c.l.b16 %v235
    %v609 = vunpack.c.h.b16 %v235
    %v610 = vunpack.c.l.b16 %v236
    %v611 = vunpack.c.h.b16 %v236
    %v612 = vunpack.c.l.b16 %v237
    %v613 = vunpack.c.h.b16 %v237
    %v614 = vunpack.c.l.b16 %v238
    %v615 = vunpack.c.h.b16 %v238
    %v616 = vunpack.c.l.b16 %v239
    %v617 = vunpack.c.h.b16 %v239
    %v618 = vunpack.c.l.b16 %v240
    %v619 = vunpack.c.h.b16 %v240
    %v620 = vunpack.c.l.b16 %v241
    %v621 = vunpack.c.h.b16 %v241
    %v622 = vunpack.c.l.b16 %v242
    %v623 = vunpack.c.h.b16 %v242
    %v624 = vunpack.c.l.b16 %v243
    %v625 = vunpack.c.h.b16 %v243
    %v626 = vunpack.c.l.b16 %v244
    %v627 = vunpack.c.h.b16 %v244
    %v628 = vunpack.c.l.b16 %v245
    %v629 = vunpack.c.h.b16 %v245
    %v630 = vunpack.c.l.b16 %v246
    %v631 = vunpack.c.h.b16 %v246
    %v632 = vunpack.c.l.b16 %v247
    %v633 = vunpack.c.h.b16 %v247
    %v634 = vunpack.c.l.b16 %v248
    %v635 = vunpack.c.h.b16 %v248
    %v636 = vunpack.c.l.b16 %v249
    %v637 = vunpack.c.h.b16 %v249
    %v638 = vunpack.c.l.b16 %v250
    %v639 = vunpack.c.h.b16 %v250
    %v640 = vunpack.c.l.b16 %v251
    %v641 = vunpack.c.h.b16 %v251
    %v642 = vunpack.c.l.b16 %v252
    %v643 = vunpack.c.h.b16 %v252
    %v644 = vunpack.c.l.b16 %v253
    %v645 = vunpack.c.h.b16 %v253
    %v646 = vunpack.c.l.b16 %v254
    %v647 = vunpack.c.h.b16 %v254
    %v648 = vunpack.c.l.b16 %v255
    %v649 = vunpack.c.h.b16 %v255
    %v650 = vunpack.c.l.b16 %v256
    %v651 = vunpack.c.h.b16 %v256
    %v652 = vunpack.c.l.b16 %v257
    %v653 = vunpack.c.h.b16 %v257
    %v654 = vunpack.c.l.b16 %v258
    %v655 = vunpack.c.h.b16 %v258
    %v656 = vunpack.c.l.b16 %v259
    %v657 = vunpack.c.h.b16 %v259
    %v658 = vunpack.c.l.b16 %v260
    %v659 = vunpack.c.h.b16 %v260
    %v660 = vunpack.c.l.b16 %v261
    %v661 = vunpack.c.h.b16 %v261
    %v662 = vunpack.c.l.b16 %v262
    %v663 = vunpack.c.h.b16 %v262
    %v664 = vunpack.c.l.b16 %v263
    %v665 = vunpack.c.h.b16 %v263
    %v666 = vunpack.c.l.b16 %v264
    %v667 = vunpack.c.h.b16 %v264
    %v668 = vunpack.c.l.b16 %v265
    %v669 = vunpack.c.h.b16 %v265
    %v670 = vunpack.c.l.b16 %v266
    %v671 = vunpack.c.h.b16 %v266
    %v672 = vunpack.c.l.b16 %v267
    %v673 = vunpack.c.h.b16 %v267
    %v674 = vunpack.c.l.b16 %v268
    %v675 = vunpack.c.h.b16 %v268
    %v676 = vunpack.c.l.b16 %v269
    %v677 = vunpack.c.h.b16 %v269
    %v678 = vunpack.c.l.b16 %v270
    %v679 = vunpack.c.h.b16 %v270
    %v680 = vunpack.c.l.b16 %v271
    %v681 = vunpack.c.h.b16 %v271
    %v682 = vunpack.c.l.b16 %v272
    %v683 = vunpack.c.h.b16 %v272
    %v684 = vunpack.c.l.b16 %v273
    %v685 = vunpack.c.h.b16 %v273
    %v686 = vunpack.c.l.b16 %v274
    %v687 = vunpack.c.h.b16 %v274
    %v688 = vunpack.c.l.b16 %v275
    %v689 = vunpack.c.h.b16 %v275
    %v690 = vunpack.c.l.b16 %v276
    %v691 = vunpack.c.h.b16 %v276
    %v692 = vunpack.c.l.b16 %v277
    %v693 = vunpack.c.h.b16 %v277
    %v694 = vunpack.c.l.b16 %v278
    %v695 = vunpack.c.h.b16 %v278
    %v696 = vunpack.c.l.b16 %v279
    %v697 = vunpack.c.h.b16 %v279
    %v698 = vunpack.c.l.b16 %v280
    %v699 = vunpack.c.h.b16 %v280
    %v700 = vunpack.c.l.b16 %v281
    %v701 = vunpack.c.h.b16 %v281
    %v702 = vunpack.c.l.b16 %v282
    %v703 = vunpack.c.h.b16 %v282
    %v704 = vunpack.c.l.b16 %v283
    %v705 = vunpack.c.h.b16 %v283
    %v706 = vunpack.c.l.b16 %v284
    %v707 = vunpack.c.h.b16 %v284
    %v708 = vunpack.c.l.b16 %v285
    %v709 = vunpack.c.h.b16 %v285
    %v710 = vunpack.c.l.b16 %v286
    %v711 = vunpack.c.h.b16 %v286
    %v712 = vunpack.c.l.b16 %v287
    %v713 = vunpack.c.h.b16 %v287
    %v714 = vunpack.c.l.b16 %v288
    %v715 = vunpack.c.h.b16 %v288
    %v716 = vunpack.c.l.b16 %v289
    %v717 = vunpack.c.h.b16 %v289
    %v718 = vunpack.c.l.b16 %v290
    %v719 = vunpack.c.h.b16 %v290
    %v720 = vunpack.c.l.b16 %v291
    %v721 = vunpack.c.h.b16 %v291
    %v722 = vunpack.c.l.b16 %v292
    %v723 = vunpack.c.h.b16 %v292
    %v724 = vunpack.c.l.b16 %v293
    %v725 = vunpack.c.h.b16 %v293
    %v726 = vunpack.c.l.b16 %v294
    %v727 = vunpack.c.h.b16 %v294
    %v728 = vunpack.c.l.b16 %v295
    %v729 = vunpack.c.h.b16 %v295
    %v730 = vunpack.c.l.b16 %v296
    %v731 = vunpack.c.h.b16 %v296
    %v732 = vunpack.c.l.b16 %v297
    %v733 = vunpack.c.h.b16 %v297
    %v734 = vunpack.c.l.b16 %v298
    %v735 = vunpack.c.h.b16 %v298
    %v736 = vunpack.c.l.b16 %v299
    %v737 = vunpack.c.h.b16 %v299
    %v738 = vunpack.c.l.b16 %v300
    %v739 = vunpack.c.h.b16 %v300
    %v740 = vunpack.c.l.b16 %v301
    %v741 = vunpack.c.h.b16 %v301
    %v742 = vunpack.c.l.b16 %v302
    %v743 = vunpack.c.h.b16 %v302
    %v744 = vunpack.c.l.b16 %v303
    %v745 = vunpack.c.h.b16 %v303
    %v746 = vunpack.c.l.b16 %v304
    %v747 = vunpack.c.h.b16 %v304
    %v748 = vunpack.c.l.b16 %v305
    %v749 = vunpack.c.h.b16 %v305
    %v750 = vunpack.c.l.b16 %v306
    %v751 = vunpack.c.h.b16 %v306
    %v752 = vunpack.c.l.b16 %v307
    %v753 = vunpack.c.h.b16 %v307
    %v754 = vunpack.c.l.b16 %v308
    %v755 = vunpack.c.h.b16 %v308
    %v756 = vunpack.c.l.b16 %v309
    %v757 = vunpack.c.h.b16 %v309
    %v758 = vunpack.c.l.b16 %v310
    %v759 = vunpack.c.h.b16 %v310
    %v760 = vunpack.c.l.b16 %v311
    %v761 = vunpack.c.h.b16 %v311
    %v762 = vunpack.c.l.b16 %v312
    %v763 = vunpack.c.h.b16 %v312
    %v764 = vunpack.c.l.b16 %v313
    %v765 = vunpack.c.h.b16 %v313
    %v766 = vunpack.c.l.b16 %v314
    %v767 = vunpack.c.h.b16 %v314
    %v768 = vunpack.c.l.b16 %v315
    %v769 = vunpack.c.h.b16 %v315
    %v770 = vunpack.c.l.b16 %v316
    %v771 = vunpack.c.h.b16 %v316
    %v772 = vunpack.c.l.b16 %v317
    %v773 = vunpack.c.h.b16 %v317
    %v774 = vunpack.c.l.b16 %v318
    %v775 = vunpack.c.h.b16 %v318
    %v776 = vunpack.c.l.b16 %v319
    %v777 = vunpack.c.h.b16 %v319
    %v778 = vunpack.c.l.b16 %v320
    %v779 = vunpack.c.h.b16 %v320
    %v780 = vunpack.c.l.b16 %v321
    %v781 = vunpack.c.h.b16 %v321
    %v782 = vunpack.c.l.b16 %v322
    %v783 = vunpack.c.h.b16 %v322
    %v784 = vunpack.c.l.b16 %v323
    %v785 = vunpack.c.h.b16 %v323
    %v786 = vunpack.c.l.b16 %v324
    %v787 = vunpack.c.h.b16 %v324
    %v788 = vunpack.c.l.b16 %v325
    %v789 = vunpack.c.h.b16 %v325
    %v790 = vunpack.c.l.b16 %v326
    %v791 = vunpack.c.h.b16 %v326
    %v792 = vunpack.c.l.b16 %v327
    %v793 = vunpack.c.h.b16 %v327
    %v794 = vunpack.c.l.b16 %v328
    %v795 = vunpack.c.h.b16 %v328
    %v796 = vunpack.c.l.b16 %v329
    %v797 = vunpack.c.h.b16 %v329
    %v798 = vunpack.c.l.b16 %v330
    %v799 = vunpack.c.h.b16 %v330
    %v800 = vunpack.c.l.b16 %v331
    %v801 = vunpack.c.h.b16 %v331
    %v802 = vunpack.c.l.b16 %v332
    %v803 = vunpack.c.h.b16 %v332
    %v804 = vunpack.c.l.b16 %v333
    %v805 = vunpack.c.h.b16 %v333
    %v806 = vunpack.c.l.b16 %v334
    %v807 = vunpack.c.h.b16 %v334
    %v808 = vunpack.c.l.b16 %v335
    %v809 = vunpack.c.h.b16 %v335
    %v810 = vunpack.c.l.b16 %v336
    %v811 = vunpack.c.h.b16 %v336
    %v812 = vunpack.c.l.b16 %v337
    %v813 = vunpack.c.h.b16 %v337
    %v814 = vunpack.c.l.b16 %v338
    %v815 = vunpack.c.h.b16 %v338
    %v816 = vunpack.c.l.b16 %v339
    %v817 = vunpack.c.h.b16 %v339
    %v818 = vunpack.c.l.b16 %v340
    %v819 = vunpack.c.h.b16 %v340
    %v820 = vunpack.c.l.b16 %v341
    %v821 = vunpack.c.h.b16 %v341
    %v822 = vunpack.c.l.b16 %v342
    %v823 = vunpack.c.h.b16 %v342
    %v824 = vunpack.c.l.b16 %v343
    %v825 = vunpack.c.h.b16 %v343
    %v826 = vunpack.c.l.b16 %v344
    %v827 = vunpack.c.h.b16 %v344
    %v828 = vunpack.c.l.b16 %v345
    %v829 = vunpack.c.h.b16 %v345
    %v830 = vunpack.c.l.b16 %v346
    %v831 = vunpack.c.h.b16 %v346
    %v832 = vunpack.c.l.b16 %v347
    %v833 = vunpack.c.h.b16 %v347
    %v834 = vunpack.c.l.b16 %v348
    %v835 = vunpack.c.h.b16 %v348
    %v836 = vunpack.c.l.b16 %v349
    %v837 = vunpack.c.h.b16 %v349
    %v838 = vunpack.c.l.b16 %v350
    %v839 = vunpack.c.h.b16 %v350
    %v840 = vunpack.c.l.b16 %v351
    %v841 = vunpack.c.h.b16 %v351
    %v842 = vunpack.c.l.b16 %v352
    %v843 = vunpack.c.h.b16 %v352
    %v844 = vunpack.c.l.b16 %v353
    %v845 = vunpack.c.h.b16 %v353
    %v846 = vunpack.c.l.b16 %v354
    %v847 = vunpack.c.h.b16 %v354
    %v848 = vunpack.c.l.b16 %v355
    %v849 = vunpack.c.h.b16 %v355
    %v850 = vunpack.c.l.b16 %v356
    %v851 = vunpack.c.h.b16 %v356
    %v852 = vunpack.c.l.b16 %v357
    %v853 = vunpack.c.h.b16 %v357
    %v854 = vunpack.c.l.b16 %v358
    %v855 = vunpack.c.h.b16 %v358
    %v856 = vunpack.c.l.b16 %v359
    %v857 = vunpack.c.h.b16 %v359
    %v858 = vunpack.c.l.b16 %v360
    %v859 = vunpack.c.h.b16 %v360
    %v860 = vunpack.c.l.b16 %v361
    %v861 = vunpack.c.h.b16 %v361
    %v862 = vunpack.c.l.b16 %v362
    %v863 = vunpack.c.h.b16 %v362
    %v864 = vunpack.c.l.b16 %v363
    %v865 = vunpack.c.h.b16 %v363
    %v866 = vpack.c.b16 %v550, %v546
    %v867 = vpack.c.b16 %v551, %v547
    %v868 = vpack.c.b16 %v552, %v548
    %v869 = vpack.c.b16 %v553, %v549
    %v870 = vpack.c.b16 %v558, %v554
    %v871 = vpack.c.b16 %v559, %v555
    %v872 = vpack.c.b16 %v560, %v556
    %v873 = vpack.c.b16 %v561, %v557
    %v874 = vpack.c.b16 %v566, %v562
    %v875 = vpack.c.b16 %v567, %v563
    %v876 = vpack.c.b16 %v568, %v564
    %v877 = vpack.c.b16 %v569, %v565
    %v878 = vpack.c.b16 %v574, %v570
    %v879 = vpack.c.b16 %v575, %v571
    %v880 = vpack.c.b16 %v576, %v572
    %v881 = vpack.c.b16 %v577, %v573
    %v882 = vpack.c.b16 %v582, %v578
    %v883 = vpack.c.b16 %v583, %v579
    %v884 = vpack.c.b16 %v584, %v580
    %v885 = vpack.c.b16 %v585, %v581
    %v886 = vpack.c.b16 %v590, %v586
    %v887 = vpack.c.b16 %v591, %v587
    %v888 = vpack.c.b16 %v592, %v588
    %v889 = vpack.c.b16 %v593, %v589
    %v890 = vpack.c.b16 %v598, %v594
    %v891 = vpack.c.b16 %v599, %v595
    %v892 = vpack.c.b16 %v600, %v596
    %v893 = vpack.c.b16 %v601, %v597
    %v894 = vpack.c.b16 %v606, %v602
    %v895 = vpack.c.b16 %v607, %v603
    %v896 = vpack.c.b16 %v608, %v604
    %v897 = vpack.c.b16 %v609, %v605
    %v898 = vpack.c.b16 %v614, %v610
    %v899 = vpack.c.b16 %v615, %v611
    %v900 = vpack.c.b16 %v616, %v612
    %v901 = vpack.c.b16 %v617, %v613
    %v902 = vpack.c.b16 %v622, %v618
    %v903 = vpack.c.b16 %v623, %v619
    %v904 = vpack.c.b16 %v624, %v620
    %v905 = vpack.c.b16 %v625, %v621
    %v906 = vpack.c.b16 %v630, %v626
    %v907 = vpack.c.b16 %v631, %v627
    %v908 = vpack.c.b16 %v632, %v628
    %v909 = vpack.c.b16 %v633, %v629
    %v910 = vpack.c.b16 %v638, %v634
    %v911 = vpack.c.b16 %v639, %v635
    %v912 = vpack.c.b16 %v640, %v636
    %v913 = vpack.c.b16 %v641, %v637
    %v914 = vpack.c.b16 %v646, %v642
    %v915 = vpack.c.b16 %v647, %v643
    %v916 = vpack.c.b16 %v648, %v644
    %v917 = vpack.c.b16 %v649, %v645
    %v918 = vpack.c.b16 %v654, %v650
    %v919 = vpack.c.b16 %v655, %v651
    %v920 = vpack.c.b16 %v656, %v652
    %v921 = vpack.c.b16 %v657, %v653
    %v922 = vpack.c.b16 %v662, %v658
    %v923 = vpack.c.b16 %v663, %v659
    %v924 = vpack.c.b16 %v664, %v660
    %v925 = vpack.c.b16 %v665, %v661
    %v926 = vpack.c.b16 %v670, %v666
    %v927 = vpack.c.b16 %v671, %v667
    %v928 = vpack.c.b16 %v672, %v668
    %v929 = vpack.c.b16 %v673, %v669
    %v930 = vpack.c.b16 %v678, %v674
    %v931 = vpack.c.b16 %v679, %v675
    %v932 = vpack.c.b16 %v680, %v676
    %v933 = vpack.c.b16 %v681, %v677
    %v934 = vpack.c.b16 %v686, %v682
    %v935 = vpack.c.b16 %v687, %v683
    %v936 = vpack.c.b16 %v688, %v684
    %v937 = vpack.c.b16 %v689, %v685
    %v938 = vpack.c.b16 %v694, %v690
    %v939 = vpack.c.b16 %v695, %v691
    %v940 = vpack.c.b16 %v696, %v692
    %v941 = vpack.c.b16 %v697, %v693
    %v942 = vpack.c.b16 %v702, %v698
    %v943 = vpack.c.b16 %v703, %v699
    %v944 = vpack.c.b16 %v704, %v700
    %v945 = vpack.c.b16 %v705, %v701
    %v946 = vpack.c.b16 %v710, %v706
    %v947 = vpack.c.b16 %v711, %v707
    %v948 = vpack.c.b16 %v712, %v708
    %v949 = vpack.c.b16 %v713, %v709
    %v950 = vpack.c.b16 %v718, %v714
    %v951 = vpack.c.b16 %v719, %v715
    %v952 = vpack.c.b16 %v720, %v716
    %v953 = vpack.c.b16 %v721, %v717
    %v954 = vpack.c.b16 %v726, %v722
    %v955 = vpack.c.b16 %v727, %v723
    %v956 = vpack.c.b16 %v728, %v724
    %v957 = vpack.c.b16 %v729, %v725
    %v958 = vpack.c.b16 %v734, %v730
    %v959 = vpack.c.b16 %v735, %v731
    %v960 = vpack.c.b16 %v736, %v732
    %v961 = vpack.c.b16 %v737, %v733
    %v962 = vpack.c.b16 %v742, %v738
    %v963 = vpack.c.b16 %v743, %v739
    %v964 = vpack.c.b16 %v744, %v740
    %v965 = vpack.c.b16 %v745, %v741
    %v966 = vpack.c.b16 %v750, %v746
    %v967 = vpack.c.b16 %v751, %v747
    %v968 = vpack.c.b16 %v752, %v748
    %v969 = vpack.c.b16 %v753, %v749
    %v970 = vpack.c.b16 %v758, %v754
    %v971 = vpack.c.b16 %v759, %v755
    %v972 = vpack.c.b16 %v760, %v756
    %v973 = vpack.c.b16 %v761, %v757
    %v974 = vpack.c.b16 %v766, %v762
    %v975 = vpack.c.b16 %v767, %v763
    %v976 = vpack.c.b16 %v768, %v764
    %v977 = vpack.c.b16 %v769, %v765
    %v978 = vpack.c.b16 %v774, %v770
    %v979 = vpack.c.b16 %v775, %v771
    %v980 = vpack.c.b16 %v776, %v772
    %v981 = vpack.c.b16 %v777, %v773
    %v982 = vpack.c.b16 %v782, %v778
    %v983 = vpack.c.b16 %v783, %v779
    %v984 = vpack.c.b16 %v784, %v780
    %v985 = vpack.c.b16 %v785, %v781
    %v986 = vpack.c.b16 %v790, %v786
    %v987 = vpack.c.b16 %v791, %v787
    %v988 = vpack.c.b16 %v792, %v788
    %v989 = vpack.c.b16 %v793, %v789
    %v990 = vpack.c.b16 %v798, %v794
    %v991 = vpack.c.b16 %v799, %v795
    %v992 = vpack.c.b16 %v800, %v796
    %v993 = vpack.c.b16 %v801, %v797
    %v994 = vpack.c.b16 %v806, %v802
    %v995 = vpack.c.b16 %v807, %v803
    %v996 = vpack.c.b16 %v808, %v804
    %v997 = vpack.c.b16 %v809, %v805
    %v998 = vpack.c.b16 %v814, %v810
    %v999 = vpack.c.b16 %v815, %v811
    %v1000 = vpack.c.b16 %v816, %v812
    %v1001 = vpack.c.b16 %v817, %v813
    %v1002 = vpack.c.b16 %v822, %v818
    %v1003 = vpack.c.b16 %v823, %v819
    %v1004 = vpack.c.b16 %v824, %v820
    %v1005 = vpack.c.b16 %v825, %v821
    %v1006 = vpack.c.b16 %v830, %v826
    %v1007 = vpack.c.b16 %v831, %v827
    %v1008 = vpack.c.b16 %v832, %v828
    %v1009 = vpack.c.b16 %v833, %v829
    %v1010 = vpack.c.b16 %v838, %v834
    %v1011 = vpack.c.b16 %v839, %v835
    %v1012 = vpack.c.b16 %v840, %v836
    %v1013 = vpack.c.b16 %v841, %v837
    %v1014 = vpack.c.b16 %v846, %v842
    %v1015 = vpack.c.b16 %v847, %v843
    %v1016 = vpack.c.b16 %v848, %v844
    %v1017 = vpack.c.b16 %v849, %v845
    %v1018 = vpack.c.b16 %v854, %v850
    %v1019 = vpack.c.b16 %v855, %v851
    %v1020 = vpack.c.b16 %v856, %v852
    %v1021 = vpack.c.b16 %v857, %v853
    %v1022 = vpack.c.b16 %v862, %v858
    %v1023 = vpack.c.b16 %v863, %v859
    %v1024 = vpack.c.b16 %v864, %v860
    %v1025 = vpack.c.b16 %v865, %v861
    %1186 = vmatprep.subr.bf16.mxu0 %v895
    %1187 = vmatpush1.bf16.msra.mxu0 %v894
    %1188 = vmatprep.subr.bf16.mxu0 %v891
    %1189 = vmatpush1.bf16.msra.mxu0 %v890
    %1190 = vmatprep.subr.bf16.mxu0 %v887
    %1191 = vmatpush1.bf16.msra.mxu0 %v886
    %1192 = vmatprep.subr.bf16.mxu0 %v883
    %1193 = vmatpush1.bf16.msra.mxu0 %v882
    %1194 = vmatprep.subr.bf16.mxu0 %v879
    %1195 = vmatpush1.bf16.msra.mxu0 %v878
    %1196 = vmatprep.subr.bf16.mxu0 %v875
    %1197 = vmatpush1.bf16.msra.mxu0 %v874
    %1198 = vmatprep.subr.bf16.mxu0 %v871
    %1199 = vmatpush1.bf16.msra.mxu0 %v870
    %1200 = vmatprep.subr.bf16.mxu0 %v867
    %1201 = vmatpush1.bf16.msra.mxu0 %v866
    %1202 = vmatprep.subr.bf16.mxu0 %v927
    %1203 = vmatpush2.bf16.msra.mxu0 %v926
    %1204 = vmatprep.subr.bf16.mxu0 %v923
    %1205 = vmatpush2.bf16.msra.mxu0 %v922
    %1206 = vmatprep.subr.bf16.mxu0 %v919
    %1207 = vmatpush2.bf16.msra.mxu0 %v918
    %1208 = vmatprep.subr.bf16.mxu0 %v915
    %1209 = vmatpush2.bf16.msra.mxu0 %v914
    %1210 = vmatprep.subr.bf16.mxu0 %v911
    %1211 = vmatpush2.bf16.msra.mxu0 %v910
    %1212 = vmatprep.subr.bf16.mxu0 %v907
    %1213 = vmatpush2.bf16.msra.mxu0 %v906
    %1214 = vmatprep.subr.bf16.mxu0 %v903
    %1215 = vmatpush2.bf16.msra.mxu0 %v902
    %1216 = vmatprep.subr.bf16.mxu0 %v899
    %1217 = vmatpush2.bf16.msra.mxu0 %v898
    %1218 = vmatprep.mubr.bf16.mxu0 %v199
    %1219 = vmatmul.mubr.bf16.gmra.mxu0 %v192
    %v1220 = vpop.f32.mrf.mxu0
    %v1221 = vadd.f32 %v369, %v1220
    %v1222 = vpop.f32.mrf.mxu0
    %v1223 = vadd.f32 %v373, %v1222
    %v1224 = vpop.f32.mrf.mxu0
    %v1225 = vpop.f32.mrf.mxu0
    %1226 = vdwg.mxu0
    %1227 = vmatprep.subr.bf16.mxu0 %v959
    %1228 = vmatpush1.bf16.msra.mxu0 %v958
    %1229 = vmatprep.subr.bf16.mxu0 %v955
    %1230 = vmatpush1.bf16.msra.mxu0 %v954
    %1231 = vmatprep.subr.bf16.mxu0 %v951
    %1232 = vmatpush1.bf16.msra.mxu0 %v950
    %1233 = vmatprep.subr.bf16.mxu0 %v947
    %1234 = vmatpush1.bf16.msra.mxu0 %v946
    %1235 = vmatprep.subr.bf16.mxu0 %v943
    %1236 = vmatpush1.bf16.msra.mxu0 %v942
    %1237 = vmatprep.subr.bf16.mxu0 %v939
    %1238 = vmatpush1.bf16.msra.mxu0 %v938
    %1239 = vmatprep.subr.bf16.mxu0 %v935
    %1240 = vmatpush1.bf16.msra.mxu0 %v934
    %1241 = vmatprep.subr.bf16.mxu0 %v931
    %1242 = vmatpush1.bf16.msra.mxu0 %v930
    %1243 = vmatprep.subr.bf16.mxu0 %v991
    %1244 = vmatpush2.bf16.msra.mxu0 %v990
    %1245 = vmatprep.subr.bf16.mxu0 %v987
    %1246 = vmatpush2.bf16.msra.mxu0 %v986
    %1247 = vmatprep.subr.bf16.mxu0 %v983
    %1248 = vmatpush2.bf16.msra.mxu0 %v982
    %1249 = vmatprep.subr.bf16.mxu0 %v979
    %1250 = vmatpush2.bf16.msra.mxu0 %v978
    %1251 = vmatprep.subr.bf16.mxu0 %v975
    %1252 = vmatpush2.bf16.msra.mxu0 %v974
    %1253 = vmatprep.subr.bf16.mxu0 %v971
    %1254 = vmatpush2.bf16.msra.mxu0 %v970
    %1255 = vmatprep.subr.bf16.mxu0 %v967
    %1256 = vmatpush2.bf16.msra.mxu0 %v966
    %1257 = vmatprep.subr.bf16.mxu0 %v963
    %1258 = vmatpush2.bf16.msra.mxu0 %v962
    %1259 = vmatprep.mubr.bf16.mxu0 %v175
    %1260 = vmatmul.mubr.bf16.gmra.mxu0 %v200
    %v1261 = vpop.f32.mrf.mxu0
    %v1262 = vadd.f32 %v1221, %v1261
    %v1263 = vpop.f32.mrf.mxu0
    %v1264 = vadd.f32 %v1223, %v1263
    %v1265 = vpop.f32.mrf.mxu0
    %v1266 = vpop.f32.mrf.mxu0
    %1267 = vdwg.mxu0
    %1268 = vmatprep.subr.bf16.mxu0 %v1023
    %1269 = vmatpush1.bf16.msra.mxu0 %v1022
    %1270 = vmatprep.subr.bf16.mxu0 %v1019
    %1271 = vmatpush1.bf16.msra.mxu0 %v1018
    %1272 = vmatprep.subr.bf16.mxu0 %v1015
    %1273 = vmatpush1.bf16.msra.mxu0 %v1014
    %1274 = vmatprep.subr.bf16.mxu0 %v1011
    %1275 = vmatpush1.bf16.msra.mxu0 %v1010
    %1276 = vmatprep.subr.bf16.mxu0 %v1007
    %1277 = vmatpush1.bf16.msra.mxu0 %v1006
    %1278 = vmatprep.subr.bf16.mxu0 %v1003
    %1279 = vmatpush1.bf16.msra.mxu0 %v1002
    %1280 = vmatprep.subr.bf16.mxu0 %v999
    %1281 = vmatpush1.bf16.msra.mxu0 %v998
    %1282 = vmatprep.subr.bf16.mxu0 %v995
    %1283 = vmatpush1.bf16.msra.mxu0 %v994
    %1284 = vmatprep.subr.bf16.mxu0 0
    %1285 = vmatpush2.bf16.msra.mxu0 0
    %1286 = vmatprep.subr.bf16.mxu0 0
    %1287 = vmatpush2.bf16.msra.mxu0 0
    %1288 = vmatprep.subr.bf16.mxu0 0
    %1289 = vmatpush2.bf16.msra.mxu0 0
    %1290 = vmatprep.subr.bf16.mxu0 0
    %1291 = vmatpush2.bf16.msra.mxu0 0
    %1292 = vmatprep.subr.bf16.mxu0 0
    %1293 = vmatpush2.bf16.msra.mxu0 0
    %1294 = vmatprep.subr.bf16.mxu0 0
    %1295 = vmatpush2.bf16.msra.mxu0 0
    %1296 = vmatprep.subr.bf16.mxu0 0
    %1297 = vmatpush2.bf16.msra.mxu0 0
    %1298 = vmatprep.subr.bf16.mxu0 0
    %1299 = vmatpush2.bf16.msra.mxu0 0
    %1300 = vmatprep.mubr.bf16.mxu0 0
    %1301 = vmatmul.mubr.bf16.gmra.mxu0 %v176
    %v1302 = vpop.f32.mrf.mxu0
    %v1303 = vadd.f32 %v1262, %v1302
    %v1304 = vpop.f32.mrf.mxu0
    %v1305 = vadd.f32 %v1264, %v1304
    %v1306 = vpop.f32.mrf.mxu0
    %v1307 = vpop.f32.mrf.mxu0
    %1308 = vdwg.mxu0
    %1309 = vmatprep.subr.bf16.mxu0 %v897
    %1310 = vmatpush1.bf16.msra.mxu0 %v896
    %1311 = vmatprep.subr.bf16.mxu0 %v893
    %1312 = vmatpush1.bf16.msra.mxu0 %v892
    %1313 = vmatprep.subr.bf16.mxu0 %v889
    %1314 = vmatpush1.bf16.msra.mxu0 %v888
    %1315 = vmatprep.subr.bf16.mxu0 %v885
    %1316 = vmatpush1.bf16.msra.mxu0 %v884
    %1317 = vmatprep.subr.bf16.mxu0 %v881
    %1318 = vmatpush1.bf16.msra.mxu0 %v880
    %1319 = vmatprep.subr.bf16.mxu0 %v877
    %1320 = vmatpush1.bf16.msra.mxu0 %v876
    %1321 = vmatprep.subr.bf16.mxu0 %v873
    %1322 = vmatpush1.bf16.msra.mxu0 %v872
    %1323 = vmatprep.subr.bf16.mxu0 %v869
    %1324 = vmatpush1.bf16.msra.mxu0 %v868
    %1325 = vmatprep.subr.bf16.mxu0 %v929
    %1326 = vmatpush2.bf16.msra.mxu0 %v928
    %1327 = vmatprep.subr.bf16.mxu0 %v925
    %1328 = vmatpush2.bf16.msra.mxu0 %v924
    %1329 = vmatprep.subr.bf16.mxu0 %v921
    %1330 = vmatpush2.bf16.msra.mxu0 %v920
    %1331 = vmatprep.subr.bf16.mxu0 %v917
    %1332 = vmatpush2.bf16.msra.mxu0 %v916
    %1333 = vmatprep.subr.bf16.mxu0 %v913
    %1334 = vmatpush2.bf16.msra.mxu0 %v912
    %1335 = vmatprep.subr.bf16.mxu0 %v909
    %1336 = vmatpush2.bf16.msra.mxu0 %v908
    %1337 = vmatprep.subr.bf16.mxu0 %v905
    %1338 = vmatpush2.bf16.msra.mxu0 %v904
    %1339 = vmatprep.subr.bf16.mxu0 %v901
    %1340 = vmatpush2.bf16.msra.mxu0 %v900
    %1341 = vmatprep.mubr.bf16.mxu0 %v199
    %1342 = vmatmul.mubr.bf16.gmra.mxu0 %v192
    %v1343 = vpop.f32.mrf.mxu0
    %v1344 = vadd.f32 %v377, %v1343
    %v1345 = vpop.f32.mrf.mxu0
    %v1346 = vadd.f32 %v381, %v1345
    %v1347 = vpop.f32.mrf.mxu0
    %v1348 = vpop.f32.mrf.mxu0
    %1349 = vdwg.mxu0
    %1350 = vmatprep.subr.bf16.mxu0 %v961
    %1351 = vmatpush1.bf16.msra.mxu0 %v960
    %1352 = vmatprep.subr.bf16.mxu0 %v957
    %1353 = vmatpush1.bf16.msra.mxu0 %v956
    %1354 = vmatprep.subr.bf16.mxu0 %v953
    %1355 = vmatpush1.bf16.msra.mxu0 %v952
    %1356 = vmatprep.subr.bf16.mxu0 %v949
    %1357 = vmatpush1.bf16.msra.mxu0 %v948
    %1358 = vmatprep.subr.bf16.mxu0 %v945
    %1359 = vmatpush1.bf16.msra.mxu0 %v944
    %1360 = vmatprep.subr.bf16.mxu0 %v941
    %1361 = vmatpush1.bf16.msra.mxu0 %v940
    %1362 = vmatprep.subr.bf16.mxu0 %v937
    %1363 = vmatpush1.bf16.msra.mxu0 %v936
    %1364 = vmatprep.subr.bf16.mxu0 %v933
    %1365 = vmatpush1.bf16.msra.mxu0 %v932
    %1366 = vmatprep.subr.bf16.mxu0 %v993
    %1367 = vmatpush2.bf16.msra.mxu0 %v992
    %1368 = vmatprep.subr.bf16.mxu0 %v989
    %1369 = vmatpush2.bf16.msra.mxu0 %v988
    %1370 = vmatprep.subr.bf16.mxu0 %v985
    %1371 = vmatpush2.bf16.msra.mxu0 %v984
    %1372 = vmatprep.subr.bf16.mxu0 %v981
    %1373 = vmatpush2.bf16.msra.mxu0 %v980
    %1374 = vmatprep.subr.bf16.mxu0 %v977
    %1375 = vmatpush2.bf16.msra.mxu0 %v976
    %1376 = vmatprep.subr.bf16.mxu0 %v973
    %1377 = vmatpush2.bf16.msra.mxu0 %v972
    %1378 = vmatprep.subr.bf16.mxu0 %v969
    %1379 = vmatpush2.bf16.msra.mxu0 %v968
    %1380 = vmatprep.subr.bf16.mxu0 %v965
    %1381 = vmatpush2.bf16.msra.mxu0 %v964
    %1382 = vmatprep.mubr.bf16.mxu0 %v175
    %1383 = vmatmul.mubr.bf16.gmra.mxu0 %v200
    %v1384 = vpop.f32.mrf.mxu0
    %v1385 = vadd.f32 %v1344, %v1384
    %v1386 = vpop.f32.mrf.mxu0
    %v1387 = vadd.f32 %v1346, %v1386
    %v1388 = vpop.f32.mrf.mxu0
    %v1389 = vpop.f32.mrf.mxu0
    %1390 = vdwg.mxu0
    %1391 = vmatprep.subr.bf16.mxu0 %v1025
    %1392 = vmatpush1.bf16.msra.mxu0 %v1024
    %1393 = vmatprep.subr.bf16.mxu0 %v1021
    %1394 = vmatpush1.bf16.msra.mxu0 %v1020
    %1395 = vmatprep.subr.bf16.mxu0 %v1017
    %1396 = vmatpush1.bf16.msra.mxu0 %v1016
    %1397 = vmatprep.subr.bf16.mxu0 %v1013
    %1398 = vmatpush1.bf16.msra.mxu0 %v1012
    %1399 = vmatprep.subr.bf16.mxu0 %v1009
    %1400 = vmatpush1.bf16.msra.mxu0 %v1008
    %1401 = vmatprep.subr.bf16.mxu0 %v1005
    %1402 = vmatpush1.bf16.msra.mxu0 %v1004
    %1403 = vmatprep.subr.bf16.mxu0 %v1001
    %1404 = vmatpush1.bf16.msra.mxu0 %v1000
    %1405 = vmatprep.subr.bf16.mxu0 %v997
    %1406 = vmatpush1.bf16.msra.mxu0 %v996
    %1407 = vmatprep.subr.bf16.mxu0 0
    %1408 = vmatpush2.bf16.msra.mxu0 0
    %1409 = vmatprep.subr.bf16.mxu0 0
    %1410 = vmatpush2.bf16.msra.mxu0 0
    %1411 = vmatprep.subr.bf16.mxu0 0
    %1412 = vmatpush2.bf16.msra.mxu0 0
    %1413 = vmatprep.subr.bf16.mxu0 0
    %1414 = vmatpush2.bf16.msra.mxu0 0
    %1415 = vmatprep.subr.bf16.mxu0 0
    %1416 = vmatpush2.bf16.msra.mxu0 0
    %1417 = vmatprep.subr.bf16.mxu0 0
    %1418 = vmatpush2.bf16.msra.mxu0 0
    %1419 = vmatprep.subr.bf16.mxu0 0
    %1420 = vmatpush2.bf16.msra.mxu0 0
    %1421 = vmatprep.subr.bf16.mxu0 0
    %1422 = vmatpush2.bf16.msra.mxu0 0
    %1423 = vmatprep.mubr.bf16.mxu0 0
    %1424 = vmatmul.mubr.bf16.gmra.mxu0 %v176
    %v1425 = vpop.f32.mrf.mxu0
    %v1426 = vadd.f32 %v1385, %v1425
    %v1427 = vpop.f32.mrf.mxu0
    %v1428 = vadd.f32 %v1387, %v1427
    %v1429 = vpop.f32.mrf.mxu0
    %v1430 = vpop.f32.mrf.mxu0
    %1431 = vdwg.mxu0
    %v1432 = vxor.u32 %v1303, 2147483648
    %v1433 = vmul.f32 %v1432, 1.442695
    %v1434 = vpow.pop %v1433
    %v1435 = vadd.f32 %v1434, 1.0
    %v1436 = vrcp.pop %v1435
    %v1437 = vmul.f32 1.0, %v1436
    %v1438 = vxor.u32 %v1305, 2147483648
    %v1439 = vmul.f32 %v1438, 1.442695
    %v1440 = vpow.pop %v1439
    %v1441 = vadd.f32 %v1440, 1.0
    %v1442 = vrcp.pop %v1441
    %v1443 = vmul.f32 1.0, %v1442
    %v1444 = vtanh.pop %v1426
    %v1445 = vxor.u32 %v1428, 2147483648
    %v1446 = vmul.f32 %v1445, 1.442695
    %v1447 = vpow.pop %v1446
    %v1448 = vadd.f32 %v1447, 1.0
    %v1449 = vrcp.pop %v1448
    %v1450 = vmul.f32 1.0, %v1449
    %v1451 = vmul.f32 %v1443, %v170
    %v1452 = vmul.f32 %v1437, %v1444
    %v1453 = vadd.f32 %v1451, %v1452
    %v1454 = vtanh.pop %v1453
    %v1455 = vmul.f32 %v1450, %v1454
    %v1456 = vld [vmem:[%s9] sm:$0xf]
    %v1457 = vld [vmem:[%s9 + $0x4] sm:$0xf]
    %v1458 = vld [vmem:[%s9 + $0x8] sm:$0xf]
    %v1459 = vld [vmem:[%s9 + $0xc] sm:$0xf]
    %v1460 = vld [vmem:[%s9 + $0x10] sm:$0xf]
    %v1461 = vld [vmem:[%s9 + $0x14] sm:$0xf]
    %v1462 = vld [vmem:[%s9 + $0x18] sm:$0xf]
    %v1463 = vld [vmem:[%s9 + $0x1c] sm:$0xf]
    %v1464 = vld [vmem:[%s9 + $0x20] sm:$0xf]
    %v1465 = vld [vmem:[%s9 + $0x24] sm:$0xf]
    %v1466 = vld [vmem:[%s9 + $0x28] sm:$0xf]
    %v1467 = vld [vmem:[%s9 + $0x2c] sm:$0xf]
    %v1468 = vld [vmem:[%s9 + $0x30] sm:$0xf]
    %v1469 = vld [vmem:[%s9 + $0x34] sm:$0xf]
    %v1470 = vld [vmem:[%s9 + $0x38] sm:$0xf]
    %v1471 = vld [vmem:[%s9 + $0x3c] sm:$0xf]
    %v1474 = vunpack.c.l.b16 %v171
    %v1475 = vunpack.c.l.b16 %v172
    %v1476 = vpack.c.b16 %v1475, %v1474
    %v1494 = vunpack.c.l.b16 %v1456
    %v1495 = vunpack.c.l.b16 %v1457
    %v1496 = vunpack.c.l.b16 %v1458
    %v1497 = vunpack.c.l.b16 %v1459
    %v1498 = vunpack.c.l.b16 %v1460
    %v1499 = vunpack.c.l.b16 %v1461
    %v1500 = vunpack.c.l.b16 %v1462
    %v1501 = vunpack.c.l.b16 %v1463
    %v1502 = vunpack.c.l.b16 %v1464
    %v1503 = vunpack.c.l.b16 %v1465
    %v1504 = vunpack.c.l.b16 %v1466
    %v1505 = vunpack.c.l.b16 %v1467
    %v1506 = vunpack.c.l.b16 %v1468
    %v1507 = vunpack.c.l.b16 %v1469
    %v1508 = vunpack.c.l.b16 %v1470
    %v1509 = vunpack.c.l.b16 %v1471
    %v1510 = vpack.c.b16 %v1495, %v1494
    %v1511 = vpack.c.b16 %v1497, %v1496
    %v1512 = vpack.c.b16 %v1499, %v1498
    %v1513 = vpack.c.b16 %v1501, %v1500
    %v1514 = vpack.c.b16 %v1503, %v1502
    %v1515 = vpack.c.b16 %v1505, %v1504
    %v1516 = vpack.c.b16 %v1507, %v1506
    %v1517 = vpack.c.b16 %v1509, %v1508
    %1526 = vmatprep.subr.bf16.mxu0 0
    %1527 = vmatpush1.bf16.msra.mxu0 %v1517
    %1528 = vmatprep.subr.bf16.mxu0 0
    %1529 = vmatpush1.bf16.msra.mxu0 %v1516
    %1530 = vmatprep.subr.bf16.mxu0 0
    %1531 = vmatpush1.bf16.msra.mxu0 %v1515
    %1532 = vmatprep.subr.bf16.mxu0 0
    %1533 = vmatpush1.bf16.msra.mxu0 %v1514
    %1534 = vmatprep.subr.bf16.mxu0 0
    %1535 = vmatpush1.bf16.msra.mxu0 %v1513
    %1536 = vmatprep.subr.bf16.mxu0 0
    %1537 = vmatpush1.bf16.msra.mxu0 %v1512
    %1538 = vmatprep.subr.bf16.mxu0 0
    %1539 = vmatpush1.bf16.msra.mxu0 %v1511
    %1540 = vmatprep.subr.bf16.mxu0 0
    %1541 = vmatpush1.bf16.msra.mxu0 %v1510
    %1542 = vmatprep.subr.bf16.mxu0 0
    %1543 = vmatpush2.bf16.msra.mxu0 0
    %1544 = vmatprep.subr.bf16.mxu0 0
    %1545 = vmatpush2.bf16.msra.mxu0 0
    %1546 = vmatprep.subr.bf16.mxu0 0
    %1547 = vmatpush2.bf16.msra.mxu0 0
    %1548 = vmatprep.subr.bf16.mxu0 0
    %1549 = vmatpush2.bf16.msra.mxu0 0
    %1550 = vmatprep.subr.bf16.mxu0 0
    %1551 = vmatpush2.bf16.msra.mxu0 0
    %1552 = vmatprep.subr.bf16.mxu0 0
    %1553 = vmatpush2.bf16.msra.mxu0 0
    %1554 = vmatprep.subr.bf16.mxu0 0
    %1555 = vmatpush2.bf16.msra.mxu0 0
    %1556 = vmatprep.subr.bf16.mxu0 0
    %1557 = vmatpush2.bf16.msra.mxu0 0
    %1558 = vmatprep.mubr.bf16.mxu0 0
    %1559 = vmatmul.mubr.bf16.gmra.mxu0 %v1476
    %v1560 = vpop.f32.mrf.mxu0
    %v1561 = vadd.f32 0.0, %v1560
    %v1562 = vpop.f32.mrf.mxu0
    %v1563 = vpop.f32.mrf.mxu0
    %v1564 = vadd.f32 0.0, %v1563
    %v1565 = vpop.f32.mrf.mxu0
    %1566 = vdwg.mxu0
    %v1567 = vpack.c.bf16 %v1455, %v1455
    %v1568 = vld [vmem:[#allocation6] sm:$0xf]
    %v1569 = vld [vmem:[#allocation6 + $0x4] sm:$0xf]
    %v1570 = vld [vmem:[#allocation6 + $0x8] sm:$0xf]
    %v1571 = vld [vmem:[#allocation6 + $0xc] sm:$0xf]
    %v1572 = vld [vmem:[#allocation6 + $0x10] sm:$0xf]
    %v1573 = vld [vmem:[#allocation6 + $0x14] sm:$0xf]
    %v1574 = vld [vmem:[#allocation6 + $0x18] sm:$0xf]
    %v1575 = vld [vmem:[#allocation6 + $0x1c] sm:$0xf]
    %v1576 = vld [vmem:[#allocation6 + $0x20] sm:$0xf]
    %v1577 = vld [vmem:[#allocation6 + $0x24] sm:$0xf]
    %v1578 = vld [vmem:[#allocation6 + $0x28] sm:$0xf]
    %v1579 = vld [vmem:[#allocation6 + $0x2c] sm:$0xf]
    %v1580 = vld [vmem:[#allocation6 + $0x30] sm:$0xf]
    %v1581 = vld [vmem:[#allocation6 + $0x34] sm:$0xf]
    %v1582 = vld [vmem:[#allocation6 + $0x38] sm:$0xf]
    %v1583 = vld [vmem:[#allocation6 + $0x3c] sm:$0xf]
    %v1600 = vunpack.c.l.b16 %v1568
    %v1601 = vunpack.c.l.b16 %v1569
    %v1602 = vunpack.c.l.b16 %v1570
    %v1603 = vunpack.c.l.b16 %v1571
    %v1604 = vunpack.c.l.b16 %v1572
    %v1605 = vunpack.c.l.b16 %v1573
    %v1606 = vunpack.c.l.b16 %v1574
    %v1607 = vunpack.c.l.b16 %v1575
    %v1608 = vunpack.c.l.b16 %v1576
    %v1609 = vunpack.c.l.b16 %v1577
    %v1610 = vunpack.c.l.b16 %v1578
    %v1611 = vunpack.c.l.b16 %v1579
    %v1612 = vunpack.c.l.b16 %v1580
    %v1613 = vunpack.c.l.b16 %v1581
    %v1614 = vunpack.c.l.b16 %v1582
    %v1615 = vunpack.c.l.b16 %v1583
    %v1616 = vpack.c.b16 %v1601, %v1600
    %v1617 = vpack.c.b16 %v1603, %v1602
    %v1618 = vpack.c.b16 %v1605, %v1604
    %v1619 = vpack.c.b16 %v1607, %v1606
    %v1620 = vpack.c.b16 %v1609, %v1608
    %v1621 = vpack.c.b16 %v1611, %v1610
    %v1622 = vpack.c.b16 %v1613, %v1612
    %v1623 = vpack.c.b16 %v1615, %v1614
    %1632 = vmatprep.subr.bf16.mxu0 0
    %1633 = vmatpush1.bf16.msra.mxu0 %v1623
    %1634 = vmatprep.subr.bf16.mxu0 0
    %1635 = vmatpush1.bf16.msra.mxu0 %v1622
    %1636 = vmatprep.subr.bf16.mxu0 0
    %1637 = vmatpush1.bf16.msra.mxu0 %v1621
    %1638 = vmatprep.subr.bf16.mxu0 0
    %1639 = vmatpush1.bf16.msra.mxu0 %v1620
    %1640 = vmatprep.subr.bf16.mxu0 0
    %1641 = vmatpush1.bf16.msra.mxu0 %v1619
    %1642 = vmatprep.subr.bf16.mxu0 0
    %1643 = vmatpush1.bf16.msra.mxu0 %v1618
    %1644 = vmatprep.subr.bf16.mxu0 0
    %1645 = vmatpush1.bf16.msra.mxu0 %v1617
    %1646 = vmatprep.subr.bf16.mxu0 0
    %1647 = vmatpush1.bf16.msra.mxu0 %v1616
    %1648 = vmatprep.subr.bf16.mxu0 0
    %1649 = vmatpush2.bf16.msra.mxu0 0
    %1650 = vmatprep.subr.bf16.mxu0 0
    %1651 = vmatpush2.bf16.msra.mxu0 0
    %1652 = vmatprep.subr.bf16.mxu0 0
    %1653 = vmatpush2.bf16.msra.mxu0 0
    %1654 = vmatprep.subr.bf16.mxu0 0
    %1655 = vmatpush2.bf16.msra.mxu0 0
    %1656 = vmatprep.subr.bf16.mxu0 0
    %1657 = vmatpush2.bf16.msra.mxu0 0
    %1658 = vmatprep.subr.bf16.mxu0 0
    %1659 = vmatpush2.bf16.msra.mxu0 0
    %1660 = vmatprep.subr.bf16.mxu0 0
    %1661 = vmatpush2.bf16.msra.mxu0 0
    %1662 = vmatprep.subr.bf16.mxu0 0
    %1663 = vmatpush2.bf16.msra.mxu0 0
    %1664 = vmatprep.mubr.bf16.mxu0 0
    %1665 = vmatmul.mubr.bf16.gmra.mxu0 %v1567
    %v1666 = vpop.f32.mrf.mxu0
    %v1667 = vadd.f32 0.0, %v1666
    %v1668 = vpop.f32.mrf.mxu0
    %v1669 = vpop.f32.mrf.mxu0
    %v1670 = vpop.f32.mrf.mxu0
    %1671 = vdwg.mxu0
    %v1672 = vlaneseq
    %v1673 = vshrl.u32 %v1672, 7
    %v1674 = vsub.s32 0, %v1673
    %v1675 = vrot.slane %v173, %v1674
    %1677 = vbcast.lane.b32.xlu0 %v1675, 256
    %v1678 = vpop.permute.xlu0 %1677
    %v1679 = vlaneseq
    %v1680 = vshrl.u32 %v1679, 7
    %v1681 = vsub.s32 1, %v1680
    %v1682 = vrot.slane %v173, %v1681
    %1684 = vbcast.lane.b32.xlu0 %v1682, 256
    %v1685 = vpop.permute.xlu0 %1684
    %v1686 = vld [vmem:[#allocation8] sm:$0x1]
    %v1688 = vlaneseq
    %v1689 = vshrl.u32 %v1688, 7
    %v1690 = vsub.s32 0, %v1689
    %v1691 = vrot.slane %v1686, %v1690
    %v1693 = vmul.f32 %v1678, %v1691
    %v1694 = vmul.f32 %v1685, %v1691
    %v1697 = vunpack.c.l.s4 1966171168
    %v1698 = vunpack.c.0.s8 %v1697
    %v1699 = vlaneseq
    %v1700 = vshrl.u32 %v1699, 7
    %v1701 = vsub.s32 %v1698, %v1700
    %v1702 = vrot.slane %v1667, %v1701
    %v1703 = vcombine.high %v1702, %v1702
    %v1705 = vunpack.c.l.s4 1966171168
    %v1706 = vunpack.c.0.s8 %v1705
    %v1707 = vlaneseq
    %v1708 = vshrl.u32 %v1707, 7
    %v1709 = vsub.s32 %v1706, %v1708
    %v1710 = vrot.slane %v1702, %v1709
    %v1712 = vunpack.c.l.s4 1966171168
    %v1713 = vunpack.c.0.s8 %v1712
    %v1714 = vlaneseq
    %v1715 = vshrl.u32 %v1714, 7
    %v1716 = vsub.s32 %v1713, %v1715
    %v1717 = vrot.slane %v1703, %v1716
    %v1718 = vlaneseq
    %v1719 = vshrl.u32 %v1718, 7
    %v1720 = vsub.s32 0, %v1719
    %v1721 = vrot.slane %v1710, %v1720
    %v1722 = vlaneseq
    %v1723 = vshrl.u32 %v1722, 7
    %v1724 = vsub.s32 0, %v1723
    %v1725 = vrot.slane %v1717, %v1724
    %v1728 = vadd.f32 %v1561, %v1721
    %v1729 = vadd.f32 %v1564, %v1725
    %v1730 = vadd.f32 %v1728, %v1693
    %v1731 = vadd.f32 %v1729, %v1694
    %v1732 = vld [vmem:[#allocation9] sm:$0x1]
    %v1734 = vlaneseq
    %v1735 = vshrl.u32 %v1734, 7
    %v1736 = vsub.s32 0, %v1735
    %v1737 = vrot.slane %v1732, %v1736
    %v1739 = vadd.f32 %v1730, %v1737
    %v1740 = vadd.f32 %v1731, %v1737
    %v1741 = vtanh.pop %v1739
    %v1742 = vtanh.pop %v1740
    %v1743 = vld [vmem:[#allocation11] sm:$0x1]
    %v1745 = vlaneseq
    %v1746 = vshrl.u32 %v1745, 7
    %v1747 = vsub.s32 0, %v1746
    %v1748 = vrot.slane %v1743, %v1747
    %v1750 = vmul.f32 %v1741, %v1748
    %v1751 = vmul.f32 %v1742, %v1748
    %1752 = vadd.xlane.f32.xlu0 %v1750
    %v1753 = vpop.xlane.xlu0 %1752
    %1754 = vadd.xlane.f32.xlu0 %v1751
    %v1755 = vpop.xlane.xlu0 %1754
    %v1758 = vlaneseq
    %v1759 = vand.u32 %v1758, 127
    %v1760 = vlaneseq
    %v1761 = vshrl.u32 %v1760, 7
    %v1762 = vsub.s32 %v1759, %v1761
    %v1763 = vrot.slane %v1753, %v1762
    %v1764 = vlaneseq
    %v1765 = vshrl.u32 %v1764, 7
    %v1766 = vsub.s32 %v1759, %v1765
    %v1767 = vrot.slane %v1755, %v1766
    %vm1768 = vcmask 1041409
    %v1769 = vsel %vm1768, %v1767, %v1763
    %vm1771 = vcmask 58368
    %v1772 = vsel %vm1771, %v1769, -inf
    %1773 = vmax.xlane.f32.xlu0 %v1772
    %v1774 = vpop.xlane.xlu0 %1773
    %v1776 = vlaneseq
    %v1777 = vshrl.u32 %v1776, 7
    %v1778 = vsub.s32 0, %v1777
    %v1779 = vrot.slane %v1774, %v1778
    %v1780 = vlaneseq
    %v1781 = vshrl.u32 %v1780, 7
    %v1782 = vsub.s32 1, %v1781
    %v1783 = vrot.slane %v1774, %v1782
    %v1786 = vsub.f32 %v1753, %v1779
    %v1787 = vsub.f32 %v1755, %v1783
    %v1788 = vmul.f32 %v1786, 1.442695
    %v1789 = vpow.pop %v1788
    %v1790 = vmul.f32 %v1787, 1.442695
    %v1791 = vpow.pop %v1790
    %1794 = vset.pattern.permute.xlu0 0
    %1795 = vperm.xlu0 %1794, %v1789
    %v1796 = vpop.permute.xlu0 %1795
    %1797 = vset.pattern.permute.xlu0 0
    %1798 = vperm.xlu0 %1797, %v1791
    %v1799 = vpop.permute.xlu0 %1798
    %v1800 = vlaneseq
    %v1801 = vshrl.u32 %v1800, 7
    %v1802 = vsub.s32 %v1759, %v1801
    %v1803 = vrot.slane %v1796, %v1802
    %v1804 = vlaneseq
    %v1805 = vshrl.u32 %v1804, 7
    %v1806 = vsub.s32 %v1759, %v1805
    %v1807 = vrot.slane %v1799, %v1806
    %v1808 = vsel %vm1768, %v1807, %v1803
    %v1810 = vsel %vm1771, %v1808, 0.0
    %1811 = vadd.xlane.f32.xlu0 %v1810
    %v1812 = vpop.xlane.xlu0 %1811
    %v1814 = vlaneseq
    %v1815 = vshrl.u32 %v1814, 7
    %v1816 = vsub.s32 0, %v1815
    %v1817 = vrot.slane %v1812, %v1816
    %v1818 = vlaneseq
    %v1819 = vshrl.u32 %v1818, 7
    %v1820 = vsub.s32 1, %v1819
    %v1821 = vrot.slane %v1812, %v1820
    %v1824 = vrcp.pop %v1817
    %v1825 = vmul.f32 %v1789, %v1824
    %v1826 = vrcp.pop %v1821
    %v1827 = vmul.f32 %v1791, %v1826
    %v1828 = vunpack.c.l.bf16 %v171
    %v1829 = vunpack.c.l.bf16 %v172
    %1831 = vset.pattern.permute.xlu0 0
    %1832 = vperm.xlu0 %1831, %v1825
    %v1833 = vpop.permute.xlu0 %1832
    %1836 = vset.pattern.permute.xlu0 0
    %1837 = vperm.xlu0 %1836, %v1827
    %v1838 = vpop.permute.xlu0 %1837
    %v1840 = vmul.f32 %v1833, %v1828
    %v1841 = vmul.f32 %v1838, %v1829
    %v1842 = vrot.slane %v1840, 4
    %v1843 = vadd.f32 %v1840, %v1842
    %v1844 = vrot.slane %v1843, 2
    %v1845 = vadd.f32 %v1843, %v1844
    %v1846 = vrot.slane %v1845, 1
    %v1847 = vadd.f32 %v1845, %v1846
    %v1848 = vrot.slane %v1841, 4
    %v1849 = vadd.f32 %v1841, %v1848
    %v1850 = vrot.slane %v1849, 2
    %v1851 = vadd.f32 %v1849, %v1850
    %v1852 = vrot.slane %v1851, 1
    %v1853 = vadd.f32 %v1851, %v1852
    %v1854 = vlaneseq
    %v1855 = vshrl.u32 %v1854, 7
    %v1856 = vsub.s32 %v1759, %v1855
    %v1857 = vrot.slane %v1833, %v1856
    %v1858 = vlaneseq
    %v1859 = vshrl.u32 %v1858, 7
    %v1860 = vsub.s32 %v1759, %v1859
    %v1861 = vrot.slane %v1838, %v1860
    %v1862 = vsel %vm1768, %v1861, %v1857
    %v1864 = vadd.f32 %v173, %v1862
    %v1865 = vpack.c.bf16 %v1847, %v1847
    %v1866 = vpack.c.bf16 %v1853, %v1853
    %v1867 = vld [vmem:[#allocation12] sm:$0xff]
    %v1868 = vld [vmem:[#allocation12 + $0x8] sm:$0xff]
    %v1869 = vld [vmem:[#allocation12 + $0x10] sm:$0xff]
    %v1870 = vld [vmem:[#allocation12 + $0x18] sm:$0xff]
    %v1871 = vld [vmem:[#allocation12 + $0x20] sm:$0xf]
    %v1872 = vld [vmem:[#allocation12 + $0x24] sm:$0xff]
    %v1873 = vld [vmem:[#allocation12 + $0x2c] sm:$0xff]
    %v1874 = vld [vmem:[#allocation12 + $0x34] sm:$0xff]
    %v1875 = vld [vmem:[#allocation12 + $0x3c] sm:$0xff]
    %v1876 = vld [vmem:[#allocation12 + $0x44] sm:$0xf]
    %v1877 = vld [vmem:[#allocation12 + $0x48] sm:$0xff]
    %v1878 = vld [vmem:[#allocation12 + $0x50] sm:$0xff]
    %v1879 = vld [vmem:[#allocation12 + $0x58] sm:$0xff]
    %v1880 = vld [vmem:[#allocation12 + $0x60] sm:$0xff]
    %v1881 = vld [vmem:[#allocation12 + $0x68] sm:$0xf]
    %v1882 = vld [vmem:[#allocation12 + $0x6c] sm:$0xff]
    %v1883 = vld [vmem:[#allocation12 + $0x74] sm:$0xff]
    %v1884 = vld [vmem:[#allocation12 + $0x7c] sm:$0xff]
    %v1885 = vld [vmem:[#allocation12 + $0x84] sm:$0xff]
    %v1886 = vld [vmem:[#allocation12 + $0x8c] sm:$0xf]
    %v1887 = vld [vmem:[#allocation12 + $0x90] sm:$0xff]
    %v1888 = vld [vmem:[#allocation12 + $0x98] sm:$0xff]
    %v1889 = vld [vmem:[#allocation12 + $0xa0] sm:$0xff]
    %v1890 = vld [vmem:[#allocation12 + $0xa8] sm:$0xff]
    %v1891 = vld [vmem:[#allocation12 + $0xb0] sm:$0xf]
    %v1892 = vld [vmem:[#allocation12 + $0xb4] sm:$0xff]
    %v1893 = vld [vmem:[#allocation12 + $0xbc] sm:$0xff]
    %v1894 = vld [vmem:[#allocation12 + $0xc4] sm:$0xff]
    %v1895 = vld [vmem:[#allocation12 + $0xcc] sm:$0xff]
    %v1896 = vld [vmem:[#allocation12 + $0xd4] sm:$0xf]
    %v1897 = vld [vmem:[#allocation12 + $0xd8] sm:$0xff]
    %v1898 = vld [vmem:[#allocation12 + $0xe0] sm:$0xff]
    %v1899 = vld [vmem:[#allocation12 + $0xe8] sm:$0xff]
    %v1900 = vld [vmem:[#allocation12 + $0xf0] sm:$0xff]
    %v1901 = vld [vmem:[#allocation12 + $0xf8] sm:$0xf]
    %v1902 = vld [vmem:[#allocation12 + $0xfc] sm:$0xff]
    %v1903 = vld [vmem:[#allocation12 + $0x104] sm:$0xff]
    %v1904 = vld [vmem:[#allocation12 + $0x10c] sm:$0xff]
    %v1905 = vld [vmem:[#allocation12 + $0x114] sm:$0xff]
    %v1906 = vld [vmem:[#allocation12 + $0x11c] sm:$0xf]
    %v1907 = vld [vmem:[#allocation12 + $0x120] sm:$0xff]
    %v1908 = vld [vmem:[#allocation12 + $0x128] sm:$0xff]
    %v1909 = vld [vmem:[#allocation12 + $0x130] sm:$0xff]
    %v1910 = vld [vmem:[#allocation12 + $0x138] sm:$0xff]
    %v1911 = vld [vmem:[#allocation12 + $0x140] sm:$0xf]
    %v1912 = vld [vmem:[#allocation12 + $0x144] sm:$0xff]
    %v1913 = vld [vmem:[#allocation12 + $0x14c] sm:$0xff]
    %v1914 = vld [vmem:[#allocation12 + $0x154] sm:$0xff]
    %v1915 = vld [vmem:[#allocation12 + $0x15c] sm:$0xff]
    %v1916 = vld [vmem:[#allocation12 + $0x164] sm:$0xf]
    %v1917 = vld [vmem:[#allocation12 + $0x168] sm:$0xff]
    %v1918 = vld [vmem:[#allocation12 + $0x170] sm:$0xff]
    %v1919 = vld [vmem:[#allocation12 + $0x178] sm:$0xff]
    %v1920 = vld [vmem:[#allocation12 + $0x180] sm:$0xff]
    %v1921 = vld [vmem:[#allocation12 + $0x188] sm:$0xf]
    %v1922 = vld [vmem:[#allocation12 + $0x18c] sm:$0xff]
    %v1923 = vld [vmem:[#allocation12 + $0x194] sm:$0xff]
    %v1924 = vld [vmem:[#allocation12 + $0x19c] sm:$0xff]
    %v1925 = vld [vmem:[#allocation12 + $0x1a4] sm:$0xff]
    %v1926 = vld [vmem:[#allocation12 + $0x1ac] sm:$0xf]
    %v1927 = vld [vmem:[#allocation12 + $0x1b0] sm:$0xff]
    %v1928 = vld [vmem:[#allocation12 + $0x1b8] sm:$0xff]
    %v1929 = vld [vmem:[#allocation12 + $0x1c0] sm:$0xff]
    %v1930 = vld [vmem:[#allocation12 + $0x1c8] sm:$0xff]
    %v1931 = vld [vmem:[#allocation12 + $0x1d0] sm:$0xf]
    %v1932 = vld [vmem:[#allocation12 + $0x1d4] sm:$0xff]
    %v1933 = vld [vmem:[#allocation12 + $0x1dc] sm:$0xff]
    %v1934 = vld [vmem:[#allocation12 + $0x1e4] sm:$0xff]
    %v1935 = vld [vmem:[#allocation12 + $0x1ec] sm:$0xff]
    %v1936 = vld [vmem:[#allocation12 + $0x1f4] sm:$0xf]
    %v1937 = vld [vmem:[#allocation12 + $0x1f8] sm:$0xff]
    %v1938 = vld [vmem:[#allocation12 + $0x200] sm:$0xff]
    %v1939 = vld [vmem:[#allocation12 + $0x208] sm:$0xff]
    %v1940 = vld [vmem:[#allocation12 + $0x210] sm:$0xff]
    %v1941 = vld [vmem:[#allocation12 + $0x218] sm:$0xf]
    %v1942 = vld [vmem:[#allocation12 + $0x21c] sm:$0xff]
    %v1943 = vld [vmem:[#allocation12 + $0x224] sm:$0xff]
    %v1944 = vld [vmem:[#allocation12 + $0x22c] sm:$0xff]
    %v1945 = vld [vmem:[#allocation12 + $0x234] sm:$0xff]
    %v1946 = vld [vmem:[#allocation12 + $0x23c] sm:$0xf]
    %v1947 = vld [vmem:[#allocation14] sm:$0xff]
    %v1948 = vld [vmem:[#allocation14 + $0x8] sm:$0x1]
    %v1951 = vlaneseq
    %v1952 = vshrl.u32 %v1951, 7
    %v1953 = vsub.s32 0, %v1952
    %v1954 = vrot.slane %v1947, %v1953
    %v1955 = vlaneseq
    %v1956 = vshrl.u32 %v1955, 7
    %v1957 = vsub.s32 1, %v1956
    %v1958 = vrot.slane %v1947, %v1957
    %v1959 = vlaneseq
    %v1960 = vshrl.u32 %v1959, 7
    %v1961 = vsub.s32 2, %v1960
    %v1962 = vrot.slane %v1947, %v1961
    %v1963 = vlaneseq
    %v1964 = vshrl.u32 %v1963, 7
    %v1965 = vsub.s32 3, %v1964
    %v1966 = vrot.slane %v1947, %v1965
    %v1967 = vlaneseq
    %v1968 = vshrl.u32 %v1967, 7
    %v1969 = vsub.s32 4, %v1968
    %v1970 = vrot.slane %v1947, %v1969
    %v1971 = vlaneseq
    %v1972 = vshrl.u32 %v1971, 7
    %v1973 = vsub.s32 5, %v1972
    %v1974 = vrot.slane %v1947, %v1973
    %v1975 = vlaneseq
    %v1976 = vshrl.u32 %v1975, 7
    %v1977 = vsub.s32 6, %v1976
    %v1978 = vrot.slane %v1947, %v1977
    %v1979 = vlaneseq
    %v1980 = vshrl.u32 %v1979, 7
    %v1981 = vsub.s32 7, %v1980
    %v1982 = vrot.slane %v1947, %v1981
    %v1983 = vlaneseq
    %v1984 = vshrl.u32 %v1983, 7
    %v1985 = vsub.s32 0, %v1984
    %v1986 = vrot.slane %v1948, %v1985
    %v1998 = vunpack.c.l.b16 %v1865
    %v1999 = vunpack.c.l.b16 %v1866
    %v2000 = vsel %vm1768, %v1999, %v1998
    %v2001 = vpack.c.b16 %v2000, %v2000
    %v2083 = vunpack.c.l.b16 %v1867
    %v2084 = vunpack.c.h.b16 %v1867
    %v2085 = vunpack.c.l.b16 %v1868
    %v2086 = vunpack.c.h.b16 %v1868
    %v2087 = vunpack.c.l.b16 %v1869
    %v2088 = vunpack.c.h.b16 %v1869
    %v2089 = vunpack.c.l.b16 %v1870
    %v2090 = vunpack.c.h.b16 %v1870
    %v2091 = vunpack.c.l.b16 %v1871
    %v2092 = vunpack.c.l.b16 %v1872
    %v2093 = vunpack.c.h.b16 %v1872
    %v2094 = vunpack.c.l.b16 %v1873
    %v2095 = vunpack.c.h.b16 %v1873
    %v2096 = vunpack.c.l.b16 %v1874
    %v2097 = vunpack.c.h.b16 %v1874
    %v2098 = vunpack.c.l.b16 %v1875
    %v2099 = vunpack.c.h.b16 %v1875
    %v2100 = vunpack.c.l.b16 %v1876
    %v2101 = vunpack.c.l.b16 %v1877
    %v2102 = vunpack.c.h.b16 %v1877
    %v2103 = vunpack.c.l.b16 %v1878
    %v2104 = vunpack.c.h.b16 %v1878
    %v2105 = vunpack.c.l.b16 %v1879
    %v2106 = vunpack.c.h.b16 %v1879
    %v2107 = vunpack.c.l.b16 %v1880
    %v2108 = vunpack.c.h.b16 %v1880
    %v2109 = vunpack.c.l.b16 %v1881
    %v2110 = vunpack.c.l.b16 %v1882
    %v2111 = vunpack.c.h.b16 %v1882
    %v2112 = vunpack.c.l.b16 %v1883
    %v2113 = vunpack.c.h.b16 %v1883
    %v2114 = vunpack.c.l.b16 %v1884
    %v2115 = vunpack.c.h.b16 %v1884
    %v2116 = vunpack.c.l.b16 %v1885
    %v2117 = vunpack.c.h.b16 %v1885
    %v2118 = vunpack.c.l.b16 %v1886
    %v2119 = vunpack.c.l.b16 %v1887
    %v2120 = vunpack.c.h.b16 %v1887
    %v2121 = vunpack.c.l.b16 %v1888
    %v2122 = vunpack.c.h.b16 %v1888
    %v2123 = vunpack.c.l.b16 %v1889
    %v2124 = vunpack.c.h.b16 %v1889
    %v2125 = vunpack.c.l.b16 %v1890
    %v2126 = vunpack.c.h.b16 %v1890
    %v2127 = vunpack.c.l.b16 %v1891
    %v2128 = vunpack.c.l.b16 %v1892
    %v2129 = vunpack.c.h.b16 %v1892
    %v2130 = vunpack.c.l.b16 %v1893
    %v2131 = vunpack.c.h.b16 %v1893
    %v2132 = vunpack.c.l.b16 %v1894
    %v2133 = vunpack.c.h.b16 %v1894
    %v2134 = vunpack.c.l.b16 %v1895
    %v2135 = vunpack.c.h.b16 %v1895
    %v2136 = vunpack.c.l.b16 %v1896
    %v2137 = vunpack.c.l.b16 %v1897
    %v2138 = vunpack.c.h.b16 %v1897
    %v2139 = vunpack.c.l.b16 %v1898
    %v2140 = vunpack.c.h.b16 %v1898
    %v2141 = vunpack.c.l.b16 %v1899
    %v2142 = vunpack.c.h.b16 %v1899
    %v2143 = vunpack.c.l.b16 %v1900
    %v2144 = vunpack.c.h.b16 %v1900
    %v2145 = vunpack.c.l.b16 %v1901
    %v2146 = vunpack.c.l.b16 %v1902
    %v2147 = vunpack.c.h.b16 %v1902
    %v2148 = vunpack.c.l.b16 %v1903
    %v2149 = vunpack.c.h.b16 %v1903
    %v2150 = vunpack.c.l.b16 %v1904
    %v2151 = vunpack.c.h.b16 %v1904
    %v2152 = vunpack.c.l.b16 %v1905
    %v2153 = vunpack.c.h.b16 %v1905
    %v2154 = vunpack.c.l.b16 %v1906
    %v2155 = vunpack.c.l.b16 %v1907
    %v2156 = vunpack.c.h.b16 %v1907
    %v2157 = vunpack.c.l.b16 %v1908
    %v2158 = vunpack.c.h.b16 %v1908
    %v2159 = vunpack.c.l.b16 %v1909
    %v2160 = vunpack.c.h.b16 %v1909
    %v2161 = vunpack.c.l.b16 %v1910
    %v2162 = vunpack.c.h.b16 %v1910
    %v2163 = vunpack.c.l.b16 %v1911
    %v2164 = vunpack.c.l.b16 %v1912
    %v2165 = vunpack.c.h.b16 %v1912
    %v2166 = vunpack.c.l.b16 %v1913
    %v2167 = vunpack.c.h.b16 %v1913
    %v2168 = vunpack.c.l.b16 %v1914
    %v2169 = vunpack.c.h.b16 %v1914
    %v2170 = vunpack.c.l.b16 %v1915
    %v2171 = vunpack.c.h.b16 %v1915
    %v2172 = vunpack.c.l.b16 %v1916
    %v2173 = vunpack.c.l.b16 %v1917
    %v2174 = vunpack.c.h.b16 %v1917
    %v2175 = vunpack.c.l.b16 %v1918
    %v2176 = vunpack.c.h.b16 %v1918
    %v2177 = vunpack.c.l.b16 %v1919
    %v2178 = vunpack.c.h.b16 %v1919
    %v2179 = vunpack.c.l.b16 %v1920
    %v2180 = vunpack.c.h.b16 %v1920
    %v2181 = vunpack.c.l.b16 %v1921
    %v2182 = vunpack.c.l.b16 %v1922
    %v2183 = vunpack.c.h.b16 %v1922
    %v2184 = vunpack.c.l.b16 %v1923
    %v2185 = vunpack.c.h.b16 %v1923
    %v2186 = vunpack.c.l.b16 %v1924
    %v2187 = vunpack.c.h.b16 %v1924
    %v2188 = vunpack.c.l.b16 %v1925
    %v2189 = vunpack.c.h.b16 %v1925
    %v2190 = vunpack.c.l.b16 %v1926
    %v2191 = vunpack.c.l.b16 %v1927
    %v2192 = vunpack.c.h.b16 %v1927
    %v2193 = vunpack.c.l.b16 %v1928
    %v2194 = vunpack.c.h.b16 %v1928
    %v2195 = vunpack.c.l.b16 %v1929
    %v2196 = vunpack.c.h.b16 %v1929
    %v2197 = vunpack.c.l.b16 %v1930
    %v2198 = vunpack.c.h.b16 %v1930
    %v2199 = vunpack.c.l.b16 %v1931
    %v2200 = vunpack.c.l.b16 %v1932
    %v2201 = vunpack.c.h.b16 %v1932
    %v2202 = vunpack.c.l.b16 %v1933
    %v2203 = vunpack.c.h.b16 %v1933
    %v2204 = vunpack.c.l.b16 %v1934
    %v2205 = vunpack.c.h.b16 %v1934
    %v2206 = vunpack.c.l.b16 %v1935
    %v2207 = vunpack.c.h.b16 %v1935
    %v2208 = vunpack.c.l.b16 %v1936
    %v2209 = vunpack.c.l.b16 %v1937
    %v2210 = vunpack.c.h.b16 %v1937
    %v2211 = vunpack.c.l.b16 %v1938
    %v2212 = vunpack.c.h.b16 %v1938
    %v2213 = vunpack.c.l.b16 %v1939
    %v2214 = vunpack.c.h.b16 %v1939
    %v2215 = vunpack.c.l.b16 %v1940
    %v2216 = vunpack.c.h.b16 %v1940
    %v2217 = vunpack.c.l.b16 %v1941
    %v2218 = vunpack.c.l.b16 %v1942
    %v2219 = vunpack.c.h.b16 %v1942
    %v2220 = vunpack.c.l.b16 %v1943
    %v2221 = vunpack.c.h.b16 %v1943
    %v2222 = vunpack.c.l.b16 %v1944
    %v2223 = vunpack.c.h.b16 %v1944
    %v2224 = vunpack.c.l.b16 %v1945
    %v2225 = vunpack.c.h.b16 %v1945
    %v2226 = vunpack.c.l.b16 %v1946
    %v2227 = vpack.c.b16 %v2092, %v2083
    %v2228 = vpack.c.b16 %v2093, %v2084
    %v2229 = vpack.c.b16 %v2094, %v2085
    %v2230 = vpack.c.b16 %v2095, %v2086
    %v2231 = vpack.c.b16 %v2096, %v2087
    %v2232 = vpack.c.b16 %v2097, %v2088
    %v2233 = vpack.c.b16 %v2098, %v2089
    %v2234 = vpack.c.b16 %v2099, %v2090
    %v2235 = vpack.c.b16 %v2100, %v2091
    %v2236 = vpack.c.b16 %v2110, %v2101
    %v2237 = vpack.c.b16 %v2111, %v2102
    %v2238 = vpack.c.b16 %v2112, %v2103
    %v2239 = vpack.c.b16 %v2113, %v2104
    %v2240 = vpack.c.b16 %v2114, %v2105
    %v2241 = vpack.c.b16 %v2115, %v2106
    %v2242 = vpack.c.b16 %v2116, %v2107
    %v2243 = vpack.c.b16 %v2117, %v2108
    %v2244 = vpack.c.b16 %v2118, %v2109
    %v2245 = vpack.c.b16 %v2128, %v2119
    %v2246 = vpack.c.b16 %v2129, %v2120
    %v2247 = vpack.c.b16 %v2130, %v2121
    %v2248 = vpack.c.b16 %v2131, %v2122
    %v2249 = vpack.c.b16 %v2132, %v2123
    %v2250 = vpack.c.b16 %v2133, %v2124
    %v2251 = vpack.c.b16 %v2134, %v2125
    %v2252 = vpack.c.b16 %v2135, %v2126
    %v2253 = vpack.c.b16 %v2136, %v2127
    %v2254 = vpack.c.b16 %v2146, %v2137
    %v2255 = vpack.c.b16 %v2147, %v2138
    %v2256 = vpack.c.b16 %v2148, %v2139
    %v2257 = vpack.c.b16 %v2149, %v2140
    %v2258 = vpack.c.b16 %v2150, %v2141
    %v2259 = vpack.c.b16 %v2151, %v2142
    %v2260 = vpack.c.b16 %v2152, %v2143
    %v2261 = vpack.c.b16 %v2153, %v2144
    %v2262 = vpack.c.b16 %v2154, %v2145
    %v2263 = vpack.c.b16 %v2164, %v2155
    %v2264 = vpack.c.b16 %v2165, %v2156
    %v2265 = vpack.c.b16 %v2166, %v2157
    %v2266 = vpack.c.b16 %v2167, %v2158
    %v2267 = vpack.c.b16 %v2168, %v2159
    %v2268 = vpack.c.b16 %v2169, %v2160
    %v2269 = vpack.c.b16 %v2170, %v2161
    %v2270 = vpack.c.b16 %v2171, %v2162
    %v2271 = vpack.c.b16 %v2172, %v2163
    %v2272 = vpack.c.b16 %v2182, %v2173
    %v2273 = vpack.c.b16 %v2183, %v2174
    %v2274 = vpack.c.b16 %v2184, %v2175
    %v2275 = vpack.c.b16 %v2185, %v2176
    %v2276 = vpack.c.b16 %v2186, %v2177
    %v2277 = vpack.c.b16 %v2187, %v2178
    %v2278 = vpack.c.b16 %v2188, %v2179
    %v2279 = vpack.c.b16 %v2189, %v2180
    %v2280 = vpack.c.b16 %v2190, %v2181
    %v2281 = vpack.c.b16 %v2200, %v2191
    %v2282 = vpack.c.b16 %v2201, %v2192
    %v2283 = vpack.c.b16 %v2202, %v2193
    %v2284 = vpack.c.b16 %v2203, %v2194
    %v2285 = vpack.c.b16 %v2204, %v2195
    %v2286 = vpack.c.b16 %v2205, %v2196
    %v2287 = vpack.c.b16 %v2206, %v2197
    %v2288 = vpack.c.b16 %v2207, %v2198
    %v2289 = vpack.c.b16 %v2208, %v2199
    %v2290 = vpack.c.b16 %v2218, %v2209
    %v2291 = vpack.c.b16 %v2219, %v2210
    %v2292 = vpack.c.b16 %v2220, %v2211
    %v2293 = vpack.c.b16 %v2221, %v2212
    %v2294 = vpack.c.b16 %v2222, %v2213
    %v2295 = vpack.c.b16 %v2223, %v2214
    %v2296 = vpack.c.b16 %v2224, %v2215
    %v2297 = vpack.c.b16 %v2225, %v2216
    %v2298 = vpack.c.b16 %v2226, %v2217
    %2371 = vmatprep.subr.bf16.mxu0 %v2291
    %2372 = vmatpush1.bf16.msra.mxu0 %v2290
    %2373 = vmatprep.subr.bf16.mxu0 %v2282
    %2374 = vmatpush1.bf16.msra.mxu0 %v2281
    %2375 = vmatprep.subr.bf16.mxu0 %v2273
    %2376 = vmatpush1.bf16.msra.mxu0 %v2272
    %2377 = vmatprep.subr.bf16.mxu0 %v2264
    %2378 = vmatpush1.bf16.msra.mxu0 %v2263
    %2379 = vmatprep.subr.bf16.mxu0 %v2255
    %2380 = vmatpush1.bf16.msra.mxu0 %v2254
    %2381 = vmatprep.subr.bf16.mxu0 %v2246
    %2382 = vmatpush1.bf16.msra.mxu0 %v2245
    %2383 = vmatprep.subr.bf16.mxu0 %v2237
    %2384 = vmatpush1.bf16.msra.mxu0 %v2236
    %2385 = vmatprep.subr.bf16.mxu0 %v2228
    %2386 = vmatpush1.bf16.msra.mxu0 %v2227
    %2387 = vmatprep.subr.bf16.mxu0 0
    %2388 = vmatpush2.bf16.msra.mxu0 0
    %2389 = vmatprep.subr.bf16.mxu0 0
    %2390 = vmatpush2.bf16.msra.mxu0 0
    %2391 = vmatprep.subr.bf16.mxu0 0
    %2392 = vmatpush2.bf16.msra.mxu0 0
    %2393 = vmatprep.subr.bf16.mxu0 0
    %2394 = vmatpush2.bf16.msra.mxu0 0
    %2395 = vmatprep.subr.bf16.mxu0 0
    %2396 = vmatpush2.bf16.msra.mxu0 0
    %2397 = vmatprep.subr.bf16.mxu0 0
    %2398 = vmatpush2.bf16.msra.mxu0 0
    %2399 = vmatprep.subr.bf16.mxu0 0
    %2400 = vmatpush2.bf16.msra.mxu0 0
    %2401 = vmatprep.subr.bf16.mxu0 0
    %2402 = vmatpush2.bf16.msra.mxu0 0
    %2403 = vmatprep.mubr.bf16.mxu0 0
    %2404 = vmatmul.mubr.bf16.gmra.mxu0 %v2001
    %v2405 = vpop.f32.mrf.mxu0
    %v2406 = vadd.f32 %v1954, %v2405
    %v2407 = vpop.f32.mrf.mxu0
    %v2408 = vadd.f32 %v1958, %v2407
    %v2409 = vpop.f32.mrf.mxu0
    %v2410 = vpop.f32.mrf.mxu0
    %2411 = vdwg.mxu0
    %2412 = vmatprep.subr.bf16.mxu0 %v2293
    %2413 = vmatpush1.bf16.msra.mxu0 %v2292
    %2414 = vmatprep.subr.bf16.mxu0 %v2284
    %2415 = vmatpush1.bf16.msra.mxu0 %v2283
    %2416 = vmatprep.subr.bf16.mxu0 %v2275
    %2417 = vmatpush1.bf16.msra.mxu0 %v2274
    %2418 = vmatprep.subr.bf16.mxu0 %v2266
    %2419 = vmatpush1.bf16.msra.mxu0 %v2265
    %2420 = vmatprep.subr.bf16.mxu0 %v2257
    %2421 = vmatpush1.bf16.msra.mxu0 %v2256
    %2422 = vmatprep.subr.bf16.mxu0 %v2248
    %2423 = vmatpush1.bf16.msra.mxu0 %v2247
    %2424 = vmatprep.subr.bf16.mxu0 %v2239
    %2425 = vmatpush1.bf16.msra.mxu0 %v2238
    %2426 = vmatprep.subr.bf16.mxu0 %v2230
    %2427 = vmatpush1.bf16.msra.mxu0 %v2229
    %2428 = vmatprep.subr.bf16.mxu0 0
    %2429 = vmatpush2.bf16.msra.mxu0 0
    %2430 = vmatprep.subr.bf16.mxu0 0
    %2431 = vmatpush2.bf16.msra.mxu0 0
    %2432 = vmatprep.subr.bf16.mxu0 0
    %2433 = vmatpush2.bf16.msra.mxu0 0
    %2434 = vmatprep.subr.bf16.mxu0 0
    %2435 = vmatpush2.bf16.msra.mxu0 0
    %2436 = vmatprep.subr.bf16.mxu0 0
    %2437 = vmatpush2.bf16.msra.mxu0 0
    %2438 = vmatprep.subr.bf16.mxu0 0
    %2439 = vmatpush2.bf16.msra.mxu0 0
    %2440 = vmatprep.subr.bf16.mxu0 0
    %2441 = vmatpush2.bf16.msra.mxu0 0
    %2442 = vmatprep.subr.bf16.mxu0 0
    %2443 = vmatpush2.bf16.msra.mxu0 0
    %2444 = vmatprep.mubr.bf16.mxu0 0
    %2445 = vmatmul.mubr.bf16.gmra.mxu0 %v2001
    %v2446 = vpop.f32.mrf.mxu0
    %v2447 = vadd.f32 %v1962, %v2446
    %v2448 = vpop.f32.mrf.mxu0
    %v2449 = vadd.f32 %v1966, %v2448
    %v2450 = vpop.f32.mrf.mxu0
    %v2451 = vpop.f32.mrf.mxu0
    %2452 = vdwg.mxu0
    %2453 = vmatprep.subr.bf16.mxu0 %v2295
    %2454 = vmatpush1.bf16.msra.mxu0 %v2294
    %2455 = vmatprep.subr.bf16.mxu0 %v2286
    %2456 = vmatpush1.bf16.msra.mxu0 %v2285
    %2457 = vmatprep.subr.bf16.mxu0 %v2277
    %2458 = vmatpush1.bf16.msra.mxu0 %v2276
    %2459 = vmatprep.subr.bf16.mxu0 %v2268
    %2460 = vmatpush1.bf16.msra.mxu0 %v2267
    %2461 = vmatprep.subr.bf16.mxu0 %v2259
    %2462 = vmatpush1.bf16.msra.mxu0 %v2258
    %2463 = vmatprep.subr.bf16.mxu0 %v2250
    %2464 = vmatpush1.bf16.msra.mxu0 %v2249
    %2465 = vmatprep.subr.bf16.mxu0 %v2241
    %2466 = vmatpush1.bf16.msra.mxu0 %v2240
    %2467 = vmatprep.subr.bf16.mxu0 %v2232
    %2468 = vmatpush1.bf16.msra.mxu0 %v2231
    %2469 = vmatprep.subr.bf16.mxu0 0
    %2470 = vmatpush2.bf16.msra.mxu0 0
    %2471 = vmatprep.subr.bf16.mxu0 0
    %2472 = vmatpush2.bf16.msra.mxu0 0
    %2473 = vmatprep.subr.bf16.mxu0 0
    %2474 = vmatpush2.bf16.msra.mxu0 0
    %2475 = vmatprep.subr.bf16.mxu0 0
    %2476 = vmatpush2.bf16.msra.mxu0 0
    %2477 = vmatprep.subr.bf16.mxu0 0
    %2478 = vmatpush2.bf16.msra.mxu0 0
    %2479 = vmatprep.subr.bf16.mxu0 0
    %2480 = vmatpush2.bf16.msra.mxu0 0
    %2481 = vmatprep.subr.bf16.mxu0 0
    %2482 = vmatpush2.bf16.msra.mxu0 0
    %2483 = vmatprep.subr.bf16.mxu0 0
    %2484 = vmatpush2.bf16.msra.mxu0 0
    %2485 = vmatprep.mubr.bf16.mxu0 0
    %2486 = vmatmul.mubr.bf16.gmra.mxu0 %v2001
    %v2487 = vpop.f32.mrf.mxu0
    %v2488 = vadd.f32 %v1970, %v2487
    %v2489 = vpop.f32.mrf.mxu0
    %v2490 = vadd.f32 %v1974, %v2489
    %v2491 = vpop.f32.mrf.mxu0
    %v2492 = vpop.f32.mrf.mxu0
    %2493 = vdwg.mxu0
    %2494 = vmatprep.subr.bf16.mxu0 %v2297
    %2495 = vmatpush1.bf16.msra.mxu0 %v2296
    %2496 = vmatprep.subr.bf16.mxu0 %v2288
    %2497 = vmatpush1.bf16.msra.mxu0 %v2287
    %2498 = vmatprep.subr.bf16.mxu0 %v2279
    %2499 = vmatpush1.bf16.msra.mxu0 %v2278
    %2500 = vmatprep.subr.bf16.mxu0 %v2270
    %2501 = vmatpush1.bf16.msra.mxu0 %v2269
    %2502 = vmatprep.subr.bf16.mxu0 %v2261
    %2503 = vmatpush1.bf16.msra.mxu0 %v2260
    %2504 = vmatprep.subr.bf16.mxu0 %v2252
    %2505 = vmatpush1.bf16.msra.mxu0 %v2251
    %2506 = vmatprep.subr.bf16.mxu0 %v2243
    %2507 = vmatpush1.bf16.msra.mxu0 %v2242
    %2508 = vmatprep.subr.bf16.mxu0 %v2234
    %2509 = vmatpush1.bf16.msra.mxu0 %v2233
    %2510 = vmatprep.subr.bf16.mxu0 0
    %2511 = vmatpush2.bf16.msra.mxu0 0
    %2512 = vmatprep.subr.bf16.mxu0 0
    %2513 = vmatpush2.bf16.msra.mxu0 0
    %2514 = vmatprep.subr.bf16.mxu0 0
    %2515 = vmatpush2.bf16.msra.mxu0 0
    %2516 = vmatprep.subr.bf16.mxu0 0
    %2517 = vmatpush2.bf16.msra.mxu0 0
    %2518 = vmatprep.subr.bf16.mxu0 0
    %2519 = vmatpush2.bf16.msra.mxu0 0
    %2520 = vmatprep.subr.bf16.mxu0 0
    %2521 = vmatpush2.bf16.msra.mxu0 0
    %2522 = vmatprep.subr.bf16.mxu0 0
    %2523 = vmatpush2.bf16.msra.mxu0 0
    %2524 = vmatprep.subr.bf16.mxu0 0
    %2525 = vmatpush2.bf16.msra.mxu0 0
    %2526 = vmatprep.mubr.bf16.mxu0 0
    %2527 = vmatmul.mubr.bf16.gmra.mxu0 %v2001
    %v2528 = vpop.f32.mrf.mxu0
    %v2529 = vadd.f32 %v1978, %v2528
    %v2530 = vpop.f32.mrf.mxu0
    %v2531 = vadd.f32 %v1982, %v2530
    %v2532 = vpop.f32.mrf.mxu0
    %v2533 = vpop.f32.mrf.mxu0
    %2534 = vdwg.mxu0
    %2535 = vmatprep.subr.bf16.mxu0 0
    %2536 = vmatpush1.bf16.msra.mxu0 %v2298
    %2537 = vmatprep.subr.bf16.mxu0 0
    %2538 = vmatpush1.bf16.msra.mxu0 %v2289
    %2539 = vmatprep.subr.bf16.mxu0 0
    %2540 = vmatpush1.bf16.msra.mxu0 %v2280
    %2541 = vmatprep.subr.bf16.mxu0 0
    %2542 = vmatpush1.bf16.msra.mxu0 %v2271
    %2543 = vmatprep.subr.bf16.mxu0 0
    %2544 = vmatpush1.bf16.msra.mxu0 %v2262
    %2545 = vmatprep.subr.bf16.mxu0 0
    %2546 = vmatpush1.bf16.msra.mxu0 %v2253
    %2547 = vmatprep.subr.bf16.mxu0 0
    %2548 = vmatpush1.bf16.msra.mxu0 %v2244
    %2549 = vmatprep.subr.bf16.mxu0 0
    %2550 = vmatpush1.bf16.msra.mxu0 %v2235
    %2551 = vmatprep.subr.bf16.mxu0 0
    %2552 = vmatpush2.bf16.msra.mxu0 0
    %2553 = vmatprep.subr.bf16.mxu0 0
    %2554 = vmatpush2.bf16.msra.mxu0 0
    %2555 = vmatprep.subr.bf16.mxu0 0
    %2556 = vmatpush2.bf16.msra.mxu0 0
    %2557 = vmatprep.subr.bf16.mxu0 0
    %2558 = vmatpush2.bf16.msra.mxu0 0
    %2559 = vmatprep.subr.bf16.mxu0 0
    %2560 = vmatpush2.bf16.msra.mxu0 0
    %2561 = vmatprep.subr.bf16.mxu0 0
    %2562 = vmatpush2.bf16.msra.mxu0 0
    %2563 = vmatprep.subr.bf16.mxu0 0
    %2564 = vmatpush2.bf16.msra.mxu0 0
    %2565 = vmatprep.subr.bf16.mxu0 0
    %2566 = vmatpush2.bf16.msra.mxu0 0
    %2567 = vmatprep.mubr.bf16.mxu0 0
    %2568 = vmatmul.mubr.bf16.gmra.mxu0 %v2001
    %v2569 = vpop.f32.mrf.mxu0
    %v2570 = vadd.f32 %v1986, %v2569
    %v2571 = vpop.f32.mrf.mxu0
    %v2572 = vpop.f32.mrf.mxu0
    %v2573 = vpop.f32.mrf.mxu0
    %2574 = vdwg.mxu0
    %v2575 = vunpack.c.l.bf16 %v167
    %v2576 = vld [vmem:[%s16] sm:$0x7]
    %v2578 = vlaneseq
    %v2579 = vshrl.u32 %v2578, 7
    %v2580 = vsub.s32 0, %v2579
    %v2581 = vrot.slane %v2576, %v2580
    %v2582 = vlaneseq
    %v2583 = vshrl.u32 %v2582, 7
    %v2584 = vsub.s32 1, %v2583
    %v2585 = vrot.slane %v2576, %v2584
    %v2586 = vlaneseq
    %v2587 = vshrl.u32 %v2586, 7
    %v2588 = vsub.s32 2, %v2587
    %v2589 = vrot.slane %v2576, %v2588
    %v2590 = vcombine.low %v2581, %v2585
    %v2592 = vunpack.c.l.s4 1983009808
    %v2593 = vunpack.c.0.s8 %v2592
    %v2594 = vlaneseq
    %v2595 = vshrl.u32 %v2594, 7
    %v2596 = vsub.s32 %v2593, %v2595
    %v2597 = vrot.slane %v2590, %v2596
    %v2599 = vunpack.c.l.s4 1983009808
    %v2600 = vunpack.c.0.s8 %v2599
    %v2601 = vlaneseq
    %v2602 = vshrl.u32 %v2601, 7
    %v2603 = vsub.s32 %v2600, %v2602
    %v2604 = vrot.slane %v2589, %v2603
    %v2605 = vcombine.low %v2597, %v2604
    %v2607 = vmul.f32 %v2575, %v2605
    %v2609 = vcombine.high %v2607, %v2607
    %v2611 = vunpack.c.l.s4 1983009808
    %v2612 = vunpack.c.0.s8 %v2611
    %v2613 = vlaneseq
    %v2614 = vshrl.u32 %v2613, 7
    %v2615 = vsub.s32 %v2612, %v2614
    %v2616 = vrot.slane %v2607, %v2615
    %v2618 = vunpack.c.l.s4 1983009808
    %v2619 = vunpack.c.0.s8 %v2618
    %v2620 = vlaneseq
    %v2621 = vshrl.u32 %v2620, 7
    %v2622 = vsub.s32 %v2619, %v2621
    %v2623 = vrot.slane %v2609, %v2622
    %v2624 = vcombine.high %v2616, %v2616
    %vm2628 = vcmask 1041408
    %v2629 = vsel %vm2628, %v2616, 0.0
    %v2630 = vsel %vm2628, %v2624, 0.0
    %v2631 = vadd.f32 %v2629, %v2630
    %v2632 = vsel %vm2628, %v2623, 0.0
    %v2633 = vadd.f32 %v2631, %v2632
    %2634 = vadd.xlane.f32.xlu0 %v2633
    %v2635 = vpop.xlane.xlu0 %2634
    %v2636 = vld [vmem:[#allocation15] sm:$0x1]
    %v2638 = vlaneseq
    %v2639 = vshrl.u32 %v2638, 7
    %v2640 = vsub.s32 0, %v2639
    %v2641 = vrot.slane %v2636, %v2640
    %v2643 = vmul.f32 %v168, %v2641
    %v2644 = vsel %vm2628, %v2643, 0.0
    %2645 = vadd.xlane.f32.xlu0 %v2644
    %v2646 = vpop.xlane.xlu0 %2645
    %v2647 = vadd.f32 %v2635, %v2646
    %v2648 = vld [vmem:[#allocation2] sm:$0x1]
    %v2650 = vlaneseq
    %v2651 = vshrl.u32 %v2650, 7
    %v2652 = vsub.s32 0, %v2651
    %v2653 = vrot.slane %v2648, %v2652
    %v2655 = vadd.f32 %v2647, %v2653
    %v2656 = vxor.u32 %v2655, 2147483648
    %v2657 = vmul.f32 %v2656, 1.442695
    %v2658 = vpow.pop %v2657
    %v2659 = vadd.f32 %v2658, 1.0
    %v2660 = vrcp.pop %v2659
    %v2661 = vmul.f32 1.0, %v2660
    %2663 = vset.pattern.permute.xlu0 0
    %2664 = vperm.xlu0 %2663, %v2661
    %v2665 = vpop.permute.xlu0 %2664
    %v2667 = vmul.f32 %v2665, %v1862
    %v2668 = vadd.s32 %v1759, 128
    %v2669 = vadd.s32 %v1759, 256
    %v2670 = vadd.s32 %v1759, 384
    %v2671 = vadd.s32 %v1759, 512
    %v2672 = vadd.s32 %v1759, 640
    %v2673 = vadd.s32 %v1759, 768
    %v2674 = vadd.s32 %v1759, 896
    %v2675 = vadd.s32 %v1759, 1024
    %2676 = vset.pattern.permute.xlu0 0
    %2677 = vperm.xlu0 %2676, %v174
    %v2678 = vpop.permute.xlu0 %2677
    %vm2679 = vcmp.eq.s32.totalorder %v1759, %v2678
    %vm2680 = vcmp.eq.s32.totalorder %v2668, %v2678
    %vm2681 = vcmp.eq.s32.totalorder %v2669, %v2678
    %vm2682 = vcmp.eq.s32.totalorder %v2670, %v2678
    %vm2683 = vcmp.eq.s32.totalorder %v2671, %v2678
    %vm2684 = vcmp.eq.s32.totalorder %v2672, %v2678
    %vm2685 = vcmp.eq.s32.totalorder %v2673, %v2678
    %vm2686 = vcmp.eq.s32.totalorder %v2674, %v2678
    %vm2687 = vcmp.eq.s32.totalorder %v2675, %v2678
    %2689 = vset.pattern.permute.xlu0 0
    %2690 = vperm.xlu0 %2689, %v2667
    %v2691 = vpop.permute.xlu0 %2690
    %v2693 = vsel %vm2679, %v2691, 0.0
    %v2694 = vsel %vm2680, %v2691, 0.0
    %v2695 = vsel %vm2681, %v2691, 0.0
    %v2696 = vsel %vm2682, %v2691, 0.0
    %v2697 = vsel %vm2683, %v2691, 0.0
    %v2698 = vsel %vm2684, %v2691, 0.0
    %v2699 = vsel %vm2685, %v2691, 0.0
    %v2700 = vsel %vm2686, %v2691, 0.0
    %v2701 = vsel %vm2687, %v2691, 0.0
    %2702 = vset.pattern.permute.xlu0 1
    %2703 = vperm.xlu0 %2702, %v174
    %v2704 = vpop.permute.xlu0 %2703
    %vm2705 = vcmp.eq.s32.totalorder %v1759, %v2704
    %vm2706 = vcmp.eq.s32.totalorder %v2668, %v2704
    %vm2707 = vcmp.eq.s32.totalorder %v2669, %v2704
    %vm2708 = vcmp.eq.s32.totalorder %v2670, %v2704
    %vm2709 = vcmp.eq.s32.totalorder %v2671, %v2704
    %vm2710 = vcmp.eq.s32.totalorder %v2672, %v2704
    %vm2711 = vcmp.eq.s32.totalorder %v2673, %v2704
    %vm2712 = vcmp.eq.s32.totalorder %v2674, %v2704
    %vm2713 = vcmp.eq.s32.totalorder %v2675, %v2704
    %2714 = vset.pattern.permute.xlu0 1
    %2715 = vperm.xlu0 %2714, %v2667
    %v2716 = vpop.permute.xlu0 %2715
    %v2718 = vsel %vm2705, %v2716, %v2693
    %v2719 = vsel %vm2706, %v2716, %v2694
    %v2720 = vsel %vm2707, %v2716, %v2695
    %v2721 = vsel %vm2708, %v2716, %v2696
    %v2722 = vsel %vm2709, %v2716, %v2697
    %v2723 = vsel %vm2710, %v2716, %v2698
    %v2724 = vsel %vm2711, %v2716, %v2699
    %v2725 = vsel %vm2712, %v2716, %v2700
    %v2726 = vsel %vm2713, %v2716, %v2701
    %2727 = vset.pattern.permute.xlu0 2
    %2728 = vperm.xlu0 %2727, %v174
    %v2729 = vpop.permute.xlu0 %2728
    %vm2730 = vcmp.eq.s32.totalorder %v1759, %v2729
    %vm2731 = vcmp.eq.s32.totalorder %v2668, %v2729
    %vm2732 = vcmp.eq.s32.totalorder %v2669, %v2729
    %vm2733 = vcmp.eq.s32.totalorder %v2670, %v2729
    %vm2734 = vcmp.eq.s32.totalorder %v2671, %v2729
    %vm2735 = vcmp.eq.s32.totalorder %v2672, %v2729
    %vm2736 = vcmp.eq.s32.totalorder %v2673, %v2729
    %vm2737 = vcmp.eq.s32.totalorder %v2674, %v2729
    %vm2738 = vcmp.eq.s32.totalorder %v2675, %v2729
    %2739 = vset.pattern.permute.xlu0 2
    %2740 = vperm.xlu0 %2739, %v2667
    %v2741 = vpop.permute.xlu0 %2740
    %v2743 = vsel %vm2730, %v2741, %v2718
    %v2744 = vsel %vm2731, %v2741, %v2719
    %v2745 = vsel %vm2732, %v2741, %v2720
    %v2746 = vsel %vm2733, %v2741, %v2721
    %v2747 = vsel %vm2734, %v2741, %v2722
    %v2748 = vsel %vm2735, %v2741, %v2723
    %v2749 = vsel %vm2736, %v2741, %v2724
    %v2750 = vsel %vm2737, %v2741, %v2725
    %v2751 = vsel %vm2738, %v2741, %v2726
    %2752 = vset.pattern.permute.xlu0 3
    %2753 = vperm.xlu0 %2752, %v174
    %v2754 = vpop.permute.xlu0 %2753
    %vm2755 = vcmp.eq.s32.totalorder %v1759, %v2754
    %vm2756 = vcmp.eq.s32.totalorder %v2668, %v2754
    %vm2757 = vcmp.eq.s32.totalorder %v2669, %v2754
    %vm2758 = vcmp.eq.s32.totalorder %v2670, %v2754
    %vm2759 = vcmp.eq.s32.totalorder %v2671, %v2754
    %vm2760 = vcmp.eq.s32.totalorder %v2672, %v2754
    %vm2761 = vcmp.eq.s32.totalorder %v2673, %v2754
    %vm2762 = vcmp.eq.s32.totalorder %v2674, %v2754
    %vm2763 = vcmp.eq.s32.totalorder %v2675, %v2754
    %2764 = vset.pattern.permute.xlu0 3
    %2765 = vperm.xlu0 %2764, %v2667
    %v2766 = vpop.permute.xlu0 %2765
    %v2768 = vsel %vm2755, %v2766, %v2743
    %v2769 = vsel %vm2756, %v2766, %v2744
    %v2770 = vsel %vm2757, %v2766, %v2745
    %v2771 = vsel %vm2758, %v2766, %v2746
    %v2772 = vsel %vm2759, %v2766, %v2747
    %v2773 = vsel %vm2760, %v2766, %v2748
    %v2774 = vsel %vm2761, %v2766, %v2749
    %v2775 = vsel %vm2762, %v2766, %v2750
    %v2776 = vsel %vm2763, %v2766, %v2751
    %2777 = vset.pattern.permute.xlu0 4
    %2778 = vperm.xlu0 %2777, %v174
    %v2779 = vpop.permute.xlu0 %2778
    %vm2780 = vcmp.eq.s32.totalorder %v1759, %v2779
    %vm2781 = vcmp.eq.s32.totalorder %v2668, %v2779
    %vm2782 = vcmp.eq.s32.totalorder %v2669, %v2779
    %vm2783 = vcmp.eq.s32.totalorder %v2670, %v2779
    %vm2784 = vcmp.eq.s32.totalorder %v2671, %v2779
    %vm2785 = vcmp.eq.s32.totalorder %v2672, %v2779
    %vm2786 = vcmp.eq.s32.totalorder %v2673, %v2779
    %vm2787 = vcmp.eq.s32.totalorder %v2674, %v2779
    %vm2788 = vcmp.eq.s32.totalorder %v2675, %v2779
    %2789 = vset.pattern.permute.xlu0 4
    %2790 = vperm.xlu0 %2789, %v2667
    %v2791 = vpop.permute.xlu0 %2790
    %v2793 = vsel %vm2780, %v2791, %v2768
    %v2794 = vsel %vm2781, %v2791, %v2769
    %v2795 = vsel %vm2782, %v2791, %v2770
    %v2796 = vsel %vm2783, %v2791, %v2771
    %v2797 = vsel %vm2784, %v2791, %v2772
    %v2798 = vsel %vm2785, %v2791, %v2773
    %v2799 = vsel %vm2786, %v2791, %v2774
    %v2800 = vsel %vm2787, %v2791, %v2775
    %v2801 = vsel %vm2788, %v2791, %v2776
    %2802 = vset.pattern.permute.xlu0 5
    %2803 = vperm.xlu0 %2802, %v174
    %v2804 = vpop.permute.xlu0 %2803
    %vm2805 = vcmp.eq.s32.totalorder %v1759, %v2804
    %vm2806 = vcmp.eq.s32.totalorder %v2668, %v2804
    %vm2807 = vcmp.eq.s32.totalorder %v2669, %v2804
    %vm2808 = vcmp.eq.s32.totalorder %v2670, %v2804
    %vm2809 = vcmp.eq.s32.totalorder %v2671, %v2804
    %vm2810 = vcmp.eq.s32.totalorder %v2672, %v2804
    %vm2811 = vcmp.eq.s32.totalorder %v2673, %v2804
    %vm2812 = vcmp.eq.s32.totalorder %v2674, %v2804
    %vm2813 = vcmp.eq.s32.totalorder %v2675, %v2804
    %2814 = vset.pattern.permute.xlu0 5
    %2815 = vperm.xlu0 %2814, %v2667
    %v2816 = vpop.permute.xlu0 %2815
    %v2818 = vsel %vm2805, %v2816, %v2793
    %v2819 = vsel %vm2806, %v2816, %v2794
    %v2820 = vsel %vm2807, %v2816, %v2795
    %v2821 = vsel %vm2808, %v2816, %v2796
    %v2822 = vsel %vm2809, %v2816, %v2797
    %v2823 = vsel %vm2810, %v2816, %v2798
    %v2824 = vsel %vm2811, %v2816, %v2799
    %v2825 = vsel %vm2812, %v2816, %v2800
    %v2826 = vsel %vm2813, %v2816, %v2801
    %2827 = vset.pattern.permute.xlu0 6
    %2828 = vperm.xlu0 %2827, %v174
    %v2829 = vpop.permute.xlu0 %2828
    %vm2830 = vcmp.eq.s32.totalorder %v1759, %v2829
    %vm2831 = vcmp.eq.s32.totalorder %v2668, %v2829
    %vm2832 = vcmp.eq.s32.totalorder %v2669, %v2829
    %vm2833 = vcmp.eq.s32.totalorder %v2670, %v2829
    %vm2834 = vcmp.eq.s32.totalorder %v2671, %v2829
    %vm2835 = vcmp.eq.s32.totalorder %v2672, %v2829
    %vm2836 = vcmp.eq.s32.totalorder %v2673, %v2829
    %vm2837 = vcmp.eq.s32.totalorder %v2674, %v2829
    %vm2838 = vcmp.eq.s32.totalorder %v2675, %v2829
    %2839 = vset.pattern.permute.xlu0 6
    %2840 = vperm.xlu0 %2839, %v2667
    %v2841 = vpop.permute.xlu0 %2840
    %v2843 = vsel %vm2830, %v2841, %v2818
    %v2844 = vsel %vm2831, %v2841, %v2819
    %v2845 = vsel %vm2832, %v2841, %v2820
    %v2846 = vsel %vm2833, %v2841, %v2821
    %v2847 = vsel %vm2834, %v2841, %v2822
    %v2848 = vsel %vm2835, %v2841, %v2823
    %v2849 = vsel %vm2836, %v2841, %v2824
    %v2850 = vsel %vm2837, %v2841, %v2825
    %v2851 = vsel %vm2838, %v2841, %v2826
    %2852 = vset.pattern.permute.xlu0 7
    %2853 = vperm.xlu0 %2852, %v174
    %v2854 = vpop.permute.xlu0 %2853
    %vm2855 = vcmp.eq.s32.totalorder %v1759, %v2854
    %vm2856 = vcmp.eq.s32.totalorder %v2668, %v2854
    %vm2857 = vcmp.eq.s32.totalorder %v2669, %v2854
    %vm2858 = vcmp.eq.s32.totalorder %v2670, %v2854
    %vm2859 = vcmp.eq.s32.totalorder %v2671, %v2854
    %vm2860 = vcmp.eq.s32.totalorder %v2672, %v2854
    %vm2861 = vcmp.eq.s32.totalorder %v2673, %v2854
    %vm2862 = vcmp.eq.s32.totalorder %v2674, %v2854
    %vm2863 = vcmp.eq.s32.totalorder %v2675, %v2854
    %2864 = vset.pattern.permute.xlu0 7
    %2865 = vperm.xlu0 %2864, %v2667
    %v2866 = vpop.permute.xlu0 %2865
    %v2868 = vsel %vm2855, %v2866, %v2843
    %v2869 = vsel %vm2856, %v2866, %v2844
    %v2870 = vsel %vm2857, %v2866, %v2845
    %v2871 = vsel %vm2858, %v2866, %v2846
    %v2872 = vsel %vm2859, %v2866, %v2847
    %v2873 = vsel %vm2860, %v2866, %v2848
    %v2874 = vsel %vm2861, %v2866, %v2849
    %v2875 = vsel %vm2862, %v2866, %v2850
    %v2876 = vsel %vm2863, %v2866, %v2851
    %v2877 = vsub.f32 1.0, %v2661
    %2879 = vset.pattern.permute.xlu0 0
    %2880 = vperm.xlu0 %2879, %v2877
    %v2881 = vpop.permute.xlu0 %2880
    %v2883 = vmul.f32 %v2881, %v2406
    %v2884 = vmul.f32 %v2881, %v2408
    %v2885 = vmul.f32 %v2881, %v2447
    %v2886 = vmul.f32 %v2881, %v2449
    %v2887 = vmul.f32 %v2881, %v2488
    %v2888 = vmul.f32 %v2881, %v2490
    %v2889 = vmul.f32 %v2881, %v2529
    %v2890 = vmul.f32 %v2881, %v2531
    %v2891 = vmul.f32 %v2881, %v2570
    %v2892 = vadd.f32 %v2883, %v2868
    %v2893 = vadd.f32 %v2884, %v2869
    %v2894 = vadd.f32 %v2885, %v2870
    %v2895 = vadd.f32 %v2886, %v2871
    %v2896 = vadd.f32 %v2887, %v2872
    %v2897 = vadd.f32 %v2888, %v2873
    %v2898 = vadd.f32 %v2889, %v2874
    %v2899 = vadd.f32 %v2890, %v2875
    %v2900 = vadd.f32 %v2891, %v2876
    %v2910 = vcombine.low %v2892, %v2893
    %v2911 = vcombine.low %v2894, %v2895
    %v2913 = vunpack.c.l.s4 1983009808
    %v2914 = vunpack.c.0.s8 %v2913
    %v2915 = vlaneseq
    %v2916 = vshrl.u32 %v2915, 7
    %v2917 = vsub.s32 %v2914, %v2916
    %v2918 = vrot.slane %v2910, %v2917
    %v2920 = vunpack.c.l.s4 1983009808
    %v2921 = vunpack.c.0.s8 %v2920
    %v2922 = vlaneseq
    %v2923 = vshrl.u32 %v2922, 7
    %v2924 = vsub.s32 %v2921, %v2923
    %v2925 = vrot.slane %v2911, %v2924
    %v2926 = vcombine.low %v2918, %v2925
    %v2927 = vcombine.low %v2896, %v2897
    %v2928 = vcombine.low %v2898, %v2899
    %v2930 = vunpack.c.l.s4 1983009808
    %v2931 = vunpack.c.0.s8 %v2930
    %v2932 = vlaneseq
    %v2933 = vshrl.u32 %v2932, 7
    %v2934 = vsub.s32 %v2931, %v2933
    %v2935 = vrot.slane %v2927, %v2934
    %v2937 = vunpack.c.l.s4 1983009808
    %v2938 = vunpack.c.0.s8 %v2937
    %v2939 = vlaneseq
    %v2940 = vshrl.u32 %v2939, 7
    %v2941 = vsub.s32 %v2938, %v2940
    %v2942 = vrot.slane %v2928, %v2941
    %v2943 = vcombine.low %v2935, %v2942
    %v2945 = vunpack.c.l.s4 1983009808
    %v2946 = vunpack.c.0.s8 %v2945
    %v2947 = vlaneseq
    %v2948 = vshrl.u32 %v2947, 7
    %v2949 = vsub.s32 %v2946, %v2948
    %v2950 = vrot.slane %v2900, %v2949
    %2954 = vst [vmem:[#allocation17] sm:$0xff] %v2926
    %2955 = vst [vmem:[#allocation17 + $0x8] sm:$0xff] %v2943
    %vm2956 = vcmask 435200
    %2957 = vst.msk [vmem:[#allocation17 + $0x10] sm:$0x3] %vm2956, %v2950
    %2958 = vst [vmem:[%s20] sm:$0x3] %v1455
    %2959 = vst [vmem:[%s20 + $0x2] sm:$0x3] %v1453
    %v2963 = vunpack.c.l.s4 1983009808
    %v2964 = vunpack.c.0.s8 %v2963
    %v2965 = vlaneseq
    %v2966 = vshrl.u32 %v2965, 7
    %v2967 = vsub.s32 %v2964, %v2966
    %v2968 = vrot.slane %v1847, %v2967
    %v2970 = vunpack.c.l.s4 1983009808
    %v2971 = vunpack.c.0.s8 %v2970
    %v2972 = vlaneseq
    %v2973 = vshrl.u32 %v2972, 7
    %v2974 = vsub.s32 %v2971, %v2973
    %v2975 = vrot.slane %v1853, %v2974
    %vm2976 = vcmask 1044484
    %v2977 = vsel %vm2976, %v2968, %v2968
    %vm2978 = vcmask 1046534
    %v2979 = vsel %vm2978, %v2968, %v2977
    %v2980 = vrot.slane %v2975, 7
    %v2981 = vsel %vm1768, %v2980, %v2979
    %vm2982 = vcmask 1043459
    %v2983 = vsel %vm2982, %v2980, %v2981
    %vm2984 = vcmask 1045509
    %v2985 = vsel %vm2984, %v2980, %v2983
    %vm2986 = vcmask 1047559
    %v2987 = vsel %vm2986, %v2980, %v2985
    %2989 = vst [vmem:[%s20 + $0x4] sm:$0x3] %v2987
    %v2990 = vcombine.high %v1825, %v1825
    %v2992 = vunpack.c.l.s4 1983009808
    %v2993 = vunpack.c.0.s8 %v2992
    %v2994 = vlaneseq
    %v2995 = vshrl.u32 %v2994, 7
    %v2996 = vsub.s32 %v2993, %v2995
    %v2997 = vrot.slane %v1825, %v2996
    %v2999 = vunpack.c.l.s4 1983009808
    %v3000 = vunpack.c.0.s8 %v2999
    %v3001 = vlaneseq
    %v3002 = vshrl.u32 %v3001, 7
    %v3003 = vsub.s32 %v3000, %v3002
    %v3004 = vrot.slane %v2990, %v3003
    %v3005 = vcombine.high %v2997, %v2997
    %v3006 = vcombine.high %v3004, %v3004
    %v3007 = vcombine.high %v1827, %v1827
    %v3009 = vunpack.c.l.s4 1983009808
    %v3010 = vunpack.c.0.s8 %v3009
    %v3011 = vlaneseq
    %v3012 = vshrl.u32 %v3011, 7
    %v3013 = vsub.s32 %v3010, %v3012
    %v3014 = vrot.slane %v1827, %v3013
    %v3016 = vunpack.c.l.s4 1983009808
    %v3017 = vunpack.c.0.s8 %v3016
    %v3018 = vlaneseq
    %v3019 = vshrl.u32 %v3018, 7
    %v3020 = vsub.s32 %v3017, %v3019
    %v3021 = vrot.slane %v3007, %v3020
    %v3022 = vcombine.high %v3014, %v3014
    %v3023 = vcombine.high %v3021, %v3021
    %v3024 = vcombine.low %v2997, %v3005
    %v3025 = vcombine.low %v3004, %v3006
    %v3027 = vunpack.c.l.s4 1983009808
    %v3028 = vunpack.c.0.s8 %v3027
    %v3029 = vlaneseq
    %v3030 = vshrl.u32 %v3029, 7
    %v3031 = vsub.s32 %v3028, %v3030
    %v3032 = vrot.slane %v3024, %v3031
    %v3034 = vunpack.c.l.s4 1983009808
    %v3035 = vunpack.c.0.s8 %v3034
    %v3036 = vlaneseq
    %v3037 = vshrl.u32 %v3036, 7
    %v3038 = vsub.s32 %v3035, %v3037
    %v3039 = vrot.slane %v3025, %v3038
    %v3040 = vcombine.low %v3032, %v3039
    %v3041 = vcombine.low %v3014, %v3022
    %v3042 = vcombine.low %v3021, %v3023
    %v3044 = vunpack.c.l.s4 1983009808
    %v3045 = vunpack.c.0.s8 %v3044
    %v3046 = vlaneseq
    %v3047 = vshrl.u32 %v3046, 7
    %v3048 = vsub.s32 %v3045, %v3047
    %v3049 = vrot.slane %v3041, %v3048
    %v3051 = vunpack.c.l.s4 1983009808
    %v3052 = vunpack.c.0.s8 %v3051
    %v3053 = vlaneseq
    %v3054 = vshrl.u32 %v3053, 7
    %v3055 = vsub.s32 %v3052, %v3054
    %v3056 = vrot.slane %v3042, %v3055
    %v3057 = vcombine.low %v3049, %v3056
    %3058 = vset.pattern.permute.xlu0 0
    %3059 = vperm.xlu0 %3058, %v3040
    %v3060 = vpop.permute.xlu0 %3059
    %3061 = vset.pattern.permute.xlu0 0
    %3062 = vperm.xlu0 %3061, %v3057
    %v3063 = vpop.permute.xlu0 %3062
    %v3064 = vlaneseq
    %v3065 = vshrl.u32 %v3064, 7
    %v3066 = vsub.s32 %v1759, %v3065
    %v3067 = vrot.slane %v3060, %v3066
    %v3068 = vlaneseq
    %v3069 = vshrl.u32 %v3068, 7
    %v3070 = vsub.s32 %v1759, %v3069
    %v3071 = vrot.slane %v3063, %v3070
    %v3072 = vsel %vm1768, %v3071, %v3067
    %v3074 = vunpack.c.l.s4 1983009808
    %v3075 = vunpack.c.0.s8 %v3074
    %v3076 = vlaneseq
    %v3077 = vshrl.u32 %v3076, 7
    %v3078 = vsub.s32 %v3075, %v3077
    %v3079 = vrot.slane %v3072, %v3078
    %3081 = vst.msk [vmem:[%s20 + $0x6] sm:$0x3] %vm1771, %v3079
    %v3084 = vunpack.c.l.s4 1983009808
    %v3085 = vunpack.c.0.s8 %v3084
    %v3086 = vlaneseq
    %v3087 = vshrl.u32 %v3086, 7
    %v3088 = vsub.s32 %v3085, %v3087
    %v3089 = vrot.slane %v1864, %v3088
    %3090 = vrot.lane.b32.xlu0 %v3089, 8
    %v3091 = vpop.permute.xlu0 %3090
    %vm3093 = vcmask 123968
    %3094 = vst.msk [vmem:[%s20 + $0x6] sm:$0x3] %vm3093, %v3091
    %vm3095 = vcmask 1041536
    %3096 = vst.msk [vmem:[%s20 + $0x6] sm:$0x3] %vm3095, 0.0
    // Predicated region
    $region110: #{attention_decoder.1} parent=1 // pred_check
      _
    $region111: #{attention_decoder.1} parent=1 // pred_check_branch
      %3098 = sbr.rel (0) target = $region113
    $region112: #{attention_decoder.1} parent=1 // pred_region
      %s3100 = ssub.s32 288, 288
      %3101 = vsyncadd [#allocation5], %s3100
      %s3103 = sshll.u32 [#allocation17], 4
      %s3104 = int_to_ptr.vmem [resolvable:$true] %s3103
      %3106 = dma.vmem_to_hbm [thread:$0]  %s3104, 288, %s19, [#allocation5]
    $region113: #{attention_decoder.1} parent=1 // pred_fallthru
      _
    // Predicated region
    $region114: #{attention_decoder.1} parent=1 // pred_check
      _
    $region115: #{attention_decoder.1} parent=1 // pred_check_branch
      %3108 = sbr.rel (0) target = $region117
    $region116: #{attention_decoder.1} parent=1 // pred_region
      _
    $region117: #{attention_decoder.1} parent=1 // pred_fallthru
      _
    // Predicated region
    $region118: #{attention_decoder.1} parent=1 // pred_check
      _
    $region119: #{attention_decoder.1} parent=1 // pred_check_branch
      %3110 = sbr.rel (0) target = $region121
    $region120: #{attention_decoder.1} parent=1 // pred_region
      %3111 = dma.done [#allocation5], 288
    $region121: #{attention_decoder.1} parent=1 // pred_fallthru
      _
    // Predicated region
    $region122: #{attention_decoder.1} parent=1 // pred_check
      _
    $region123: #{attention_decoder.1} parent=1 // pred_check_branch
      %3113 = sbr.rel (0) target = $region125
    $region124: #{attention_decoder.1} parent=1 // pred_region
      _
    $region125: #{attention_decoder.1} parent=1 // pred_fallthru
      _
    %3114 = vsyncpa [#allocation4], 1
    %3115 = vsyncpa [#allocation7], 1
    %3116 = vsyncpa [#allocation10], 1
    %3117 = vsyncpa [#allocation13], 1
    %3118 = vsyncpa [#allocation16], 1
    %3119 = vsyncpa [#allocation5], 1

</llo_original>
